<compile_context>
chip_gen: v7x
topology: tpu7x:2x2x1
jax: 0.10.0
libtpu: 0.0.40
codegen_flags: <defaults>
</compile_context>

<pallas_src>
import functools

import jax
import jax.numpy as jnp
from jax.experimental import pallas as pl
from jax.experimental.pallas import tpu as pltpu

NUM_RELATIONS = 3


def _round_up(n, m):
    return ((n + m - 1) // m) * m


def _pad2d(a, rows, cols):
    r, c = a.shape
    return jnp.pad(a.astype(jnp.float32), ((0, rows - r), (0, cols - c)))


# ---------------------------------------------------------------------------
# Fused kernel: 3x RGCNConv (+ReLU / +residual) -> edge gather -> MLP head.
# ---------------------------------------------------------------------------
def fused_kernel(dims,
                 a_ref, x_ref, row_ref, col_ref,
                 wconv1_ref, wconv23_ref, wcls1_ref, w2_ref, w3_ref, b_ref,
                 o_ref):
    c_pad, h_pad, h2_pad, cls_pad, n_pad = dims

    def rgcn_layer(h_bf, w_ref, row_off, in_w, b_row):
        # out = h @ W_root + sum_r (A[r] @ h) @ W_r + b   (bf16 in, f32 acc)
        acc = jnp.dot(h_bf, w_ref[row_off:row_off + in_w, :],
                      preferred_element_type=jnp.float32)
        for r in range(NUM_RELATIONS):                    # static unroll, R=3
            msg = jnp.dot(a_ref[r], h_bf, preferred_element_type=jnp.float32)
            acc = acc + jnp.dot(
                msg.astype(jnp.bfloat16),
                w_ref[row_off + (r + 1) * in_w:row_off + (r + 2) * in_w, :],
                preferred_element_type=jnp.float32)
        return acc + b_ref[b_row:b_row + 1, 0:h_pad]

    x_bf = x_ref[...]                                               # bf16
    h1 = jnp.maximum(rgcn_layer(x_bf, wconv1_ref, 0, c_pad, 0), 0.0)   # f32
    # dropout: identity (eval)
    h2 = jnp.maximum(
        rgcn_layer(h1.astype(jnp.bfloat16), wconv23_ref, 0, h_pad, 1), 0.0)
    # dropout: identity (eval)
    h3 = rgcn_layer(h2.astype(jnp.bfloat16),
                    wconv23_ref, 4 * h_pad, h_pad, 2) + h1          # conv3 + x1
    h3_bf = h3.astype(jnp.bfloat16)

    # Edge-endpoint gather: build one-hot selectors in-kernel (VPU iota/compare,
    # off the MXU/DMA critical path) instead of shipping (E, N) one-hots from HBM.
    e_tile = o_ref.shape[0]
    node_ids = jax.lax.broadcasted_iota(jnp.int32, (e_tile, n_pad), 1)
    g_row = (node_ids == row_ref[...]).astype(jnp.bfloat16)
    g_col = (node_ids == col_ref[...]).astype(jnp.bfloat16)
    xr = jnp.dot(g_row, h3_bf, preferred_element_type=jnp.float32)
    xc = jnp.dot(g_col, h3_bf, preferred_element_type=jnp.float32)

    # Classifier MLP (dropout = identity); the (2H, H) weight is split into
    # row/col halves so no lane concat is needed.  Elementwise stays f32.
    h = (jnp.dot(xr.astype(jnp.bfloat16), wcls1_ref[0:h_pad, :],
                 preferred_element_type=jnp.float32)
         + jnp.dot(xc.astype(jnp.bfloat16), wcls1_ref[h_pad:2 * h_pad, :],
                   preferred_element_type=jnp.float32)
         + b_ref[3:4, 0:h_pad])
    h = jnp.maximum(h, 0.0)
    h = jnp.maximum(
        jnp.dot(h.astype(jnp.bfloat16), w2_ref[...],
                preferred_element_type=jnp.float32) + b_ref[4:5, 0:h2_pad], 0.0)
    o_ref[...] = (jnp.dot(h.astype(jnp.bfloat16), w3_ref[...],
                          preferred_element_type=jnp.float32)
                  + b_ref[5:6, 0:cls_pad])


# ---------------------------------------------------------------------------
# Dense per-relation mean-normalized adjacency (PyG RGCNConv aggr='mean').
# ---------------------------------------------------------------------------
def build_adjacency(edge_index, edge_type, num_nodes, num_relations):
    src, dst = edge_index[0], edge_index[1]           # messages flow src -> dst
    A = jnp.zeros((num_relations, num_nodes, num_nodes), jnp.float32)
    A = A.at[edge_type, dst, src].add(1.0)
    deg = A.sum(axis=2, keepdims=True)                 # per-relation in-degree
    return A / jnp.maximum(deg, 1.0)                   # mean over incoming edges


# ---------------------------------------------------------------------------
# Wrapper: pad to TPU-friendly shapes, pack weights, single pallas_call.
# ---------------------------------------------------------------------------
def enhanced_legal_rgcn_forward(x, edge_index, edge_type, params, *,
                                edge_tiles=2):
    n, c_in = x.shape
    e = edge_index.shape[1]
    hidden = params["conv1"]["w_root"].shape[1]
    h2 = params["classifier"]["w2"].shape[1]
    n_cls = params["classifier"]["w3"].shape[1]

    n_pad = _round_up(n, 128)                  # lane-dense A / gather contraction
    e_pad = _round_up(e, 8 * edge_tiles)
    e_tile = e_pad // edge_tiles
    c_pad = _round_up(c_in, 128)
    h_pad = _round_up(hidden, 128)
    h2_pad = _round_up(h2, 128)
    cls_pad = _round_up(n_cls, 128)
    b_pad = max(h_pad, h2_pad, cls_pad)

    # Normalized adjacency + node features, zero-padded, bf16 MXU operands.
    A = build_adjacency(edge_index, edge_type, n, NUM_RELATIONS)
    A = jnp.pad(A, ((0, 0), (0, n_pad - n), (0, n_pad - n))).astype(jnp.bfloat16)
    x_p = _pad2d(x, n_pad, c_pad).astype(jnp.bfloat16)

    # Edge endpoint indices as tiny int32 columns (one-hots built in-kernel).
    row = jnp.pad(edge_index[0].astype(jnp.int32), (0, e_pad - e)).reshape(e_pad, 1)
    col = jnp.pad(edge_index[1].astype(jnp.int32), (0, e_pad - e)).reshape(e_pad, 1)

    def stack_conv(c, cp):
        blocks = [_pad2d(c["w_root"], cp, h_pad)]
        for r in range(NUM_RELATIONS):
            blocks.append(_pad2d(c["w_rel"][r], cp, h_pad))
        return jnp.concatenate(blocks, axis=0)          # (4*cp, h_pad)

    wconv1 = stack_conv(params["conv1"], c_pad).astype(jnp.bfloat16)
    wconv23 = jnp.concatenate(
        [stack_conv(params["conv2"], h_pad),
         stack_conv(params["conv3"], h_pad)], axis=0).astype(jnp.bfloat16)

    cl = params["classifier"]
    w1 = cl["w1"]                                        # (2*hidden, hidden)
    wcls1 = jnp.concatenate(
        [_pad2d(w1[:hidden], h_pad, h_pad),
         _pad2d(w1[hidden:], h_pad, h_pad)], axis=0).astype(jnp.bfloat16)
    w2p = _pad2d(cl["w2"], h_pad, h2_pad).astype(jnp.bfloat16)
    w3p = _pad2d(cl["w3"], h2_pad, cls_pad).astype(jnp.bfloat16)

    # All six biases packed into one (8, b_pad) f32 buffer (rows 0..5).
    biases = jnp.zeros((8, b_pad), jnp.float32)
    for i, b in enumerate([params["conv1"]["b"], params["conv2"]["b"],
                           params["conv3"]["b"], cl["b1"], cl["b2"], cl["b3"]]):
        biases = biases.at[i:i + 1, :b.shape[1]].set(b.astype(jnp.float32))

    args = (A, x_p, row, col, wconv1, wconv23, wcls1, w2p, w3p, biases)
    kernel = functools.partial(
        fused_kernel, (c_pad, h_pad, h2_pad, cls_pad, n_pad))

    out = pl.pallas_call(
        kernel,
        out_shape=jax.ShapeDtypeStruct((e_pad, cls_pad), jnp.float32),
        grid=(edge_tiles,),
        in_specs=[
            pl.BlockSpec((NUM_RELATIONS, n_pad, n_pad), lambda i: (0, 0, 0)),
            pl.BlockSpec((n_pad, c_pad), lambda i: (0, 0)),
            pl.BlockSpec((e_tile, 1), lambda i: (i, 0)),
            pl.BlockSpec((e_tile, 1), lambda i: (i, 0)),
            pl.BlockSpec(wconv1.shape, lambda i: (0, 0)),
            pl.BlockSpec(wconv23.shape, lambda i: (0, 0)),
            pl.BlockSpec(wcls1.shape, lambda i: (0, 0)),
            pl.BlockSpec(w2p.shape, lambda i: (0, 0)),
            pl.BlockSpec(w3p.shape, lambda i: (0, 0)),
            pl.BlockSpec(biases.shape, lambda i: (0, 0)),
        ],
        out_specs=pl.BlockSpec((e_tile, cls_pad), lambda i: (i, 0)),
        compiler_params=pltpu.CompilerParams(
            dimension_semantics=("parallel",),
            vmem_limit_bytes=32 * 1024 * 1024),
    )(*args)

    return out[:e, :n_cls]


# ---------------------------------------------------------------------------
# Pure-JAX reference (same math, unpadded, f32) for a correctness check.
# ---------------------------------------------------------------------------
def reference_forward(x, edge_index, edge_type, params):
    A = build_adjacency(edge_index, edge_type, x.shape[0], NUM_RELATIONS)

    def conv(h, c):
        out = h @ c["w_root"] + c["b"]
        for r in range(NUM_RELATIONS):
            out = out + (A[r] @ h) @ c["w_rel"][r]
        return out

    x1 = jax.nn.relu(conv(x, params["conv1"]))
    x2 = jax.nn.relu(conv(x1, params["conv2"]))
    x3 = conv(x2, params["conv3"]) + x1
    row, col = edge_index[0], edge_index[1]
    ef = jnp.concatenate([x3[row], x3[col]], axis=-1)
    cl = params["classifier"]
    h = jax.nn.relu(ef @ cl["w1"] + cl["b1"])
    h = jax.nn.relu(h @ cl["w2"] + cl["b2"])
    return h @ cl["w3"] + cl["b3"]


# ---------------------------------------------------------------------------
if __name__ == "__main__":
    # Small shapes consistent with the module's forward.
    N, E = 16, 32            # nodes, edges
    IN_C, H = 64, 32         # in_channels, hidden_channels
    R = NUM_RELATIONS
    N_CLS = 3

    key = jax.random.PRNGKey(0)
    keys = jax.random.split(key, 24)

    x = jax.random.normal(keys[0], (N, IN_C), jnp.float32)
    src = jax.random.randint(keys[1], (E,), 0, N)
    dst = jax.random.randint(keys[2], (E,), 0, N)
    edge_index = jnp.stack([src, dst])                     # (2, E)
    edge_type = jax.random.randint(keys[3], (E,), 0, R)    # (E,)

    def p(k, shape, scale=0.1):
        return scale * jax.random.normal(k, shape, jnp.float32)

    params = {
        "conv1": {"w_rel": p(keys[4], (R, IN_C, H)),
                  "w_root": p(keys[5], (IN_C, H)),
                  "b": p(keys[13], (1, H))},
        "conv2": {"w_rel": p(keys[6], (R, H, H)),
                  "w_root": p(keys[7], (H, H)),
                  "b": p(keys[14], (1, H))},
        "conv3": {"w_rel": p(keys[8], (R, H, H)),
                  "w_root": p(keys[9], (H, H)),
                  "b": p(keys[15], (1, H))},
        "classifier": {
            "w1": p(keys[10], (2 * H, H)), "b1": p(keys[16], (1, H)),
            "w2": p(keys[11], (H, H // 2)), "b2": p(keys[17], (1, H // 2)),
            "w3": p(keys[12], (H // 2, N_CLS)), "b3": p(keys[18], (1, N_CLS)),
        },
    }

    logits = enhanced_legal_rgcn_forward(x, edge_index, edge_type, params)
    logits = jax.block_until_ready(logits)

    assert logits.shape == (E, N_CLS)
    assert bool(jnp.all(jnp.isfinite(logits)))

    ref = reference_forward(x, edge_index, edge_type, params)
    max_err = float(jnp.max(jnp.abs(logits - ref)))
    # bf16 MXU operands with f32 accumulation -> loosened absolute tolerance.
    assert max_err < 3e-2, f"mismatch vs reference: {max_err}"

    print("KERNEL_OK")
</pallas_src>

<mosaic_0001>
module attributes {stable_mosaic.version = 11 : i64} {
  func.func @fused_kernel(%arg0: i32, %arg1: memref<3x128x128xbf16, #tpu.memory_space<vmem>>, %arg2: memref<128x128xbf16, #tpu.memory_space<vmem>>, %arg3: memref<16x1xi32, #tpu.memory_space<vmem>>, %arg4: memref<16x1xi32, #tpu.memory_space<vmem>>, %arg5: memref<512x128xbf16, #tpu.memory_space<vmem>>, %arg6: memref<1024x128xbf16, #tpu.memory_space<vmem>>, %arg7: memref<256x128xbf16, #tpu.memory_space<vmem>>, %arg8: memref<128x128xbf16, #tpu.memory_space<vmem>>, %arg9: memref<128x128xbf16, #tpu.memory_space<vmem>>, %arg10: memref<8x128xf32, #tpu.memory_space<vmem>>, %arg11: memref<16x128xf32, #tpu.memory_space<vmem>>) attributes {dimension_semantics = [#tpu.dimension_semantics<parallel>], iteration_bounds = array<i64: 2>, scalar_prefetch = 0 : i64, scratch_operands = 0 : i64, tpu.core_type = #tpu.core_type<tc>, window_params = [{pipeline_mode = #tpu.pipeline_mode<synchronous>, transform_indices = @transform_0, window_bounds = array<i64: 3, 128, 128>}, {pipeline_mode = #tpu.pipeline_mode<synchronous>, transform_indices = @transform_1, window_bounds = array<i64: 128, 128>}, {transform_indices = @transform_2, window_bounds = array<i64: 16, 1>}, {transform_indices = @transform_3, window_bounds = array<i64: 16, 1>}, {pipeline_mode = #tpu.pipeline_mode<synchronous>, transform_indices = @transform_4, window_bounds = array<i64: 512, 128>}, {pipeline_mode = #tpu.pipeline_mode<synchronous>, transform_indices = @transform_5, window_bounds = array<i64: 1024, 128>}, {pipeline_mode = #tpu.pipeline_mode<synchronous>, transform_indices = @transform_6, window_bounds = array<i64: 256, 128>}, {pipeline_mode = #tpu.pipeline_mode<synchronous>, transform_indices = @transform_7, window_bounds = array<i64: 128, 128>}, {pipeline_mode = #tpu.pipeline_mode<synchronous>, transform_indices = @transform_8, window_bounds = array<i64: 128, 128>}, {pipeline_mode = #tpu.pipeline_mode<synchronous>, transform_indices = @transform_9, window_bounds = array<i64: 8, 128>}, {transform_indices = @transform_10, window_bounds = array<i64: 16, 128>}]} {
    %c0 = arith.constant 0 : index
    %c0_0 = arith.constant 0 : index
    %0 = vector.load %arg2[%c0, %c0_0] : memref<128x128xbf16, #tpu.memory_space<vmem>>, vector<128x128xbf16>
    %c0_1 = arith.constant 0 : index
    %c0_2 = arith.constant 0 : index
    %1 = vector.load %arg5[%c0_1, %c0_2] : memref<512x128xbf16, #tpu.memory_space<vmem>>, vector<128x128xbf16>
    %cst = arith.constant dense<0.000000e+00> : vector<128x128xf32>
    %2 = tpu.matmul %0, %1, %cst {dimension_numbers = #tpu.dot_dimension_numbers<[1], [0], [0], [1], [0, 0, 1, 1], [], []>} : vector<128x128xbf16>, vector<128x128xbf16>, vector<128x128xf32> -> vector<128x128xf32>
    %c0_3 = arith.constant 0 : index
    %c0_4 = arith.constant 0 : index
    %c0_5 = arith.constant 0 : index
    %3 = vector.load %arg1[%c0_3, %c0_4, %c0_5] : memref<3x128x128xbf16, #tpu.memory_space<vmem>>, vector<1x128x128xbf16>
    %4 = vector.shape_cast %3 : vector<1x128x128xbf16> to vector<128x128xbf16>
    %cst_6 = arith.constant dense<0.000000e+00> : vector<128x128xf32>
    %5 = tpu.matmul %4, %0, %cst_6 {dimension_numbers = #tpu.dot_dimension_numbers<[1], [0], [0], [1], [0, 0, 1, 1], [], []>} : vector<128x128xbf16>, vector<128x128xbf16>, vector<128x128xf32> -> vector<128x128xf32>
    %6 = arith.truncf %5 : vector<128x128xf32> to vector<128x128xbf16>
    %c128 = arith.constant 128 : index
    %c0_7 = arith.constant 0 : index
    %7 = vector.load %arg5[%c128, %c0_7] : memref<512x128xbf16, #tpu.memory_space<vmem>>, vector<128x128xbf16>
    %cst_8 = arith.constant dense<0.000000e+00> : vector<128x128xf32>
    %8 = tpu.matmul %6, %7, %cst_8 {dimension_numbers = #tpu.dot_dimension_numbers<[1], [0], [0], [1], [0, 0, 1, 1], [], []>} : vector<128x128xbf16>, vector<128x128xbf16>, vector<128x128xf32> -> vector<128x128xf32>
    %9 = arith.addf %2, %8 : vector<128x128xf32>
    %c1 = arith.constant 1 : index
    %c0_9 = arith.constant 0 : index
    %c0_10 = arith.constant 0 : index
    %10 = vector.load %arg1[%c1, %c0_9, %c0_10] : memref<3x128x128xbf16, #tpu.memory_space<vmem>>, vector<1x128x128xbf16>
    %11 = vector.shape_cast %10 : vector<1x128x128xbf16> to vector<128x128xbf16>
    %cst_11 = arith.constant dense<0.000000e+00> : vector<128x128xf32>
    %12 = tpu.matmul %11, %0, %cst_11 {dimension_numbers = #tpu.dot_dimension_numbers<[1], [0], [0], [1], [0, 0, 1, 1], [], []>} : vector<128x128xbf16>, vector<128x128xbf16>, vector<128x128xf32> -> vector<128x128xf32>
    %13 = arith.truncf %12 : vector<128x128xf32> to vector<128x128xbf16>
    %c256 = arith.constant 256 : index
    %c0_12 = arith.constant 0 : index
    %14 = vector.load %arg5[%c256, %c0_12] : memref<512x128xbf16, #tpu.memory_space<vmem>>, vector<128x128xbf16>
    %cst_13 = arith.constant dense<0.000000e+00> : vector<128x128xf32>
    %15 = tpu.matmul %13, %14, %cst_13 {dimension_numbers = #tpu.dot_dimension_numbers<[1], [0], [0], [1], [0, 0, 1, 1], [], []>} : vector<128x128xbf16>, vector<128x128xbf16>, vector<128x128xf32> -> vector<128x128xf32>
    %16 = arith.addf %9, %15 : vector<128x128xf32>
    %c2 = arith.constant 2 : index
    %c0_14 = arith.constant 0 : index
    %c0_15 = arith.constant 0 : index
    %17 = vector.load %arg1[%c2, %c0_14, %c0_15] : memref<3x128x128xbf16, #tpu.memory_space<vmem>>, vector<1x128x128xbf16>
    %18 = vector.shape_cast %17 : vector<1x128x128xbf16> to vector<128x128xbf16>
    %cst_16 = arith.constant dense<0.000000e+00> : vector<128x128xf32>
    %19 = tpu.matmul %18, %0, %cst_16 {dimension_numbers = #tpu.dot_dimension_numbers<[1], [0], [0], [1], [0, 0, 1, 1], [], []>} : vector<128x128xbf16>, vector<128x128xbf16>, vector<128x128xf32> -> vector<128x128xf32>
    %20 = arith.truncf %19 : vector<128x128xf32> to vector<128x128xbf16>
    %c384 = arith.constant 384 : index
    %c0_17 = arith.constant 0 : index
    %21 = vector.load %arg5[%c384, %c0_17] : memref<512x128xbf16, #tpu.memory_space<vmem>>, vector<128x128xbf16>
    %cst_18 = arith.constant dense<0.000000e+00> : vector<128x128xf32>
    %22 = tpu.matmul %20, %21, %cst_18 {dimension_numbers = #tpu.dot_dimension_numbers<[1], [0], [0], [1], [0, 0, 1, 1], [], []>} : vector<128x128xbf16>, vector<128x128xbf16>, vector<128x128xf32> -> vector<128x128xf32>
    %23 = arith.addf %16, %22 : vector<128x128xf32>
    %c0_19 = arith.constant 0 : index
    %c0_20 = arith.constant 0 : index
    %24 = vector.load %arg10[%c0_19, %c0_20] : memref<8x128xf32, #tpu.memory_space<vmem>>, vector<1x128xf32>
    %25 = vector.broadcast %24 : vector<1x128xf32> to vector<128x128xf32>
    %26 = arith.addf %23, %25 : vector<128x128xf32>
    %cst_21 = arith.constant 0.000000e+00 : f32
    %27 = vector.broadcast %cst_21 : f32 to vector<128x128xf32>
    %28 = arith.maximumf %26, %27 : vector<128x128xf32>
    %29 = arith.truncf %28 : vector<128x128xf32> to vector<128x128xbf16>
    %c0_22 = arith.constant 0 : index
    %c0_23 = arith.constant 0 : index
    %30 = vector.load %arg6[%c0_22, %c0_23] : memref<1024x128xbf16, #tpu.memory_space<vmem>>, vector<128x128xbf16>
    %cst_24 = arith.constant dense<0.000000e+00> : vector<128x128xf32>
    %31 = tpu.matmul %29, %30, %cst_24 {dimension_numbers = #tpu.dot_dimension_numbers<[1], [0], [0], [1], [0, 0, 1, 1], [], []>} : vector<128x128xbf16>, vector<128x128xbf16>, vector<128x128xf32> -> vector<128x128xf32>
    %c0_25 = arith.constant 0 : index
    %c0_26 = arith.constant 0 : index
    %c0_27 = arith.constant 0 : index
    %32 = vector.load %arg1[%c0_25, %c0_26, %c0_27] : memref<3x128x128xbf16, #tpu.memory_space<vmem>>, vector<1x128x128xbf16>
    %33 = vector.shape_cast %32 : vector<1x128x128xbf16> to vector<128x128xbf16>
    %cst_28 = arith.constant dense<0.000000e+00> : vector<128x128xf32>
    %34 = tpu.matmul %33, %29, %cst_28 {dimension_numbers = #tpu.dot_dimension_numbers<[1], [0], [0], [1], [0, 0, 1, 1], [], []>} : vector<128x128xbf16>, vector<128x128xbf16>, vector<128x128xf32> -> vector<128x128xf32>
    %35 = arith.truncf %34 : vector<128x128xf32> to vector<128x128xbf16>
    %c128_29 = arith.constant 128 : index
    %c0_30 = arith.constant 0 : index
    %36 = vector.load %arg6[%c128_29, %c0_30] : memref<1024x128xbf16, #tpu.memory_space<vmem>>, vector<128x128xbf16>
    %cst_31 = arith.constant dense<0.000000e+00> : vector<128x128xf32>
    %37 = tpu.matmul %35, %36, %cst_31 {dimension_numbers = #tpu.dot_dimension_numbers<[1], [0], [0], [1], [0, 0, 1, 1], [], []>} : vector<128x128xbf16>, vector<128x128xbf16>, vector<128x128xf32> -> vector<128x128xf32>
    %38 = arith.addf %31, %37 : vector<128x128xf32>
    %c1_32 = arith.constant 1 : index
    %c0_33 = arith.constant 0 : index
    %c0_34 = arith.constant 0 : index
    %39 = vector.load %arg1[%c1_32, %c0_33, %c0_34] : memref<3x128x128xbf16, #tpu.memory_space<vmem>>, vector<1x128x128xbf16>
    %40 = vector.shape_cast %39 : vector<1x128x128xbf16> to vector<128x128xbf16>
    %cst_35 = arith.constant dense<0.000000e+00> : vector<128x128xf32>
    %41 = tpu.matmul %40, %29, %cst_35 {dimension_numbers = #tpu.dot_dimension_numbers<[1], [0], [0], [1], [0, 0, 1, 1], [], []>} : vector<128x128xbf16>, vector<128x128xbf16>, vector<128x128xf32> -> vector<128x128xf32>
    %42 = arith.truncf %41 : vector<128x128xf32> to vector<128x128xbf16>
    %c256_36 = arith.constant 256 : index
    %c0_37 = arith.constant 0 : index
    %43 = vector.load %arg6[%c256_36, %c0_37] : memref<1024x128xbf16, #tpu.memory_space<vmem>>, vector<128x128xbf16>
    %cst_38 = arith.constant dense<0.000000e+00> : vector<128x128xf32>
    %44 = tpu.matmul %42, %43, %cst_38 {dimension_numbers = #tpu.dot_dimension_numbers<[1], [0], [0], [1], [0, 0, 1, 1], [], []>} : vector<128x128xbf16>, vector<128x128xbf16>, vector<128x128xf32> -> vector<128x128xf32>
    %45 = arith.addf %38, %44 : vector<128x128xf32>
    %c2_39 = arith.constant 2 : index
    %c0_40 = arith.constant 0 : index
    %c0_41 = arith.constant 0 : index
    %46 = vector.load %arg1[%c2_39, %c0_40, %c0_41] : memref<3x128x128xbf16, #tpu.memory_space<vmem>>, vector<1x128x128xbf16>
    %47 = vector.shape_cast %46 : vector<1x128x128xbf16> to vector<128x128xbf16>
    %cst_42 = arith.constant dense<0.000000e+00> : vector<128x128xf32>
    %48 = tpu.matmul %47, %29, %cst_42 {dimension_numbers = #tpu.dot_dimension_numbers<[1], [0], [0], [1], [0, 0, 1, 1], [], []>} : vector<128x128xbf16>, vector<128x128xbf16>, vector<128x128xf32> -> vector<128x128xf32>
    %49 = arith.truncf %48 : vector<128x128xf32> to vector<128x128xbf16>
    %c384_43 = arith.constant 384 : index
    %c0_44 = arith.constant 0 : index
    %50 = vector.load %arg6[%c384_43, %c0_44] : memref<1024x128xbf16, #tpu.memory_space<vmem>>, vector<128x128xbf16>
    %cst_45 = arith.constant dense<0.000000e+00> : vector<128x128xf32>
    %51 = tpu.matmul %49, %50, %cst_45 {dimension_numbers = #tpu.dot_dimension_numbers<[1], [0], [0], [1], [0, 0, 1, 1], [], []>} : vector<128x128xbf16>, vector<128x128xbf16>, vector<128x128xf32> -> vector<128x128xf32>
    %52 = arith.addf %45, %51 : vector<128x128xf32>
    %c1_46 = arith.constant 1 : index
    %c0_47 = arith.constant 0 : index
    %53 = vector.load %arg10[%c1_46, %c0_47] : memref<8x128xf32, #tpu.memory_space<vmem>>, vector<1x128xf32>
    %54 = vector.broadcast %53 : vector<1x128xf32> to vector<128x128xf32>
    %55 = arith.addf %52, %54 : vector<128x128xf32>
    %cst_48 = arith.constant 0.000000e+00 : f32
    %56 = vector.broadcast %cst_48 : f32 to vector<128x128xf32>
    %57 = arith.maximumf %55, %56 : vector<128x128xf32>
    %58 = arith.truncf %57 : vector<128x128xf32> to vector<128x128xbf16>
    %c512 = arith.constant 512 : index
    %c0_49 = arith.constant 0 : index
    %59 = vector.load %arg6[%c512, %c0_49] : memref<1024x128xbf16, #tpu.memory_space<vmem>>, vector<128x128xbf16>
    %cst_50 = arith.constant dense<0.000000e+00> : vector<128x128xf32>
    %60 = tpu.matmul %58, %59, %cst_50 {dimension_numbers = #tpu.dot_dimension_numbers<[1], [0], [0], [1], [0, 0, 1, 1], [], []>} : vector<128x128xbf16>, vector<128x128xbf16>, vector<128x128xf32> -> vector<128x128xf32>
    %c0_51 = arith.constant 0 : index
    %c0_52 = arith.constant 0 : index
    %c0_53 = arith.constant 0 : index
    %61 = vector.load %arg1[%c0_51, %c0_52, %c0_53] : memref<3x128x128xbf16, #tpu.memory_space<vmem>>, vector<1x128x128xbf16>
    %62 = vector.shape_cast %61 : vector<1x128x128xbf16> to vector<128x128xbf16>
    %cst_54 = arith.constant dense<0.000000e+00> : vector<128x128xf32>
    %63 = tpu.matmul %62, %58, %cst_54 {dimension_numbers = #tpu.dot_dimension_numbers<[1], [0], [0], [1], [0, 0, 1, 1], [], []>} : vector<128x128xbf16>, vector<128x128xbf16>, vector<128x128xf32> -> vector<128x128xf32>
    %64 = arith.truncf %63 : vector<128x128xf32> to vector<128x128xbf16>
    %c640 = arith.constant 640 : index
    %c0_55 = arith.constant 0 : index
    %65 = vector.load %arg6[%c640, %c0_55] : memref<1024x128xbf16, #tpu.memory_space<vmem>>, vector<128x128xbf16>
    %cst_56 = arith.constant dense<0.000000e+00> : vector<128x128xf32>
    %66 = tpu.matmul %64, %65, %cst_56 {dimension_numbers = #tpu.dot_dimension_numbers<[1], [0], [0], [1], [0, 0, 1, 1], [], []>} : vector<128x128xbf16>, vector<128x128xbf16>, vector<128x128xf32> -> vector<128x128xf32>
    %67 = arith.addf %60, %66 : vector<128x128xf32>
    %c1_57 = arith.constant 1 : index
    %c0_58 = arith.constant 0 : index
    %c0_59 = arith.constant 0 : index
    %68 = vector.load %arg1[%c1_57, %c0_58, %c0_59] : memref<3x128x128xbf16, #tpu.memory_space<vmem>>, vector<1x128x128xbf16>
    %69 = vector.shape_cast %68 : vector<1x128x128xbf16> to vector<128x128xbf16>
    %cst_60 = arith.constant dense<0.000000e+00> : vector<128x128xf32>
    %70 = tpu.matmul %69, %58, %cst_60 {dimension_numbers = #tpu.dot_dimension_numbers<[1], [0], [0], [1], [0, 0, 1, 1], [], []>} : vector<128x128xbf16>, vector<128x128xbf16>, vector<128x128xf32> -> vector<128x128xf32>
    %71 = arith.truncf %70 : vector<128x128xf32> to vector<128x128xbf16>
    %c768 = arith.constant 768 : index
    %c0_61 = arith.constant 0 : index
    %72 = vector.load %arg6[%c768, %c0_61] : memref<1024x128xbf16, #tpu.memory_space<vmem>>, vector<128x128xbf16>
    %cst_62 = arith.constant dense<0.000000e+00> : vector<128x128xf32>
    %73 = tpu.matmul %71, %72, %cst_62 {dimension_numbers = #tpu.dot_dimension_numbers<[1], [0], [0], [1], [0, 0, 1, 1], [], []>} : vector<128x128xbf16>, vector<128x128xbf16>, vector<128x128xf32> -> vector<128x128xf32>
    %74 = arith.addf %67, %73 : vector<128x128xf32>
    %c2_63 = arith.constant 2 : index
    %c0_64 = arith.constant 0 : index
    %c0_65 = arith.constant 0 : index
    %75 = vector.load %arg1[%c2_63, %c0_64, %c0_65] : memref<3x128x128xbf16, #tpu.memory_space<vmem>>, vector<1x128x128xbf16>
    %76 = vector.shape_cast %75 : vector<1x128x128xbf16> to vector<128x128xbf16>
    %cst_66 = arith.constant dense<0.000000e+00> : vector<128x128xf32>
    %77 = tpu.matmul %76, %58, %cst_66 {dimension_numbers = #tpu.dot_dimension_numbers<[1], [0], [0], [1], [0, 0, 1, 1], [], []>} : vector<128x128xbf16>, vector<128x128xbf16>, vector<128x128xf32> -> vector<128x128xf32>
    %78 = arith.truncf %77 : vector<128x128xf32> to vector<128x128xbf16>
    %c896 = arith.constant 896 : index
    %c0_67 = arith.constant 0 : index
    %79 = vector.load %arg6[%c896, %c0_67] : memref<1024x128xbf16, #tpu.memory_space<vmem>>, vector<128x128xbf16>
    %cst_68 = arith.constant dense<0.000000e+00> : vector<128x128xf32>
    %80 = tpu.matmul %78, %79, %cst_68 {dimension_numbers = #tpu.dot_dimension_numbers<[1], [0], [0], [1], [0, 0, 1, 1], [], []>} : vector<128x128xbf16>, vector<128x128xbf16>, vector<128x128xf32> -> vector<128x128xf32>
    %81 = arith.addf %74, %80 : vector<128x128xf32>
    %c2_69 = arith.constant 2 : index
    %c0_70 = arith.constant 0 : index
    %82 = vector.load %arg10[%c2_69, %c0_70] : memref<8x128xf32, #tpu.memory_space<vmem>>, vector<1x128xf32>
    %83 = vector.broadcast %82 : vector<1x128xf32> to vector<128x128xf32>
    %84 = arith.addf %81, %83 : vector<128x128xf32>
    %85 = arith.addf %84, %28 : vector<128x128xf32>
    %86 = arith.truncf %85 : vector<128x128xf32> to vector<128x128xbf16>
    %87 = tpu.iota {dimensions = array<i32: 1>} : vector<16x128xi32>
    %c0_71 = arith.constant 0 : index
    %c0_72 = arith.constant 0 : index
    %88 = vector.load %arg3[%c0_71, %c0_72] : memref<16x1xi32, #tpu.memory_space<vmem>>, vector<16x1xi32>
    %89 = vector.broadcast %88 : vector<16x1xi32> to vector<16x128xi32>
    %90 = arith.cmpi eq, %87, %89 : vector<16x128xi32>
    %91 = arith.extui %90 : vector<16x128xi1> to vector<16x128xi32>
    %92 = arith.sitofp %91 : vector<16x128xi32> to vector<16x128xf32>
    %93 = arith.truncf %92 : vector<16x128xf32> to vector<16x128xbf16>
    %c0_73 = arith.constant 0 : index
    %c0_74 = arith.constant 0 : index
    %94 = vector.load %arg4[%c0_73, %c0_74] : memref<16x1xi32, #tpu.memory_space<vmem>>, vector<16x1xi32>
    %95 = vector.broadcast %94 : vector<16x1xi32> to vector<16x128xi32>
    %96 = arith.cmpi eq, %87, %95 : vector<16x128xi32>
    %97 = arith.extui %96 : vector<16x128xi1> to vector<16x128xi32>
    %98 = arith.sitofp %97 : vector<16x128xi32> to vector<16x128xf32>
    %99 = arith.truncf %98 : vector<16x128xf32> to vector<16x128xbf16>
    %cst_75 = arith.constant dense<0.000000e+00> : vector<16x128xf32>
    %100 = tpu.matmul %93, %86, %cst_75 {dimension_numbers = #tpu.dot_dimension_numbers<[1], [0], [0], [1], [0, 0, 1, 1], [], []>} : vector<16x128xbf16>, vector<128x128xbf16>, vector<16x128xf32> -> vector<16x128xf32>
    %cst_76 = arith.constant dense<0.000000e+00> : vector<16x128xf32>
    %101 = tpu.matmul %99, %86, %cst_76 {dimension_numbers = #tpu.dot_dimension_numbers<[1], [0], [0], [1], [0, 0, 1, 1], [], []>} : vector<16x128xbf16>, vector<128x128xbf16>, vector<16x128xf32> -> vector<16x128xf32>
    %102 = arith.truncf %100 : vector<16x128xf32> to vector<16x128xbf16>
    %c0_77 = arith.constant 0 : index
    %c0_78 = arith.constant 0 : index
    %103 = vector.load %arg7[%c0_77, %c0_78] : memref<256x128xbf16, #tpu.memory_space<vmem>>, vector<128x128xbf16>
    %cst_79 = arith.constant dense<0.000000e+00> : vector<16x128xf32>
    %104 = tpu.matmul %102, %103, %cst_79 {dimension_numbers = #tpu.dot_dimension_numbers<[1], [0], [0], [1], [0, 0, 1, 1], [], []>} : vector<16x128xbf16>, vector<128x128xbf16>, vector<16x128xf32> -> vector<16x128xf32>
    %105 = arith.truncf %101 : vector<16x128xf32> to vector<16x128xbf16>
    %c128_80 = arith.constant 128 : index
    %c0_81 = arith.constant 0 : index
    %106 = vector.load %arg7[%c128_80, %c0_81] : memref<256x128xbf16, #tpu.memory_space<vmem>>, vector<128x128xbf16>
    %cst_82 = arith.constant dense<0.000000e+00> : vector<16x128xf32>
    %107 = tpu.matmul %105, %106, %cst_82 {dimension_numbers = #tpu.dot_dimension_numbers<[1], [0], [0], [1], [0, 0, 1, 1], [], []>} : vector<16x128xbf16>, vector<128x128xbf16>, vector<16x128xf32> -> vector<16x128xf32>
    %108 = arith.addf %104, %107 : vector<16x128xf32>
    %c3 = arith.constant 3 : index
    %c0_83 = arith.constant 0 : index
    %109 = vector.load %arg10[%c3, %c0_83] : memref<8x128xf32, #tpu.memory_space<vmem>>, vector<1x128xf32>
    %110 = vector.broadcast %109 : vector<1x128xf32> to vector<16x128xf32>
    %111 = arith.addf %108, %110 : vector<16x128xf32>
    %cst_84 = arith.constant 0.000000e+00 : f32
    %112 = vector.broadcast %cst_84 : f32 to vector<16x128xf32>
    %113 = arith.maximumf %111, %112 : vector<16x128xf32>
    %114 = arith.truncf %113 : vector<16x128xf32> to vector<16x128xbf16>
    %c0_85 = arith.constant 0 : index
    %c0_86 = arith.constant 0 : index
    %115 = vector.load %arg8[%c0_85, %c0_86] : memref<128x128xbf16, #tpu.memory_space<vmem>>, vector<128x128xbf16>
    %cst_87 = arith.constant dense<0.000000e+00> : vector<16x128xf32>
    %116 = tpu.matmul %114, %115, %cst_87 {dimension_numbers = #tpu.dot_dimension_numbers<[1], [0], [0], [1], [0, 0, 1, 1], [], []>} : vector<16x128xbf16>, vector<128x128xbf16>, vector<16x128xf32> -> vector<16x128xf32>
    %c4 = arith.constant 4 : index
    %c0_88 = arith.constant 0 : index
    %117 = vector.load %arg10[%c4, %c0_88] : memref<8x128xf32, #tpu.memory_space<vmem>>, vector<1x128xf32>
    %118 = vector.broadcast %117 : vector<1x128xf32> to vector<16x128xf32>
    %119 = arith.addf %116, %118 : vector<16x128xf32>
    %cst_89 = arith.constant 0.000000e+00 : f32
    %120 = vector.broadcast %cst_89 : f32 to vector<16x128xf32>
    %121 = arith.maximumf %119, %120 : vector<16x128xf32>
    %122 = arith.truncf %121 : vector<16x128xf32> to vector<16x128xbf16>
    %c0_90 = arith.constant 0 : index
    %c0_91 = arith.constant 0 : index
    %123 = vector.load %arg9[%c0_90, %c0_91] : memref<128x128xbf16, #tpu.memory_space<vmem>>, vector<128x128xbf16>
    %cst_92 = arith.constant dense<0.000000e+00> : vector<16x128xf32>
    %124 = tpu.matmul %122, %123, %cst_92 {dimension_numbers = #tpu.dot_dimension_numbers<[1], [0], [0], [1], [0, 0, 1, 1], [], []>} : vector<16x128xbf16>, vector<128x128xbf16>, vector<16x128xf32> -> vector<16x128xf32>
    %c5 = arith.constant 5 : index
    %c0_93 = arith.constant 0 : index
    %125 = vector.load %arg10[%c5, %c0_93] : memref<8x128xf32, #tpu.memory_space<vmem>>, vector<1x128xf32>
    %126 = vector.broadcast %125 : vector<1x128xf32> to vector<16x128xf32>
    %127 = arith.addf %124, %126 : vector<16x128xf32>
    %c0_94 = arith.constant 0 : index
    %c0_95 = arith.constant 0 : index
    %128 = vector.load %arg11[%c0_94, %c0_95] : memref<16x128xf32, #tpu.memory_space<vmem>>, vector<16x128xf32>
    tpu.vector_store %arg11[%c0_94, %c0_95], %127 {strides = array<i32>} : memref<16x128xf32, #tpu.memory_space<vmem>>, vector<16x128xf32>,
    return
  }
  func.func @transform_0(%arg0: i32) -> (i32, i32, i32) {
    %c0_i32 = arith.constant 0 : i32
    %c0_i32_0 = arith.constant 0 : i32
    %c0_i32_1 = arith.constant 0 : i32
    %c0_i32_2 = arith.constant 0 : i32
    return %c0_i32, %c0_i32_0, %c0_i32_1 : i32, i32, i32
  }
  func.func @transform_1(%arg0: i32) -> (i32, i32) {
    %c0_i32 = arith.constant 0 : i32
    %c0_i32_0 = arith.constant 0 : i32
    %c0_i32_1 = arith.constant 0 : i32
    return %c0_i32, %c0_i32_0 : i32, i32
  }
  func.func @transform_2(%arg0: i32) -> (i32, i32) {
    %c0_i32 = arith.constant 0 : i32
    %c0_i32_0 = arith.constant 0 : i32
    return %arg0, %c0_i32 : i32, i32
  }
  func.func @transform_3(%arg0: i32) -> (i32, i32) {
    %c0_i32 = arith.constant 0 : i32
    %c0_i32_0 = arith.constant 0 : i32
    return %arg0, %c0_i32 : i32, i32
  }
  func.func @transform_4(%arg0: i32) -> (i32, i32) {
    %c0_i32 = arith.constant 0 : i32
    %c0_i32_0 = arith.constant 0 : i32
    %c0_i32_1 = arith.constant 0 : i32
    return %c0_i32, %c0_i32_0 : i32, i32
  }
  func.func @transform_5(%arg0: i32) -> (i32, i32) {
    %c0_i32 = arith.constant 0 : i32
    %c0_i32_0 = arith.constant 0 : i32
    %c0_i32_1 = arith.constant 0 : i32
    return %c0_i32, %c0_i32_0 : i32, i32
  }
  func.func @transform_6(%arg0: i32) -> (i32, i32) {
    %c0_i32 = arith.constant 0 : i32
    %c0_i32_0 = arith.constant 0 : i32
    %c0_i32_1 = arith.constant 0 : i32
    return %c0_i32, %c0_i32_0 : i32, i32
  }
  func.func @transform_7(%arg0: i32) -> (i32, i32) {
    %c0_i32 = arith.constant 0 : i32
    %c0_i32_0 = arith.constant 0 : i32
    %c0_i32_1 = arith.constant 0 : i32
    return %c0_i32, %c0_i32_0 : i32, i32
  }
  func.func @transform_8(%arg0: i32) -> (i32, i32) {
    %c0_i32 = arith.constant 0 : i32
    %c0_i32_0 = arith.constant 0 : i32
    %c0_i32_1 = arith.constant 0 : i32
    return %c0_i32, %c0_i32_0 : i32, i32
  }
  func.func @transform_9(%arg0: i32) -> (i32, i32) {
    %c0_i32 = arith.constant 0 : i32
    %c0_i32_0 = arith.constant 0 : i32
    %c0_i32_1 = arith.constant 0 : i32
    return %c0_i32, %c0_i32_0 : i32, i32
  }
  func.func @transform_10(%arg0: i32) -> (i32, i32) {
    %c0_i32 = arith.constant 0 : i32
    %c0_i32_0 = arith.constant 0 : i32
    return %arg0, %c0_i32 : i32, i32
  }
}

</mosaic_0001>

<llo_original>
// kernel: tpu_custom_call.1
$region0: #{tpu_custom_call.1}
  #allocation0 [shape = 'u32[]', space=smem, size = 0x4, offset = 0x4, fixed_abs, tag = 'smem constant byte address 0x4 - core index']
  #allocation1 [shape = 'u32[144,128]{1,0:T(1,128)}', space=vmem, size = 0x12000, scoped, tag = 'internal scratch']
  %s0 = inlined_call_operand.hbm [shape: bf16[3,128,128], index: 0, kind: input, shape index: {}]
  %s1 = inlined_call_operand.vmem [shape: bf16[128,128], index: 1, kind: input, shape index: {}]
  %s2 = inlined_call_operand.vmem [shape: s32[32,1], index: 2, kind: input, shape index: {}]
  %s3 = inlined_call_operand.vmem [shape: s32[32,1], index: 3, kind: input, shape index: {}]
  %s4 = inlined_call_operand.hbm [shape: bf16[512,128], index: 4, kind: input, shape index: {}]
  %s5 = inlined_call_operand.hbm [shape: bf16[1024,128], index: 5, kind: input, shape index: {}]
  %s6 = inlined_call_operand.hbm [shape: bf16[256,128], index: 6, kind: input, shape index: {}]
  %s7 = inlined_call_operand.hbm [shape: bf16[128,128], index: 7, kind: input, shape index: {}]
  %s8 = inlined_call_operand.hbm [shape: bf16[128,128], index: 8, kind: input, shape index: {}]
  %s9 = inlined_call_operand.vmem [shape: f32[8,128], index: 9, kind: input, shape index: {}]
  %s10 = inlined_call_operand.hbm [shape: f32[32,128], index: 10, kind: output, shape index: {}]
  %s11 = sld [smem:[#allocation0]]
  $region97: #{tpu_custom_call.1} parent=0
    _
  %s13 = ssub.s32 1, %s11
  %s14 = scalar_select 0, %s13, %s11
  $region1: #{tpu_custom_call.1} parent=0
    #allocation2 [shape = 'u8[98304]{0}', space=vmem, size = 0x18000, scoped, tag = 'input window, operand 0, single buffered']
    #allocation3 [shape = 's32[2]{0}', space=sflag, size = 0x8, scoped, tag = 'scoped memory for tpu_custom_call.1']
    #allocation4 [shape = 's32[2]{0}', space=sflag, size = 0x8, scoped, tag = 'scoped memory for tpu_custom_call.1']
    #allocation5 [shape = 'u8[131072]{0}', space=vmem, size = 0x20000, scoped, tag = 'input window, operand 4, single buffered']
    #allocation6 [shape = 's32[1]{0}', space=sflag, size = 0x4, scoped, tag = 'scoped memory for tpu_custom_call.1']
    #allocation7 [shape = 'u8[262144]{0}', space=vmem, size = 0x40000, scoped, tag = 'input window, operand 5, single buffered']
    #allocation8 [shape = 'u8[65536]{0}', space=vmem, size = 0x10000, scoped, tag = 'input window, operand 6, single buffered']
    #allocation9 [shape = 's32[1]{0}', space=sflag, size = 0x4, scoped, tag = 'scoped memory for tpu_custom_call.1']
    #allocation10 [shape = 'u8[32768]{0}', space=vmem, size = 0x8000, scoped, tag = 'input window, operand 7, single buffered']
    #allocation11 [shape = 'u8[32768]{0}', space=vmem, size = 0x8000, scoped, tag = 'input window, operand 8, single buffered']
    #allocation12 [shape = 's32[1]{0}', space=sflag, size = 0x4, scoped, tag = 'scoped memory for tpu_custom_call.1']
    #allocation13 [shape = 'u8[16384]{0}', space=vmem, size = 0x4000, scoped, tag = 'output window, operand 0']
    %15 = vsyncpa [#allocation3], 0
    %16 = vsyncpa [#allocation6], 0
    %17 = vsyncpa [#allocation9], 0
    %18 = vsyncpa [#allocation12], 0
    %19 = vsyncpa [#allocation4], 0
    %s20 = scalar_lea.sflag [#allocation4], 1
    %21 = vsyncpa %s20, 0
    loop: start=0, step=1, limit=4
    $region2: #{tpu_custom_call.1} parent=1 // loop_pre_header
      _
    $region3: #{tpu_custom_call.1} parent=1 // loop_header
      %s23 = sphi 0, %s27
      %p24 = scmp.ge.s32.totalorder %s23, 4
      %s31 = sphi 0, %s31
      %s33 = sphi 0, %s31
      %s34 = sphi 0, %s33
      %s48 = sphi 0, %s34
      %s52 = sphi 0, %s52
      %s54 = sphi 0, %s52
      %s55 = sphi 0, %s54
      %s69 = sphi 0, %s55
      %s75 = sphi 0, %s77
      %s78 = sphi 0, %s75
      %s79 = sphi 0, %s78
      %s95 = sphi 0, %s79
      %s101 = sphi 0, %s103
      %s104 = sphi 0, %s101
      %s105 = sphi 0, %s104
      %s121 = sphi 0, %s105
      %s125 = sphi 0, %s125
      %s127 = sphi 0, %s125
      %s128 = sphi 0, %s127
      %s142 = sphi 0, %s128
      %s146 = sphi 0, %s146
      %s148 = sphi 0, %s146
      %s149 = sphi 0, %s148
      %s163 = sphi 0, %s149
      %s167 = sphi 0, %s167
      %s169 = sphi 0, %s167
      %s170 = sphi 0, %s169
      %s184 = sphi 0, %s170
      %s188 = sphi 0, %s188
      %s190 = sphi 0, %s188
      %s191 = sphi 0, %s190
      %s205 = sphi 0, %s191
      %s209 = sphi 0, %s209
      %s211 = sphi 0, %s209
      %s212 = sphi 0, %s211
      %s226 = sphi 0, %s212
      %s230 = sphi 0, %s230
      %s232 = sphi 0, %s230
      %s233 = sphi 0, %s232
      %s247 = sphi 0, %s233
      %s253 = sphi 0, %s255
      %s256 = sphi 0, %s253
      %s257 = sphi 0, %s256
      %s273 = sphi 0, %s257
    $region4: #{tpu_custom_call.1} parent=1 // loop_header_branch
      %26 = sbr.rel (%p24) target = $region8
    $region5: #{tpu_custom_call.1} parent=1 // loop_body
      %s28 = ssub.s32 %s23, 1
      %s29 = ssub.s32 %s23, 2
      %s30 = sadd.s32 %s23, 1
      %s32 = sadd.s32 %s31, 1
      %p35 = scmp.eq.s32.totalorder %s23, 1
      %p36 = scmp.ne.s32.totalorder %s31, %s33
      %p37 = scmp.eq.s32.totalorder %s23, 0
      %p38 = por %p36, %p37
      %p39 = scmp.ne.s32.totalorder %s31, %s33
      %p40 = scmp.eq.s32.totalorder %s28, 1
      %p41 = por %p39, %p40
      %p42 = scmp.ne.s32.totalorder %s33, %s34
      %p43 = scmp.eq.s32.totalorder %s28, 0
      %p44 = por %p42, %p43
      %p45 = scmp.ne.s32.totalorder %s33, %s34
      %p46 = scmp.eq.s32.totalorder %s29, 1
      %p47 = por %p45, %p46
      %p49 = scmp.ne.s32.totalorder %s34, %s48
      %p50 = scmp.eq.s32.totalorder %s29, 0
      %p51 = por %p49, %p50
      %s53 = sadd.s32 %s52, 1
      %p56 = scmp.eq.s32.totalorder %s23, 1
      %p57 = scmp.ne.s32.totalorder %s52, %s54
      %p58 = scmp.eq.s32.totalorder %s23, 0
      %p59 = por %p57, %p58
      %p60 = scmp.ne.s32.totalorder %s52, %s54
      %p61 = scmp.eq.s32.totalorder %s28, 1
      %p62 = por %p60, %p61
      %p63 = scmp.ne.s32.totalorder %s54, %s55
      %p64 = scmp.eq.s32.totalorder %s28, 0
      %p65 = por %p63, %p64
      %p66 = scmp.ne.s32.totalorder %s54, %s55
      %p67 = scmp.eq.s32.totalorder %s29, 1
      %p68 = por %p66, %p67
      %p70 = scmp.ne.s32.totalorder %s55, %s69
      %p71 = scmp.eq.s32.totalorder %s29, 0
      %p72 = por %p70, %p71
      %s73 = ssub.s32 %s23, %s30
      %p74 = scmp.eq.s32.totalorder %s73, 0
      %s76 = sadd.s32 %s75, 1
      %s77 = scalar_select %p74, %s75, %s76
      %p80 = pneg %p74
      %p81 = scmp.eq.s32.totalorder %s23, 1
      %p82 = por %p80, %p81
      %p83 = scmp.ne.s32.totalorder %s75, %s78
      %p84 = scmp.eq.s32.totalorder %s23, 0
      %p85 = por %p83, %p84
      %p86 = scmp.ne.s32.totalorder %s75, %s78
      %p87 = scmp.eq.s32.totalorder %s28, 1
      %p88 = por %p86, %p87
      %p89 = scmp.ne.s32.totalorder %s78, %s79
      %p90 = scmp.eq.s32.totalorder %s28, 0
      %p91 = por %p89, %p90
      %p92 = scmp.ne.s32.totalorder %s78, %s79
      %p93 = scmp.eq.s32.totalorder %s29, 1
      %p94 = por %p92, %p93
      %p96 = scmp.ne.s32.totalorder %s79, %s95
      %p97 = scmp.eq.s32.totalorder %s29, 0
      %p98 = por %p96, %p97
      %s99 = ssub.s32 %s23, %s30
      %p100 = scmp.eq.s32.totalorder %s99, 0
      %s102 = sadd.s32 %s101, 1
      %s103 = scalar_select %p100, %s101, %s102
      %p106 = pneg %p100
      %p107 = scmp.eq.s32.totalorder %s23, 1
      %p108 = por %p106, %p107
      %p109 = scmp.ne.s32.totalorder %s101, %s104
      %p110 = scmp.eq.s32.totalorder %s23, 0
      %p111 = por %p109, %p110
      %p112 = scmp.ne.s32.totalorder %s101, %s104
      %p113 = scmp.eq.s32.totalorder %s28, 1
      %p114 = por %p112, %p113
      %p115 = scmp.ne.s32.totalorder %s104, %s105
      %p116 = scmp.eq.s32.totalorder %s28, 0
      %p117 = por %p115, %p116
      %p118 = scmp.ne.s32.totalorder %s104, %s105
      %p119 = scmp.eq.s32.totalorder %s29, 1
      %p120 = por %p118, %p119
      %p122 = scmp.ne.s32.totalorder %s105, %s121
      %p123 = scmp.eq.s32.totalorder %s29, 0
      %p124 = por %p122, %p123
      %s126 = sadd.s32 %s125, 1
      %p129 = scmp.eq.s32.totalorder %s23, 1
      %p130 = scmp.ne.s32.totalorder %s125, %s127
      %p131 = scmp.eq.s32.totalorder %s23, 0
      %p132 = por %p130, %p131
      %p133 = scmp.ne.s32.totalorder %s125, %s127
      %p134 = scmp.eq.s32.totalorder %s28, 1
      %p135 = por %p133, %p134
      %p136 = scmp.ne.s32.totalorder %s127, %s128
      %p137 = scmp.eq.s32.totalorder %s28, 0
      %p138 = por %p136, %p137
      %p139 = scmp.ne.s32.totalorder %s127, %s128
      %p140 = scmp.eq.s32.totalorder %s29, 1
      %p141 = por %p139, %p140
      %p143 = scmp.ne.s32.totalorder %s128, %s142
      %p144 = scmp.eq.s32.totalorder %s29, 0
      %p145 = por %p143, %p144
      %s147 = sadd.s32 %s146, 1
      %p150 = scmp.eq.s32.totalorder %s23, 1
      %p151 = scmp.ne.s32.totalorder %s146, %s148
      %p152 = scmp.eq.s32.totalorder %s23, 0
      %p153 = por %p151, %p152
      %p154 = scmp.ne.s32.totalorder %s146, %s148
      %p155 = scmp.eq.s32.totalorder %s28, 1
      %p156 = por %p154, %p155
      %p157 = scmp.ne.s32.totalorder %s148, %s149
      %p158 = scmp.eq.s32.totalorder %s28, 0
      %p159 = por %p157, %p158
      %p160 = scmp.ne.s32.totalorder %s148, %s149
      %p161 = scmp.eq.s32.totalorder %s29, 1
      %p162 = por %p160, %p161
      %p164 = scmp.ne.s32.totalorder %s149, %s163
      %p165 = scmp.eq.s32.totalorder %s29, 0
      %p166 = por %p164, %p165
      %s168 = sadd.s32 %s167, 1
      %p171 = scmp.eq.s32.totalorder %s23, 1
      %p172 = scmp.ne.s32.totalorder %s167, %s169
      %p173 = scmp.eq.s32.totalorder %s23, 0
      %p174 = por %p172, %p173
      %p175 = scmp.ne.s32.totalorder %s167, %s169
      %p176 = scmp.eq.s32.totalorder %s28, 1
      %p177 = por %p175, %p176
      %p178 = scmp.ne.s32.totalorder %s169, %s170
      %p179 = scmp.eq.s32.totalorder %s28, 0
      %p180 = por %p178, %p179
      %p181 = scmp.ne.s32.totalorder %s169, %s170
      %p182 = scmp.eq.s32.totalorder %s29, 1
      %p183 = por %p181, %p182
      %p185 = scmp.ne.s32.totalorder %s170, %s184
      %p186 = scmp.eq.s32.totalorder %s29, 0
      %p187 = por %p185, %p186
      %s189 = sadd.s32 %s188, 1
      %p192 = scmp.eq.s32.totalorder %s23, 1
      %p193 = scmp.ne.s32.totalorder %s188, %s190
      %p194 = scmp.eq.s32.totalorder %s23, 0
      %p195 = por %p193, %p194
      %p196 = scmp.ne.s32.totalorder %s188, %s190
      %p197 = scmp.eq.s32.totalorder %s28, 1
      %p198 = por %p196, %p197
      %p199 = scmp.ne.s32.totalorder %s190, %s191
      %p200 = scmp.eq.s32.totalorder %s28, 0
      %p201 = por %p199, %p200
      %p202 = scmp.ne.s32.totalorder %s190, %s191
      %p203 = scmp.eq.s32.totalorder %s29, 1
      %p204 = por %p202, %p203
      %p206 = scmp.ne.s32.totalorder %s191, %s205
      %p207 = scmp.eq.s32.totalorder %s29, 0
      %p208 = por %p206, %p207
      %s210 = sadd.s32 %s209, 1
      %p213 = scmp.eq.s32.totalorder %s23, 1
      %p214 = scmp.ne.s32.totalorder %s209, %s211
      %p215 = scmp.eq.s32.totalorder %s23, 0
      %p216 = por %p214, %p215
      %p217 = scmp.ne.s32.totalorder %s209, %s211
      %p218 = scmp.eq.s32.totalorder %s28, 1
      %p219 = por %p217, %p218
      %p220 = scmp.ne.s32.totalorder %s211, %s212
      %p221 = scmp.eq.s32.totalorder %s28, 0
      %p222 = por %p220, %p221
      %p223 = scmp.ne.s32.totalorder %s211, %s212
      %p224 = scmp.eq.s32.totalorder %s29, 1
      %p225 = por %p223, %p224
      %p227 = scmp.ne.s32.totalorder %s212, %s226
      %p228 = scmp.eq.s32.totalorder %s29, 0
      %p229 = por %p227, %p228
      %s231 = sadd.s32 %s230, 1
      %p234 = scmp.eq.s32.totalorder %s23, 1
      %p235 = scmp.ne.s32.totalorder %s230, %s232
      %p236 = scmp.eq.s32.totalorder %s23, 0
      %p237 = por %p235, %p236
      %p238 = scmp.ne.s32.totalorder %s230, %s232
      %p239 = scmp.eq.s32.totalorder %s28, 1
      %p240 = por %p238, %p239
      %p241 = scmp.ne.s32.totalorder %s232, %s233
      %p242 = scmp.eq.s32.totalorder %s28, 0
      %p243 = por %p241, %p242
      %p244 = scmp.ne.s32.totalorder %s232, %s233
      %p245 = scmp.eq.s32.totalorder %s29, 1
      %p246 = por %p244, %p245
      %p248 = scmp.ne.s32.totalorder %s233, %s247
      %p249 = scmp.eq.s32.totalorder %s29, 0
      %p250 = por %p248, %p249
      %s251 = ssub.s32 %s23, %s30
      %p252 = scmp.eq.s32.totalorder %s251, 0
      %s254 = sadd.s32 %s253, 1
      %s255 = scalar_select %p252, %s253, %s254
      %p258 = pneg %p252
      %p259 = scmp.eq.s32.totalorder %s23, 1
      %p260 = por %p258, %p259
      %p261 = scmp.ne.s32.totalorder %s253, %s256
      %p262 = scmp.eq.s32.totalorder %s23, 0
      %p263 = por %p261, %p262
      %p264 = scmp.ne.s32.totalorder %s253, %s256
      %p265 = scmp.eq.s32.totalorder %s28, 1
      %p266 = por %p264, %p265
      %p267 = scmp.ne.s32.totalorder %s256, %s257
      %p268 = scmp.eq.s32.totalorder %s28, 0
      %p269 = por %p267, %p268
      %p270 = scmp.ne.s32.totalorder %s256, %s257
      %p271 = scmp.eq.s32.totalorder %s29, 1
      %p272 = por %p270, %p271
      %p274 = scmp.ne.s32.totalorder %s257, %s273
      %p275 = scmp.eq.s32.totalorder %s29, 0
      %p276 = por %p274, %p275
      %p277 = scmp.le.s32.totalorder 1, %s23
      %p278 = scmp.lt.s32.totalorder %s23, 3
      %p279 = pnand %p277, %p278
      %p280 = pneg %p279
      // Predicated region
      $region9: #{tpu_custom_call.1} parent=5 // pred_check
        _
      $region10: #{tpu_custom_call.1} parent=5 // pred_check_branch
        %282 = sbr.rel (%p279) target = $region12
      $region11: #{tpu_custom_call.1} parent=5 // pred_region
        %s283 = ssub.s32 %s23, 1
        // Predicated region
        $region13: #{tpu_custom_call.1} parent=11 // pred_check
          %p284 = pneg %p44
        $region14: #{tpu_custom_call.1} parent=11 // pred_check_branch
          %286 = sbr.rel (%p284) target = $region16
        $region15: #{tpu_custom_call.1} parent=11 // pred_region
          %s288 = ssub.s32 3072, 3072
          %289 = vsyncadd [#allocation3], %s288
          %s290 = sshll.u32 [#allocation2], 4
          %s291 = int_to_ptr.vmem [resolvable:$true] %s290
          %296 = dma.hbm_to_vmem [thread:$0]  %s0, 3072, %s291, [#allocation3], 64, 64, 4
        $region16: #{tpu_custom_call.1} parent=11 // pred_fallthru
          _
        // Predicated region
        $region17: #{tpu_custom_call.1} parent=11 // pred_check
          %p297 = pneg %p65
        $region18: #{tpu_custom_call.1} parent=11 // pred_check_branch
          %299 = sbr.rel (%p297) target = $region20
        $region19: #{tpu_custom_call.1} parent=11 // pred_region
          _
        $region20: #{tpu_custom_call.1} parent=11 // pred_fallthru
          _
        // Predicated region
        $region21: #{tpu_custom_call.1} parent=11 // pred_check
          %p300 = pneg %p138
        $region22: #{tpu_custom_call.1} parent=11 // pred_check_branch
          %302 = sbr.rel (%p300) target = $region24
        $region23: #{tpu_custom_call.1} parent=11 // pred_region
          %s304 = ssub.s32 4096, 4096
          %305 = vsyncadd [#allocation6], %s304
          %s306 = sshll.u32 [#allocation5], 4
          %s307 = int_to_ptr.vmem [resolvable:$true] %s306
          %312 = dma.hbm_to_vmem [thread:$0]  %s4, 4096, %s307, [#allocation6], 64, 64, 4
        $region24: #{tpu_custom_call.1} parent=11 // pred_fallthru
          _
        // Predicated region
        $region25: #{tpu_custom_call.1} parent=11 // pred_check
          %p313 = pneg %p159
        $region26: #{tpu_custom_call.1} parent=11 // pred_check_branch
          %315 = sbr.rel (%p313) target = $region28
        $region27: #{tpu_custom_call.1} parent=11 // pred_region
          %s317 = ssub.s32 8192, 8192
          %318 = vsyncadd [#allocation6], %s317
          %s319 = sshll.u32 [#allocation7], 4
          %s320 = int_to_ptr.vmem [resolvable:$true] %s319
          %325 = dma.hbm_to_vmem [thread:$0]  %s5, 8192, %s320, [#allocation6], 64, 64, 4
        $region28: #{tpu_custom_call.1} parent=11 // pred_fallthru
          _
        // Predicated region
        $region29: #{tpu_custom_call.1} parent=11 // pred_check
          %p326 = pneg %p180
        $region30: #{tpu_custom_call.1} parent=11 // pred_check_branch
          %328 = sbr.rel (%p326) target = $region32
        $region31: #{tpu_custom_call.1} parent=11 // pred_region
          %s330 = ssub.s32 2048, 2048
          %331 = vsyncadd [#allocation9], %s330
          %s332 = sshll.u32 [#allocation8], 4
          %s333 = int_to_ptr.vmem [resolvable:$true] %s332
          %338 = dma.hbm_to_vmem [thread:$0]  %s6, 2048, %s333, [#allocation9], 64, 64, 4
        $region32: #{tpu_custom_call.1} parent=11 // pred_fallthru
          _
        // Predicated region
        $region33: #{tpu_custom_call.1} parent=11 // pred_check
          %p339 = pneg %p201
        $region34: #{tpu_custom_call.1} parent=11 // pred_check_branch
          %341 = sbr.rel (%p339) target = $region36
        $region35: #{tpu_custom_call.1} parent=11 // pred_region
          %s343 = ssub.s32 1024, 1024
          %344 = vsyncadd [#allocation9], %s343
          %s345 = sshll.u32 [#allocation10], 4
          %s346 = int_to_ptr.vmem [resolvable:$true] %s345
          %351 = dma.hbm_to_vmem [thread:$0]  %s7, 1024, %s346, [#allocation9], 64, 64, 4
        $region36: #{tpu_custom_call.1} parent=11 // pred_fallthru
          _
        // Predicated region
        $region37: #{tpu_custom_call.1} parent=11 // pred_check
          %p352 = pneg %p222
        $region38: #{tpu_custom_call.1} parent=11 // pred_check_branch
          %354 = sbr.rel (%p352) target = $region40
        $region39: #{tpu_custom_call.1} parent=11 // pred_region
          %s356 = ssub.s32 1024, 1024
          %357 = vsyncadd [#allocation12], %s356
          %s358 = sshll.u32 [#allocation11], 4
          %s359 = int_to_ptr.vmem [resolvable:$true] %s358
          %364 = dma.hbm_to_vmem [thread:$0]  %s8, 1024, %s359, [#allocation12], 64, 64, 4
        $region40: #{tpu_custom_call.1} parent=11 // pred_fallthru
          _
        // Predicated region
        $region41: #{tpu_custom_call.1} parent=11 // pred_check
          %p365 = pneg %p243
        $region42: #{tpu_custom_call.1} parent=11 // pred_check_branch
          %367 = sbr.rel (%p365) target = $region44
        $region43: #{tpu_custom_call.1} parent=11 // pred_region
          _
        $region44: #{tpu_custom_call.1} parent=11 // pred_fallthru
          _
      $region12: #{tpu_custom_call.1} parent=5 // pred_fallthru
        _
      %p368 = scmp.lt.s32.totalorder %s23, 2
      // Predicated region
      $region45: #{tpu_custom_call.1} parent=5 // pred_check
        %p369 = pneg %p368
      $region46: #{tpu_custom_call.1} parent=5 // pred_check_branch
        %371 = sbr.rel (%p369) target = $region48
      $region47: #{tpu_custom_call.1} parent=5 // pred_region
        // Predicated region
        $region49: #{tpu_custom_call.1} parent=47 // pred_check
          %p372 = pneg %p85
        $region50: #{tpu_custom_call.1} parent=47 // pred_check_branch
          %374 = sbr.rel (%p372) target = $region52
        $region51: #{tpu_custom_call.1} parent=47 // pred_region
          %s375 = smul.u32 2, %s23
          %p376 = scmp.lt.s32.totalorder %s375, 3
          %s377 = scalar_select %p376, %s375, 3
          %s378 = smul.addr %s377, 8
          %s379 = scalar_lea.vmem %s2, %s378
          %s380 = smul.u32 2, %s23
        $region52: #{tpu_custom_call.1} parent=47 // pred_fallthru
          _
        // Predicated region
        $region53: #{tpu_custom_call.1} parent=47 // pred_check
          %p381 = pneg %p111
        $region54: #{tpu_custom_call.1} parent=47 // pred_check_branch
          %383 = sbr.rel (%p381) target = $region56
        $region55: #{tpu_custom_call.1} parent=47 // pred_region
          %s384 = smul.u32 2, %s23
          %p385 = scmp.lt.s32.totalorder %s384, 3
          %s386 = scalar_select %p385, %s384, 3
          %s387 = smul.addr %s386, 8
          %s388 = scalar_lea.vmem %s3, %s387
          %s389 = smul.u32 2, %s23
        $region56: #{tpu_custom_call.1} parent=47 // pred_fallthru
          _
      $region48: #{tpu_custom_call.1} parent=5 // pred_fallthru
        _
      %p390 = scmp.le.s32.totalorder 1, %s23
      %p391 = scmp.lt.s32.totalorder %s23, 3
      %p392 = pnand %p390, %p391
      %p393 = pneg %p392
      // Predicated region
      $region57: #{tpu_custom_call.1} parent=5 // pred_check
        _
      $region58: #{tpu_custom_call.1} parent=5 // pred_check_branch
        %395 = sbr.rel (%p392) target = $region60
      $region59: #{tpu_custom_call.1} parent=5 // pred_region
        %s396 = ssub.s32 %s23, 1
        // Predicated region
        $region61: #{tpu_custom_call.1} parent=59 // pred_check
          %p397 = pneg %p44
        $region62: #{tpu_custom_call.1} parent=59 // pred_check_branch
          %399 = sbr.rel (%p397) target = $region64
        $region63: #{tpu_custom_call.1} parent=59 // pred_region
          %400 = dma.done [#allocation3], 3072
        $region64: #{tpu_custom_call.1} parent=59 // pred_fallthru
          _
        // Predicated region
        $region65: #{tpu_custom_call.1} parent=59 // pred_check
          %p401 = pneg %p138
        $region66: #{tpu_custom_call.1} parent=59 // pred_check_branch
          %403 = sbr.rel (%p401) target = $region68
        $region67: #{tpu_custom_call.1} parent=59 // pred_region
          %404 = dma.done [#allocation6], 4096
        $region68: #{tpu_custom_call.1} parent=59 // pred_fallthru
          _
        // Predicated region
        $region69: #{tpu_custom_call.1} parent=59 // pred_check
          %p405 = pneg %p159
        $region70: #{tpu_custom_call.1} parent=59 // pred_check_branch
          %407 = sbr.rel (%p405) target = $region72
        $region71: #{tpu_custom_call.1} parent=59 // pred_region
          %408 = dma.done [#allocation6], 8192
        $region72: #{tpu_custom_call.1} parent=59 // pred_fallthru
          _
        // Predicated region
        $region73: #{tpu_custom_call.1} parent=59 // pred_check
          %p409 = pneg %p180
        $region74: #{tpu_custom_call.1} parent=59 // pred_check_branch
          %411 = sbr.rel (%p409) target = $region76
        $region75: #{tpu_custom_call.1} parent=59 // pred_region
          %412 = dma.done [#allocation9], 2048
        $region76: #{tpu_custom_call.1} parent=59 // pred_fallthru
          _
        // Predicated region
        $region77: #{tpu_custom_call.1} parent=59 // pred_check
          %p413 = pneg %p201
        $region78: #{tpu_custom_call.1} parent=59 // pred_check_branch
          %415 = sbr.rel (%p413) target = $region80
        $region79: #{tpu_custom_call.1} parent=59 // pred_region
          %416 = dma.done [#allocation9], 1024
        $region80: #{tpu_custom_call.1} parent=59 // pred_fallthru
          _
        // Predicated region
        $region81: #{tpu_custom_call.1} parent=59 // pred_check
          %p417 = pneg %p222
        $region82: #{tpu_custom_call.1} parent=59 // pred_check_branch
          %419 = sbr.rel (%p417) target = $region84
        $region83: #{tpu_custom_call.1} parent=59 // pred_region
          %420 = dma.done [#allocation12], 1024
        $region84: #{tpu_custom_call.1} parent=59 // pred_fallthru
          _
        %p421 = pneg %p44
        %p422 = pneg %p41
        %p423 = pneg %p65
        %p424 = pneg %p62
        %s425 = smul.u32 2, %s28
        %p426 = scmp.lt.s32.totalorder %s425, 3
        %s427 = scalar_select %p426, %s425, 3
        %s428 = smul.addr %s427, 8
        %s429 = scalar_lea.vmem %s2, %s428
        %p430 = pneg %p91
        %p431 = pneg %p88
        %s432 = smul.u32 2, %s28
        %p433 = scmp.lt.s32.totalorder %s432, 3
        %s434 = scalar_select %p433, %s432, 3
        %s435 = smul.addr %s434, 8
        %s436 = scalar_lea.vmem %s3, %s435
        %p437 = pneg %p117
        %p438 = pneg %p114
        %p439 = pneg %p138
        %p440 = pneg %p135
        %p441 = pneg %p159
        %p442 = pneg %p156
        %p443 = pneg %p180
        %p444 = pneg %p177
        %p445 = pneg %p201
        %p446 = pneg %p198
        %p447 = pneg %p222
        %p448 = pneg %p219
        %p449 = pneg %p243
        %p450 = pneg %p240
        %p451 = pneg %p269
        %p452 = pneg %p266
        %s453 = sand.u32 %s256, 1
        %s454 = scalar_lea.sflag [#allocation4], %s453
        %s455 = sand.u32 %s256, 1
        %s456 = smul.addr %s455, 16
        %s457 = scalar_lea.vmem [#allocation13], %s456
        %s458 = smul.u32 2, %s28
        %p459 = scmp.lt.s32.totalorder %s458, 3
        %s460 = scalar_select %p459, %s458, 3
        %s461 = smul.addr %s460, 8
        %s462 = scalar_lea.vmem %s2, %s461
        %s463 = smul.u32 2, %s28
        %s464 = smul.u32 2, %s28
        %p465 = scmp.lt.s32.totalorder %s464, 3
        %s466 = scalar_select %p465, %s464, 3
        %s467 = smul.addr %s466, 8
        %s468 = scalar_lea.vmem %s3, %s467
        %s469 = smul.u32 2, %s28
        %s470 = smul.u32 2, %s28
        %v472 = vld [vmem:[%s1] sm:$0xf]
        %v473 = vld [vmem:[%s1 + $0x4] sm:$0xf]
        %v474 = vld [vmem:[%s1 + $0x8] sm:$0xf]
        %v475 = vld [vmem:[%s1 + $0xc] sm:$0xf]
        %v476 = vld [vmem:[%s1 + $0x10] sm:$0xf]
        %v477 = vld [vmem:[%s1 + $0x14] sm:$0xf]
        %v478 = vld [vmem:[%s1 + $0x18] sm:$0xf]
        %v479 = vld [vmem:[%s1 + $0x1c] sm:$0xf]
        %v480 = vld [vmem:[%s1 + $0x20] sm:$0xf]
        %v481 = vld [vmem:[%s1 + $0x24] sm:$0xf]
        %v482 = vld [vmem:[%s1 + $0x28] sm:$0xf]
        %v483 = vld [vmem:[%s1 + $0x2c] sm:$0xf]
        %v484 = vld [vmem:[%s1 + $0x30] sm:$0xf]
        %v485 = vld [vmem:[%s1 + $0x34] sm:$0xf]
        %v486 = vld [vmem:[%s1 + $0x38] sm:$0xf]
        %v487 = vld [vmem:[%s1 + $0x3c] sm:$0xf]
        %v488 = vld [vmem:[#allocation5] sm:$0xf]
        %v489 = vld [vmem:[#allocation5 + $0x4] sm:$0xf]
        %v490 = vld [vmem:[#allocation5 + $0x8] sm:$0xf]
        %v491 = vld [vmem:[#allocation5 + $0xc] sm:$0xf]
        %v492 = vld [vmem:[#allocation5 + $0x10] sm:$0xf]
        %v493 = vld [vmem:[#allocation5 + $0x14] sm:$0xf]
        %v494 = vld [vmem:[#allocation5 + $0x18] sm:$0xf]
        %v495 = vld [vmem:[#allocation5 + $0x1c] sm:$0xf]
        %v496 = vld [vmem:[#allocation5 + $0x20] sm:$0xf]
        %v497 = vld [vmem:[#allocation5 + $0x24] sm:$0xf]
        %v498 = vld [vmem:[#allocation5 + $0x28] sm:$0xf]
        %v499 = vld [vmem:[#allocation5 + $0x2c] sm:$0xf]
        %v500 = vld [vmem:[#allocation5 + $0x30] sm:$0xf]
        %v501 = vld [vmem:[#allocation5 + $0x34] sm:$0xf]
        %v502 = vld [vmem:[#allocation5 + $0x38] sm:$0xf]
        %v503 = vld [vmem:[#allocation5 + $0x3c] sm:$0xf]
        %v504 = vld [vmem:[#allocation2] sm:$0xf]
        %v505 = vld [vmem:[#allocation2 + $0x4] sm:$0xf]
        %v506 = vld [vmem:[#allocation2 + $0x8] sm:$0xf]
        %v507 = vld [vmem:[#allocation2 + $0xc] sm:$0xf]
        %v508 = vld [vmem:[#allocation2 + $0x10] sm:$0xf]
        %v509 = vld [vmem:[#allocation2 + $0x14] sm:$0xf]
        %v510 = vld [vmem:[#allocation2 + $0x18] sm:$0xf]
        %v511 = vld [vmem:[#allocation2 + $0x1c] sm:$0xf]
        %v512 = vld [vmem:[#allocation2 + $0x20] sm:$0xf]
        %v513 = vld [vmem:[#allocation2 + $0x24] sm:$0xf]
        %v514 = vld [vmem:[#allocation2 + $0x28] sm:$0xf]
        %v515 = vld [vmem:[#allocation2 + $0x2c] sm:$0xf]
        %v516 = vld [vmem:[#allocation2 + $0x30] sm:$0xf]
        %v517 = vld [vmem:[#allocation2 + $0x34] sm:$0xf]
        %v518 = vld [vmem:[#allocation2 + $0x38] sm:$0xf]
        %v519 = vld [vmem:[#allocation2 + $0x3c] sm:$0xf]
        %v536 = vunpack.c.l.b16 %v504
        %v537 = vunpack.c.l.b16 %v505
        %v538 = vunpack.c.l.b16 %v506
        %v539 = vunpack.c.l.b16 %v507
        %v540 = vunpack.c.l.b16 %v508
        %v541 = vunpack.c.l.b16 %v509
        %v542 = vunpack.c.l.b16 %v510
        %v543 = vunpack.c.l.b16 %v511
        %v544 = vunpack.c.l.b16 %v512
        %v545 = vunpack.c.l.b16 %v513
        %v546 = vunpack.c.l.b16 %v514
        %v547 = vunpack.c.l.b16 %v515
        %v548 = vunpack.c.l.b16 %v516
        %v549 = vunpack.c.l.b16 %v517
        %v550 = vunpack.c.l.b16 %v518
        %v551 = vunpack.c.l.b16 %v519
        %v552 = vpack.c.b16 %v537, %v536
        %v553 = vpack.c.b16 %v539, %v538
        %v554 = vpack.c.b16 %v541, %v540
        %v555 = vpack.c.b16 %v543, %v542
        %v556 = vpack.c.b16 %v545, %v544
        %v557 = vpack.c.b16 %v547, %v546
        %v558 = vpack.c.b16 %v549, %v548
        %v559 = vpack.c.b16 %v551, %v550
        %v584 = vunpack.c.l.b16 %v472
        %v585 = vunpack.c.l.b16 %v473
        %v586 = vunpack.c.l.b16 %v474
        %v587 = vunpack.c.l.b16 %v475
        %v588 = vunpack.c.l.b16 %v476
        %v589 = vunpack.c.l.b16 %v477
        %v590 = vunpack.c.l.b16 %v478
        %v591 = vunpack.c.l.b16 %v479
        %v592 = vunpack.c.l.b16 %v480
        %v593 = vunpack.c.l.b16 %v481
        %v594 = vunpack.c.l.b16 %v482
        %v595 = vunpack.c.l.b16 %v483
        %v596 = vunpack.c.l.b16 %v484
        %v597 = vunpack.c.l.b16 %v485
        %v598 = vunpack.c.l.b16 %v486
        %v599 = vunpack.c.l.b16 %v487
        %v600 = vpack.c.b16 %v585, %v584
        %v601 = vpack.c.b16 %v587, %v586
        %v602 = vpack.c.b16 %v589, %v588
        %v603 = vpack.c.b16 %v591, %v590
        %v604 = vpack.c.b16 %v593, %v592
        %v605 = vpack.c.b16 %v595, %v594
        %v606 = vpack.c.b16 %v597, %v596
        %v607 = vpack.c.b16 %v599, %v598
        %616 = vmatprep.subr.bf16.mxu0 0
        %617 = vmatpush1.bf16.msra.mxu0 %v600
        %618 = vmatprep.subr.bf16.mxu0 0
        %619 = vmatpush1.bf16.msra.mxu0 %v601
        %620 = vmatprep.subr.bf16.mxu0 0
        %621 = vmatpush1.bf16.msra.mxu0 %v602
        %622 = vmatprep.subr.bf16.mxu0 0
        %623 = vmatpush1.bf16.msra.mxu0 %v603
        %624 = vmatprep.subr.bf16.mxu0 0
        %625 = vmatpush1.bf16.msra.mxu0 %v604
        %626 = vmatprep.subr.bf16.mxu0 0
        %627 = vmatpush1.bf16.msra.mxu0 %v605
        %628 = vmatprep.subr.bf16.mxu0 0
        %629 = vmatpush1.bf16.msra.mxu0 %v606
        %630 = vmatprep.subr.bf16.mxu0 0
        %631 = vmatpush1.bf16.msra.mxu0 %v607
        %632 = vmatprep.subr.bf16.mxu0 0
        %633 = vmatpush1.bf16.msra.mxu0 0
        %634 = vmatprep.subr.bf16.mxu0 0
        %635 = vmatpush1.bf16.msra.mxu0 0
        %636 = vmatprep.subr.bf16.mxu0 0
        %637 = vmatpush1.bf16.msra.mxu0 0
        %638 = vmatprep.subr.bf16.mxu0 0
        %639 = vmatpush1.bf16.msra.mxu0 0
        %640 = vmatprep.subr.bf16.mxu0 0
        %641 = vmatpush1.bf16.msra.mxu0 0
        %642 = vmatprep.subr.bf16.mxu0 0
        %643 = vmatpush1.bf16.msra.mxu0 0
        %644 = vmatprep.subr.bf16.mxu0 0
        %645 = vmatpush1.bf16.msra.mxu0 0
        %646 = vmatprep.subr.bf16.mxu0 0
        %647 = vmatpush1.bf16.msra.mxu0 0
        %648 = vmatprep.mubr.bf16.mxu0 0
        %649 = vmatmul.mubr.bf16.gmra.mrb[0].mxu0 %v552
        %v650 = vpop.f32.mrb[0].mxu0
        %v651 = vadd.f32 0.0, %v650
        %v652 = vpop.f32.mrb[0].mxu0
        %v653 = vpop.f32.mrb[0].mxu0
        %v654 = vadd.f32 0.0, %v653
        %v655 = vpop.f32.mrb[0].mxu0
        %656 = vmatprep.mubr.bf16.mxu0 0
        %657 = vmatmul.mubr.bf16.gmra.mrb[0].mxu0 %v553
        %v658 = vpop.f32.mrb[0].mxu0
        %v659 = vadd.f32 0.0, %v658
        %v660 = vpop.f32.mrb[0].mxu0
        %v661 = vpop.f32.mrb[0].mxu0
        %v662 = vadd.f32 0.0, %v661
        %v663 = vpop.f32.mrb[0].mxu0
        %664 = vmatprep.mubr.bf16.mxu0 0
        %665 = vmatmul.mubr.bf16.gmra.mrb[0].mxu0 %v554
        %v666 = vpop.f32.mrb[0].mxu0
        %v667 = vadd.f32 0.0, %v666
        %v668 = vpop.f32.mrb[0].mxu0
        %v669 = vpop.f32.mrb[0].mxu0
        %v670 = vadd.f32 0.0, %v669
        %v671 = vpop.f32.mrb[0].mxu0
        %672 = vmatprep.mubr.bf16.mxu0 0
        %673 = vmatmul.mubr.bf16.gmra.mrb[0].mxu0 %v555
        %v674 = vpop.f32.mrb[0].mxu0
        %v675 = vadd.f32 0.0, %v674
        %v676 = vpop.f32.mrb[0].mxu0
        %v677 = vpop.f32.mrb[0].mxu0
        %v678 = vadd.f32 0.0, %v677
        %v679 = vpop.f32.mrb[0].mxu0
        %680 = vmatprep.mubr.bf16.mxu0 0
        %681 = vmatmul.mubr.bf16.gmra.mrb[0].mxu0 %v556
        %v682 = vpop.f32.mrb[0].mxu0
        %v683 = vadd.f32 0.0, %v682
        %v684 = vpop.f32.mrb[0].mxu0
        %v685 = vpop.f32.mrb[0].mxu0
        %v686 = vadd.f32 0.0, %v685
        %v687 = vpop.f32.mrb[0].mxu0
        %688 = vmatprep.mubr.bf16.mxu0 0
        %689 = vmatmul.mubr.bf16.gmra.mrb[0].mxu0 %v557
        %v690 = vpop.f32.mrb[0].mxu0
        %v691 = vadd.f32 0.0, %v690
        %v692 = vpop.f32.mrb[0].mxu0
        %v693 = vpop.f32.mrb[0].mxu0
        %v694 = vadd.f32 0.0, %v693
        %v695 = vpop.f32.mrb[0].mxu0
        %696 = vmatprep.mubr.bf16.mxu0 0
        %697 = vmatmul.mubr.bf16.gmra.mrb[0].mxu0 %v558
        %v698 = vpop.f32.mrb[0].mxu0
        %v699 = vadd.f32 0.0, %v698
        %v700 = vpop.f32.mrb[0].mxu0
        %v701 = vpop.f32.mrb[0].mxu0
        %v702 = vadd.f32 0.0, %v701
        %v703 = vpop.f32.mrb[0].mxu0
        %704 = vmatprep.mubr.bf16.mxu0 0
        %705 = vmatmul.mubr.bf16.gmra.mrb[0].mxu0 %v559
        %v706 = vpop.f32.mrb[0].mxu0
        %v707 = vadd.f32 0.0, %v706
        %v708 = vpop.f32.mrb[0].mxu0
        %v709 = vpop.f32.mrb[0].mxu0
        %v710 = vadd.f32 0.0, %v709
        %v711 = vpop.f32.mrb[0].mxu0
        %712 = vdwg.mxu0
        %v713 = vpack.c.bf16 %v654, %v651
        %v714 = vpack.c.bf16 %v662, %v659
        %v715 = vpack.c.bf16 %v670, %v667
        %v716 = vpack.c.bf16 %v678, %v675
        %v717 = vpack.c.bf16 %v686, %v683
        %v718 = vpack.c.bf16 %v694, %v691
        %v719 = vpack.c.bf16 %v702, %v699
        %v720 = vpack.c.bf16 %v710, %v707
        %v721 = vld [vmem:[#allocation5 + $0x40] sm:$0xf]
        %v722 = vld [vmem:[#allocation5 + $0x44] sm:$0xf]
        %v723 = vld [vmem:[#allocation5 + $0x48] sm:$0xf]
        %v724 = vld [vmem:[#allocation5 + $0x4c] sm:$0xf]
        %v725 = vld [vmem:[#allocation5 + $0x50] sm:$0xf]
        %v726 = vld [vmem:[#allocation5 + $0x54] sm:$0xf]
        %v727 = vld [vmem:[#allocation5 + $0x58] sm:$0xf]
        %v728 = vld [vmem:[#allocation5 + $0x5c] sm:$0xf]
        %v729 = vld [vmem:[#allocation5 + $0x60] sm:$0xf]
        %v730 = vld [vmem:[#allocation5 + $0x64] sm:$0xf]
        %v731 = vld [vmem:[#allocation5 + $0x68] sm:$0xf]
        %v732 = vld [vmem:[#allocation5 + $0x6c] sm:$0xf]
        %v733 = vld [vmem:[#allocation5 + $0x70] sm:$0xf]
        %v734 = vld [vmem:[#allocation5 + $0x74] sm:$0xf]
        %v735 = vld [vmem:[#allocation5 + $0x78] sm:$0xf]
        %v736 = vld [vmem:[#allocation5 + $0x7c] sm:$0xf]
        %v753 = vunpack.c.l.b16 %v721
        %v754 = vunpack.c.l.b16 %v722
        %v755 = vunpack.c.l.b16 %v723
        %v756 = vunpack.c.l.b16 %v724
        %v757 = vunpack.c.l.b16 %v725
        %v758 = vunpack.c.l.b16 %v726
        %v759 = vunpack.c.l.b16 %v727
        %v760 = vunpack.c.l.b16 %v728
        %v761 = vunpack.c.l.b16 %v729
        %v762 = vunpack.c.l.b16 %v730
        %v763 = vunpack.c.l.b16 %v731
        %v764 = vunpack.c.l.b16 %v732
        %v765 = vunpack.c.l.b16 %v733
        %v766 = vunpack.c.l.b16 %v734
        %v767 = vunpack.c.l.b16 %v735
        %v768 = vunpack.c.l.b16 %v736
        %v769 = vpack.c.b16 %v754, %v753
        %v770 = vpack.c.b16 %v756, %v755
        %v771 = vpack.c.b16 %v758, %v757
        %v772 = vpack.c.b16 %v760, %v759
        %v773 = vpack.c.b16 %v762, %v761
        %v774 = vpack.c.b16 %v764, %v763
        %v775 = vpack.c.b16 %v766, %v765
        %v776 = vpack.c.b16 %v768, %v767
        %785 = vmatprep.subr.bf16.mxu0 0
        %786 = vmatpush1.bf16.msra.mxu0 %v769
        %787 = vmatprep.subr.bf16.mxu0 0
        %788 = vmatpush1.bf16.msra.mxu0 %v770
        %789 = vmatprep.subr.bf16.mxu0 0
        %790 = vmatpush1.bf16.msra.mxu0 %v771
        %791 = vmatprep.subr.bf16.mxu0 0
        %792 = vmatpush1.bf16.msra.mxu0 %v772
        %793 = vmatprep.subr.bf16.mxu0 0
        %794 = vmatpush1.bf16.msra.mxu0 %v773
        %795 = vmatprep.subr.bf16.mxu0 0
        %796 = vmatpush1.bf16.msra.mxu0 %v774
        %797 = vmatprep.subr.bf16.mxu0 0
        %798 = vmatpush1.bf16.msra.mxu0 %v775
        %799 = vmatprep.subr.bf16.mxu0 0
        %800 = vmatpush1.bf16.msra.mxu0 %v776
        %801 = vmatprep.subr.bf16.mxu0 0
        %802 = vmatpush1.bf16.msra.mxu0 0
        %803 = vmatprep.subr.bf16.mxu0 0
        %804 = vmatpush1.bf16.msra.mxu0 0
        %805 = vmatprep.subr.bf16.mxu0 0
        %806 = vmatpush1.bf16.msra.mxu0 0
        %807 = vmatprep.subr.bf16.mxu0 0
        %808 = vmatpush1.bf16.msra.mxu0 0
        %809 = vmatprep.subr.bf16.mxu0 0
        %810 = vmatpush1.bf16.msra.mxu0 0
        %811 = vmatprep.subr.bf16.mxu0 0
        %812 = vmatpush1.bf16.msra.mxu0 0
        %813 = vmatprep.subr.bf16.mxu0 0
        %814 = vmatpush1.bf16.msra.mxu0 0
        %815 = vmatprep.subr.bf16.mxu0 0
        %816 = vmatpush1.bf16.msra.mxu0 0
        %817 = vmatprep.mubr.bf16.mxu0 0
        %818 = vmatmul.mubr.bf16.gmra.mrb[0].mxu0 %v713
        %v819 = vpop.f32.mrb[0].mxu0
        %v820 = vadd.f32 0.0, %v819
        %v821 = vpop.f32.mrb[0].mxu0
        %v822 = vpop.f32.mrb[0].mxu0
        %v823 = vadd.f32 0.0, %v822
        %v824 = vpop.f32.mrb[0].mxu0
        %825 = vmatprep.mubr.bf16.mxu0 0
        %826 = vmatmul.mubr.bf16.gmra.mrb[0].mxu0 %v714
        %v827 = vpop.f32.mrb[0].mxu0
        %v828 = vadd.f32 0.0, %v827
        %v829 = vpop.f32.mrb[0].mxu0
        %v830 = vpop.f32.mrb[0].mxu0
        %v831 = vadd.f32 0.0, %v830
        %v832 = vpop.f32.mrb[0].mxu0
        %833 = vmatprep.mubr.bf16.mxu0 0
        %834 = vmatmul.mubr.bf16.gmra.mrb[0].mxu0 %v715
        %v835 = vpop.f32.mrb[0].mxu0
        %v836 = vadd.f32 0.0, %v835
        %v837 = vpop.f32.mrb[0].mxu0
        %v838 = vpop.f32.mrb[0].mxu0
        %v839 = vadd.f32 0.0, %v838
        %v840 = vpop.f32.mrb[0].mxu0
        %841 = vmatprep.mubr.bf16.mxu0 0
        %842 = vmatmul.mubr.bf16.gmra.mrb[0].mxu0 %v716
        %v843 = vpop.f32.mrb[0].mxu0
        %v844 = vadd.f32 0.0, %v843
        %v845 = vpop.f32.mrb[0].mxu0
        %v846 = vpop.f32.mrb[0].mxu0
        %v847 = vadd.f32 0.0, %v846
        %v848 = vpop.f32.mrb[0].mxu0
        %849 = vmatprep.mubr.bf16.mxu0 0
        %850 = vmatmul.mubr.bf16.gmra.mrb[0].mxu0 %v717
        %v851 = vpop.f32.mrb[0].mxu0
        %v852 = vadd.f32 0.0, %v851
        %v853 = vpop.f32.mrb[0].mxu0
        %v854 = vpop.f32.mrb[0].mxu0
        %v855 = vadd.f32 0.0, %v854
        %v856 = vpop.f32.mrb[0].mxu0
        %857 = vmatprep.mubr.bf16.mxu0 0
        %858 = vmatmul.mubr.bf16.gmra.mrb[0].mxu0 %v718
        %v859 = vpop.f32.mrb[0].mxu0
        %v860 = vadd.f32 0.0, %v859
        %v861 = vpop.f32.mrb[0].mxu0
        %v862 = vpop.f32.mrb[0].mxu0
        %v863 = vadd.f32 0.0, %v862
        %v864 = vpop.f32.mrb[0].mxu0
        %865 = vmatprep.mubr.bf16.mxu0 0
        %866 = vmatmul.mubr.bf16.gmra.mrb[0].mxu0 %v719
        %v867 = vpop.f32.mrb[0].mxu0
        %v868 = vadd.f32 0.0, %v867
        %v869 = vpop.f32.mrb[0].mxu0
        %v870 = vpop.f32.mrb[0].mxu0
        %v871 = vadd.f32 0.0, %v870
        %v872 = vpop.f32.mrb[0].mxu0
        %873 = vmatprep.mubr.bf16.mxu0 0
        %874 = vmatmul.mubr.bf16.gmra.mrb[0].mxu0 %v720
        %v875 = vpop.f32.mrb[0].mxu0
        %v876 = vadd.f32 0.0, %v875
        %v877 = vpop.f32.mrb[0].mxu0
        %v878 = vpop.f32.mrb[0].mxu0
        %v879 = vadd.f32 0.0, %v878
        %v880 = vpop.f32.mrb[0].mxu0
        %881 = vdwg.mxu0
        %v898 = vunpack.c.l.b16 %v488
        %v899 = vunpack.c.l.b16 %v489
        %v900 = vunpack.c.l.b16 %v490
        %v901 = vunpack.c.l.b16 %v491
        %v902 = vunpack.c.l.b16 %v492
        %v903 = vunpack.c.l.b16 %v493
        %v904 = vunpack.c.l.b16 %v494
        %v905 = vunpack.c.l.b16 %v495
        %v906 = vunpack.c.l.b16 %v496
        %v907 = vunpack.c.l.b16 %v497
        %v908 = vunpack.c.l.b16 %v498
        %v909 = vunpack.c.l.b16 %v499
        %v910 = vunpack.c.l.b16 %v500
        %v911 = vunpack.c.l.b16 %v501
        %v912 = vunpack.c.l.b16 %v502
        %v913 = vunpack.c.l.b16 %v503
        %v914 = vpack.c.b16 %v899, %v898
        %v915 = vpack.c.b16 %v901, %v900
        %v916 = vpack.c.b16 %v903, %v902
        %v917 = vpack.c.b16 %v905, %v904
        %v918 = vpack.c.b16 %v907, %v906
        %v919 = vpack.c.b16 %v909, %v908
        %v920 = vpack.c.b16 %v911, %v910
        %v921 = vpack.c.b16 %v913, %v912
        %930 = vmatprep.subr.bf16.mxu0 0
        %931 = vmatpush1.bf16.msra.mxu0 %v914
        %932 = vmatprep.subr.bf16.mxu0 0
        %933 = vmatpush1.bf16.msra.mxu0 %v915
        %934 = vmatprep.subr.bf16.mxu0 0
        %935 = vmatpush1.bf16.msra.mxu0 %v916
        %936 = vmatprep.subr.bf16.mxu0 0
        %937 = vmatpush1.bf16.msra.mxu0 %v917
        %938 = vmatprep.subr.bf16.mxu0 0
        %939 = vmatpush1.bf16.msra.mxu0 %v918
        %940 = vmatprep.subr.bf16.mxu0 0
        %941 = vmatpush1.bf16.msra.mxu0 %v919
        %942 = vmatprep.subr.bf16.mxu0 0
        %943 = vmatpush1.bf16.msra.mxu0 %v920
        %944 = vmatprep.subr.bf16.mxu0 0
        %945 = vmatpush1.bf16.msra.mxu0 %v921
        %946 = vmatprep.subr.bf16.mxu0 0
        %947 = vmatpush1.bf16.msra.mxu0 0
        %948 = vmatprep.subr.bf16.mxu0 0
        %949 = vmatpush1.bf16.msra.mxu0 0
        %950 = vmatprep.subr.bf16.mxu0 0
        %951 = vmatpush1.bf16.msra.mxu0 0
        %952 = vmatprep.subr.bf16.mxu0 0
        %953 = vmatpush1.bf16.msra.mxu0 0
        %954 = vmatprep.subr.bf16.mxu0 0
        %955 = vmatpush1.bf16.msra.mxu0 0
        %956 = vmatprep.subr.bf16.mxu0 0
        %957 = vmatpush1.bf16.msra.mxu0 0
        %958 = vmatprep.subr.bf16.mxu0 0
        %959 = vmatpush1.bf16.msra.mxu0 0
        %960 = vmatprep.subr.bf16.mxu0 0
        %961 = vmatpush1.bf16.msra.mxu0 0
        %962 = vmatprep.mubr.bf16.mxu0 0
        %963 = vmatmul.mubr.bf16.gmra.mrb[0].mxu0 %v600
        %v964 = vpop.f32.mrb[0].mxu0
        %v965 = vadd.f32 %v820, %v964
        %v966 = vpop.f32.mrb[0].mxu0
        %v967 = vpop.f32.mrb[0].mxu0
        %v968 = vadd.f32 %v823, %v967
        %v969 = vpop.f32.mrb[0].mxu0
        %970 = vmatprep.mubr.bf16.mxu0 0
        %971 = vmatmul.mubr.bf16.gmra.mrb[0].mxu0 %v601
        %v972 = vpop.f32.mrb[0].mxu0
        %v973 = vadd.f32 %v828, %v972
        %v974 = vpop.f32.mrb[0].mxu0
        %v975 = vpop.f32.mrb[0].mxu0
        %v976 = vadd.f32 %v831, %v975
        %v977 = vpop.f32.mrb[0].mxu0
        %978 = vmatprep.mubr.bf16.mxu0 0
        %979 = vmatmul.mubr.bf16.gmra.mrb[0].mxu0 %v602
        %v980 = vpop.f32.mrb[0].mxu0
        %v981 = vadd.f32 %v836, %v980
        %v982 = vpop.f32.mrb[0].mxu0
        %v983 = vpop.f32.mrb[0].mxu0
        %v984 = vadd.f32 %v839, %v983
        %v985 = vpop.f32.mrb[0].mxu0
        %986 = vmatprep.mubr.bf16.mxu0 0
        %987 = vmatmul.mubr.bf16.gmra.mrb[0].mxu0 %v603
        %v988 = vpop.f32.mrb[0].mxu0
        %v989 = vadd.f32 %v844, %v988
        %v990 = vpop.f32.mrb[0].mxu0
        %v991 = vpop.f32.mrb[0].mxu0
        %v992 = vadd.f32 %v847, %v991
        %v993 = vpop.f32.mrb[0].mxu0
        %994 = vmatprep.mubr.bf16.mxu0 0
        %995 = vmatmul.mubr.bf16.gmra.mrb[0].mxu0 %v604
        %v996 = vpop.f32.mrb[0].mxu0
        %v997 = vadd.f32 %v852, %v996
        %v998 = vpop.f32.mrb[0].mxu0
        %v999 = vpop.f32.mrb[0].mxu0
        %v1000 = vadd.f32 %v855, %v999
        %v1001 = vpop.f32.mrb[0].mxu0
        %1002 = vmatprep.mubr.bf16.mxu0 0
        %1003 = vmatmul.mubr.bf16.gmra.mrb[0].mxu0 %v605
        %v1004 = vpop.f32.mrb[0].mxu0
        %v1005 = vadd.f32 %v860, %v1004
        %v1006 = vpop.f32.mrb[0].mxu0
        %v1007 = vpop.f32.mrb[0].mxu0
        %v1008 = vadd.f32 %v863, %v1007
        %v1009 = vpop.f32.mrb[0].mxu0
        %1010 = vmatprep.mubr.bf16.mxu0 0
        %1011 = vmatmul.mubr.bf16.gmra.mrb[0].mxu0 %v606
        %v1012 = vpop.f32.mrb[0].mxu0
        %v1013 = vadd.f32 %v868, %v1012
        %v1014 = vpop.f32.mrb[0].mxu0
        %v1015 = vpop.f32.mrb[0].mxu0
        %v1016 = vadd.f32 %v871, %v1015
        %v1017 = vpop.f32.mrb[0].mxu0
        %1018 = vmatprep.mubr.bf16.mxu0 0
        %1019 = vmatmul.mubr.bf16.gmra.mrb[0].mxu0 %v607
        %v1020 = vpop.f32.mrb[0].mxu0
        %v1021 = vadd.f32 %v876, %v1020
        %v1022 = vpop.f32.mrb[0].mxu0
        %v1023 = vpop.f32.mrb[0].mxu0
        %v1024 = vadd.f32 %v879, %v1023
        %v1025 = vpop.f32.mrb[0].mxu0
        %1026 = vdwg.mxu0
        %s1027 = scalar_lea.vmem [#allocation2], 64
        %v1028 = vld [vmem:[%s1027] sm:$0xf]
        %v1029 = vld [vmem:[%s1027 + $0x4] sm:$0xf]
        %v1030 = vld [vmem:[%s1027 + $0x8] sm:$0xf]
        %v1031 = vld [vmem:[%s1027 + $0xc] sm:$0xf]
        %v1032 = vld [vmem:[%s1027 + $0x10] sm:$0xf]
        %v1033 = vld [vmem:[%s1027 + $0x14] sm:$0xf]
        %v1034 = vld [vmem:[%s1027 + $0x18] sm:$0xf]
        %v1035 = vld [vmem:[%s1027 + $0x1c] sm:$0xf]
        %v1036 = vld [vmem:[%s1027 + $0x20] sm:$0xf]
        %v1037 = vld [vmem:[%s1027 + $0x24] sm:$0xf]
        %v1038 = vld [vmem:[%s1027 + $0x28] sm:$0xf]
        %v1039 = vld [vmem:[%s1027 + $0x2c] sm:$0xf]
        %v1040 = vld [vmem:[%s1027 + $0x30] sm:$0xf]
        %v1041 = vld [vmem:[%s1027 + $0x34] sm:$0xf]
        %v1042 = vld [vmem:[%s1027 + $0x38] sm:$0xf]
        %v1043 = vld [vmem:[%s1027 + $0x3c] sm:$0xf]
        %v1060 = vunpack.c.l.b16 %v1028
        %v1061 = vunpack.c.l.b16 %v1029
        %v1062 = vunpack.c.l.b16 %v1030
        %v1063 = vunpack.c.l.b16 %v1031
        %v1064 = vunpack.c.l.b16 %v1032
        %v1065 = vunpack.c.l.b16 %v1033
        %v1066 = vunpack.c.l.b16 %v1034
        %v1067 = vunpack.c.l.b16 %v1035
        %v1068 = vunpack.c.l.b16 %v1036
        %v1069 = vunpack.c.l.b16 %v1037
        %v1070 = vunpack.c.l.b16 %v1038
        %v1071 = vunpack.c.l.b16 %v1039
        %v1072 = vunpack.c.l.b16 %v1040
        %v1073 = vunpack.c.l.b16 %v1041
        %v1074 = vunpack.c.l.b16 %v1042
        %v1075 = vunpack.c.l.b16 %v1043
        %v1076 = vpack.c.b16 %v1061, %v1060
        %v1077 = vpack.c.b16 %v1063, %v1062
        %v1078 = vpack.c.b16 %v1065, %v1064
        %v1079 = vpack.c.b16 %v1067, %v1066
        %v1080 = vpack.c.b16 %v1069, %v1068
        %v1081 = vpack.c.b16 %v1071, %v1070
        %v1082 = vpack.c.b16 %v1073, %v1072
        %v1083 = vpack.c.b16 %v1075, %v1074
        %1092 = vmatprep.subr.bf16.mxu0 0
        %1093 = vmatpush1.bf16.msra.mxu0 %v600
        %1094 = vmatprep.subr.bf16.mxu0 0
        %1095 = vmatpush1.bf16.msra.mxu0 %v601
        %1096 = vmatprep.subr.bf16.mxu0 0
        %1097 = vmatpush1.bf16.msra.mxu0 %v602
        %1098 = vmatprep.subr.bf16.mxu0 0
        %1099 = vmatpush1.bf16.msra.mxu0 %v603
        %1100 = vmatprep.subr.bf16.mxu0 0
        %1101 = vmatpush1.bf16.msra.mxu0 %v604
        %1102 = vmatprep.subr.bf16.mxu0 0
        %1103 = vmatpush1.bf16.msra.mxu0 %v605
        %1104 = vmatprep.subr.bf16.mxu0 0
        %1105 = vmatpush1.bf16.msra.mxu0 %v606
        %1106 = vmatprep.subr.bf16.mxu0 0
        %1107 = vmatpush1.bf16.msra.mxu0 %v607
        %1108 = vmatprep.subr.bf16.mxu0 0
        %1109 = vmatpush1.bf16.msra.mxu0 0
        %1110 = vmatprep.subr.bf16.mxu0 0
        %1111 = vmatpush1.bf16.msra.mxu0 0
        %1112 = vmatprep.subr.bf16.mxu0 0
        %1113 = vmatpush1.bf16.msra.mxu0 0
        %1114 = vmatprep.subr.bf16.mxu0 0
        %1115 = vmatpush1.bf16.msra.mxu0 0
        %1116 = vmatprep.subr.bf16.mxu0 0
        %1117 = vmatpush1.bf16.msra.mxu0 0
        %1118 = vmatprep.subr.bf16.mxu0 0
        %1119 = vmatpush1.bf16.msra.mxu0 0
        %1120 = vmatprep.subr.bf16.mxu0 0
        %1121 = vmatpush1.bf16.msra.mxu0 0
        %1122 = vmatprep.subr.bf16.mxu0 0
        %1123 = vmatpush1.bf16.msra.mxu0 0
        %1124 = vmatprep.mubr.bf16.mxu0 0
        %1125 = vmatmul.mubr.bf16.gmra.mrb[0].mxu0 %v1076
        %v1126 = vpop.f32.mrb[0].mxu0
        %v1127 = vadd.f32 0.0, %v1126
        %v1128 = vpop.f32.mrb[0].mxu0
        %v1129 = vpop.f32.mrb[0].mxu0
        %v1130 = vadd.f32 0.0, %v1129
        %v1131 = vpop.f32.mrb[0].mxu0
        %1132 = vmatprep.mubr.bf16.mxu0 0
        %1133 = vmatmul.mubr.bf16.gmra.mrb[0].mxu0 %v1077
        %v1134 = vpop.f32.mrb[0].mxu0
        %v1135 = vadd.f32 0.0, %v1134
        %v1136 = vpop.f32.mrb[0].mxu0
        %v1137 = vpop.f32.mrb[0].mxu0
        %v1138 = vadd.f32 0.0, %v1137
        %v1139 = vpop.f32.mrb[0].mxu0
        %1140 = vmatprep.mubr.bf16.mxu0 0
        %1141 = vmatmul.mubr.bf16.gmra.mrb[0].mxu0 %v1078
        %v1142 = vpop.f32.mrb[0].mxu0
        %v1143 = vadd.f32 0.0, %v1142
        %v1144 = vpop.f32.mrb[0].mxu0
        %v1145 = vpop.f32.mrb[0].mxu0
        %v1146 = vadd.f32 0.0, %v1145
        %v1147 = vpop.f32.mrb[0].mxu0
        %1148 = vmatprep.mubr.bf16.mxu0 0
        %1149 = vmatmul.mubr.bf16.gmra.mrb[0].mxu0 %v1079
        %v1150 = vpop.f32.mrb[0].mxu0
        %v1151 = vadd.f32 0.0, %v1150
        %v1152 = vpop.f32.mrb[0].mxu0
        %v1153 = vpop.f32.mrb[0].mxu0
        %v1154 = vadd.f32 0.0, %v1153
        %v1155 = vpop.f32.mrb[0].mxu0
        %1156 = vmatprep.mubr.bf16.mxu0 0
        %1157 = vmatmul.mubr.bf16.gmra.mrb[0].mxu0 %v1080
        %v1158 = vpop.f32.mrb[0].mxu0
        %v1159 = vadd.f32 0.0, %v1158
        %v1160 = vpop.f32.mrb[0].mxu0
        %v1161 = vpop.f32.mrb[0].mxu0
        %v1162 = vadd.f32 0.0, %v1161
        %v1163 = vpop.f32.mrb[0].mxu0
        %1164 = vmatprep.mubr.bf16.mxu0 0
        %1165 = vmatmul.mubr.bf16.gmra.mrb[0].mxu0 %v1081
        %v1166 = vpop.f32.mrb[0].mxu0
        %v1167 = vadd.f32 0.0, %v1166
        %v1168 = vpop.f32.mrb[0].mxu0
        %v1169 = vpop.f32.mrb[0].mxu0
        %v1170 = vadd.f32 0.0, %v1169
        %v1171 = vpop.f32.mrb[0].mxu0
        %1172 = vmatprep.mubr.bf16.mxu0 0
        %1173 = vmatmul.mubr.bf16.gmra.mrb[0].mxu0 %v1082
        %v1174 = vpop.f32.mrb[0].mxu0
        %v1175 = vadd.f32 0.0, %v1174
        %v1176 = vpop.f32.mrb[0].mxu0
        %v1177 = vpop.f32.mrb[0].mxu0
        %v1178 = vadd.f32 0.0, %v1177
        %v1179 = vpop.f32.mrb[0].mxu0
        %1180 = vmatprep.mubr.bf16.mxu0 0
        %1181 = vmatmul.mubr.bf16.gmra.mrb[0].mxu0 %v1083
        %v1182 = vpop.f32.mrb[0].mxu0
        %v1183 = vadd.f32 0.0, %v1182
        %v1184 = vpop.f32.mrb[0].mxu0
        %v1185 = vpop.f32.mrb[0].mxu0
        %v1186 = vadd.f32 0.0, %v1185
        %v1187 = vpop.f32.mrb[0].mxu0
        %1188 = vdwg.mxu0
        %v1189 = vpack.c.bf16 %v1130, %v1127
        %v1190 = vpack.c.bf16 %v1138, %v1135
        %v1191 = vpack.c.bf16 %v1146, %v1143
        %v1192 = vpack.c.bf16 %v1154, %v1151
        %v1193 = vpack.c.bf16 %v1162, %v1159
        %v1194 = vpack.c.bf16 %v1170, %v1167
        %v1195 = vpack.c.bf16 %v1178, %v1175
        %v1196 = vpack.c.bf16 %v1186, %v1183
        %v1197 = vld [vmem:[#allocation5 + $0x80] sm:$0xf]
        %v1198 = vld [vmem:[#allocation5 + $0x84] sm:$0xf]
        %v1199 = vld [vmem:[#allocation5 + $0x88] sm:$0xf]
        %v1200 = vld [vmem:[#allocation5 + $0x8c] sm:$0xf]
        %v1201 = vld [vmem:[#allocation5 + $0x90] sm:$0xf]
        %v1202 = vld [vmem:[#allocation5 + $0x94] sm:$0xf]
        %v1203 = vld [vmem:[#allocation5 + $0x98] sm:$0xf]
        %v1204 = vld [vmem:[#allocation5 + $0x9c] sm:$0xf]
        %v1205 = vld [vmem:[#allocation5 + $0xa0] sm:$0xf]
        %v1206 = vld [vmem:[#allocation5 + $0xa4] sm:$0xf]
        %v1207 = vld [vmem:[#allocation5 + $0xa8] sm:$0xf]
        %v1208 = vld [vmem:[#allocation5 + $0xac] sm:$0xf]
        %v1209 = vld [vmem:[#allocation5 + $0xb0] sm:$0xf]
        %v1210 = vld [vmem:[#allocation5 + $0xb4] sm:$0xf]
        %v1211 = vld [vmem:[#allocation5 + $0xb8] sm:$0xf]
        %v1212 = vld [vmem:[#allocation5 + $0xbc] sm:$0xf]
        %v1229 = vunpack.c.l.b16 %v1197
        %v1230 = vunpack.c.l.b16 %v1198
        %v1231 = vunpack.c.l.b16 %v1199
        %v1232 = vunpack.c.l.b16 %v1200
        %v1233 = vunpack.c.l.b16 %v1201
        %v1234 = vunpack.c.l.b16 %v1202
        %v1235 = vunpack.c.l.b16 %v1203
        %v1236 = vunpack.c.l.b16 %v1204
        %v1237 = vunpack.c.l.b16 %v1205
        %v1238 = vunpack.c.l.b16 %v1206
        %v1239 = vunpack.c.l.b16 %v1207
        %v1240 = vunpack.c.l.b16 %v1208
        %v1241 = vunpack.c.l.b16 %v1209
        %v1242 = vunpack.c.l.b16 %v1210
        %v1243 = vunpack.c.l.b16 %v1211
        %v1244 = vunpack.c.l.b16 %v1212
        %v1245 = vpack.c.b16 %v1230, %v1229
        %v1246 = vpack.c.b16 %v1232, %v1231
        %v1247 = vpack.c.b16 %v1234, %v1233
        %v1248 = vpack.c.b16 %v1236, %v1235
        %v1249 = vpack.c.b16 %v1238, %v1237
        %v1250 = vpack.c.b16 %v1240, %v1239
        %v1251 = vpack.c.b16 %v1242, %v1241
        %v1252 = vpack.c.b16 %v1244, %v1243
        %1261 = vmatprep.subr.bf16.mxu0 0
        %1262 = vmatpush1.bf16.msra.mxu0 %v1245
        %1263 = vmatprep.subr.bf16.mxu0 0
        %1264 = vmatpush1.bf16.msra.mxu0 %v1246
        %1265 = vmatprep.subr.bf16.mxu0 0
        %1266 = vmatpush1.bf16.msra.mxu0 %v1247
        %1267 = vmatprep.subr.bf16.mxu0 0
        %1268 = vmatpush1.bf16.msra.mxu0 %v1248
        %1269 = vmatprep.subr.bf16.mxu0 0
        %1270 = vmatpush1.bf16.msra.mxu0 %v1249
        %1271 = vmatprep.subr.bf16.mxu0 0
        %1272 = vmatpush1.bf16.msra.mxu0 %v1250
        %1273 = vmatprep.subr.bf16.mxu0 0
        %1274 = vmatpush1.bf16.msra.mxu0 %v1251
        %1275 = vmatprep.subr.bf16.mxu0 0
        %1276 = vmatpush1.bf16.msra.mxu0 %v1252
        %1277 = vmatprep.subr.bf16.mxu0 0
        %1278 = vmatpush1.bf16.msra.mxu0 0
        %1279 = vmatprep.subr.bf16.mxu0 0
        %1280 = vmatpush1.bf16.msra.mxu0 0
        %1281 = vmatprep.subr.bf16.mxu0 0
        %1282 = vmatpush1.bf16.msra.mxu0 0
        %1283 = vmatprep.subr.bf16.mxu0 0
        %1284 = vmatpush1.bf16.msra.mxu0 0
        %1285 = vmatprep.subr.bf16.mxu0 0
        %1286 = vmatpush1.bf16.msra.mxu0 0
        %1287 = vmatprep.subr.bf16.mxu0 0
        %1288 = vmatpush1.bf16.msra.mxu0 0
        %1289 = vmatprep.subr.bf16.mxu0 0
        %1290 = vmatpush1.bf16.msra.mxu0 0
        %1291 = vmatprep.subr.bf16.mxu0 0
        %1292 = vmatpush1.bf16.msra.mxu0 0
        %1293 = vmatprep.mubr.bf16.mxu0 0
        %1294 = vmatmul.mubr.bf16.gmra.mrb[0].mxu0 %v1189
        %v1295 = vpop.f32.mrb[0].mxu0
        %v1296 = vadd.f32 0.0, %v1295
        %v1297 = vpop.f32.mrb[0].mxu0
        %v1298 = vpop.f32.mrb[0].mxu0
        %v1299 = vadd.f32 0.0, %v1298
        %v1300 = vpop.f32.mrb[0].mxu0
        %1301 = vmatprep.mubr.bf16.mxu0 0
        %1302 = vmatmul.mubr.bf16.gmra.mrb[0].mxu0 %v1190
        %v1303 = vpop.f32.mrb[0].mxu0
        %v1304 = vadd.f32 0.0, %v1303
        %v1305 = vpop.f32.mrb[0].mxu0
        %v1306 = vpop.f32.mrb[0].mxu0
        %v1307 = vadd.f32 0.0, %v1306
        %v1308 = vpop.f32.mrb[0].mxu0
        %1309 = vmatprep.mubr.bf16.mxu0 0
        %1310 = vmatmul.mubr.bf16.gmra.mrb[0].mxu0 %v1191
        %v1311 = vpop.f32.mrb[0].mxu0
        %v1312 = vadd.f32 0.0, %v1311
        %v1313 = vpop.f32.mrb[0].mxu0
        %v1314 = vpop.f32.mrb[0].mxu0
        %v1315 = vadd.f32 0.0, %v1314
        %v1316 = vpop.f32.mrb[0].mxu0
        %1317 = vmatprep.mubr.bf16.mxu0 0
        %1318 = vmatmul.mubr.bf16.gmra.mrb[0].mxu0 %v1192
        %v1319 = vpop.f32.mrb[0].mxu0
        %v1320 = vadd.f32 0.0, %v1319
        %v1321 = vpop.f32.mrb[0].mxu0
        %v1322 = vpop.f32.mrb[0].mxu0
        %v1323 = vadd.f32 0.0, %v1322
        %v1324 = vpop.f32.mrb[0].mxu0
        %1325 = vmatprep.mubr.bf16.mxu0 0
        %1326 = vmatmul.mubr.bf16.gmra.mrb[0].mxu0 %v1193
        %v1327 = vpop.f32.mrb[0].mxu0
        %v1328 = vadd.f32 0.0, %v1327
        %v1329 = vpop.f32.mrb[0].mxu0
        %v1330 = vpop.f32.mrb[0].mxu0
        %v1331 = vadd.f32 0.0, %v1330
        %v1332 = vpop.f32.mrb[0].mxu0
        %1333 = vmatprep.mubr.bf16.mxu0 0
        %1334 = vmatmul.mubr.bf16.gmra.mrb[0].mxu0 %v1194
        %v1335 = vpop.f32.mrb[0].mxu0
        %v1336 = vadd.f32 0.0, %v1335
        %v1337 = vpop.f32.mrb[0].mxu0
        %v1338 = vpop.f32.mrb[0].mxu0
        %v1339 = vadd.f32 0.0, %v1338
        %v1340 = vpop.f32.mrb[0].mxu0
        %1341 = vmatprep.mubr.bf16.mxu0 0
        %1342 = vmatmul.mubr.bf16.gmra.mrb[0].mxu0 %v1195
        %v1343 = vpop.f32.mrb[0].mxu0
        %v1344 = vadd.f32 0.0, %v1343
        %v1345 = vpop.f32.mrb[0].mxu0
        %v1346 = vpop.f32.mrb[0].mxu0
        %v1347 = vadd.f32 0.0, %v1346
        %v1348 = vpop.f32.mrb[0].mxu0
        %1349 = vmatprep.mubr.bf16.mxu0 0
        %1350 = vmatmul.mubr.bf16.gmra.mrb[0].mxu0 %v1196
        %v1351 = vpop.f32.mrb[0].mxu0
        %v1352 = vadd.f32 0.0, %v1351
        %v1353 = vpop.f32.mrb[0].mxu0
        %v1354 = vpop.f32.mrb[0].mxu0
        %v1355 = vadd.f32 0.0, %v1354
        %v1356 = vpop.f32.mrb[0].mxu0
        %1357 = vdwg.mxu0
        %v1358 = vadd.f32 %v965, %v1296
        %v1359 = vadd.f32 %v968, %v1299
        %v1360 = vadd.f32 %v973, %v1304
        %v1361 = vadd.f32 %v976, %v1307
        %v1362 = vadd.f32 %v981, %v1312
        %v1363 = vadd.f32 %v984, %v1315
        %v1364 = vadd.f32 %v989, %v1320
        %v1365 = vadd.f32 %v992, %v1323
        %v1366 = vadd.f32 %v997, %v1328
        %v1367 = vadd.f32 %v1000, %v1331
        %v1368 = vadd.f32 %v1005, %v1336
        %v1369 = vadd.f32 %v1008, %v1339
        %v1370 = vadd.f32 %v1013, %v1344
        %v1371 = vadd.f32 %v1016, %v1347
        %v1372 = vadd.f32 %v1021, %v1352
        %v1373 = vadd.f32 %v1024, %v1355
        %s1374 = scalar_lea.vmem [#allocation2], 128
        %v1375 = vld [vmem:[%s1374] sm:$0xf]
        %v1376 = vld [vmem:[%s1374 + $0x4] sm:$0xf]
        %v1377 = vld [vmem:[%s1374 + $0x8] sm:$0xf]
        %v1378 = vld [vmem:[%s1374 + $0xc] sm:$0xf]
        %v1379 = vld [vmem:[%s1374 + $0x10] sm:$0xf]
        %v1380 = vld [vmem:[%s1374 + $0x14] sm:$0xf]
        %v1381 = vld [vmem:[%s1374 + $0x18] sm:$0xf]
        %v1382 = vld [vmem:[%s1374 + $0x1c] sm:$0xf]
        %v1383 = vld [vmem:[%s1374 + $0x20] sm:$0xf]
        %v1384 = vld [vmem:[%s1374 + $0x24] sm:$0xf]
        %v1385 = vld [vmem:[%s1374 + $0x28] sm:$0xf]
        %v1386 = vld [vmem:[%s1374 + $0x2c] sm:$0xf]
        %v1387 = vld [vmem:[%s1374 + $0x30] sm:$0xf]
        %v1388 = vld [vmem:[%s1374 + $0x34] sm:$0xf]
        %v1389 = vld [vmem:[%s1374 + $0x38] sm:$0xf]
        %v1390 = vld [vmem:[%s1374 + $0x3c] sm:$0xf]
        %v1407 = vunpack.c.l.b16 %v1375
        %v1408 = vunpack.c.l.b16 %v1376
        %v1409 = vunpack.c.l.b16 %v1377
        %v1410 = vunpack.c.l.b16 %v1378
        %v1411 = vunpack.c.l.b16 %v1379
        %v1412 = vunpack.c.l.b16 %v1380
        %v1413 = vunpack.c.l.b16 %v1381
        %v1414 = vunpack.c.l.b16 %v1382
        %v1415 = vunpack.c.l.b16 %v1383
        %v1416 = vunpack.c.l.b16 %v1384
        %v1417 = vunpack.c.l.b16 %v1385
        %v1418 = vunpack.c.l.b16 %v1386
        %v1419 = vunpack.c.l.b16 %v1387
        %v1420 = vunpack.c.l.b16 %v1388
        %v1421 = vunpack.c.l.b16 %v1389
        %v1422 = vunpack.c.l.b16 %v1390
        %v1423 = vpack.c.b16 %v1408, %v1407
        %v1424 = vpack.c.b16 %v1410, %v1409
        %v1425 = vpack.c.b16 %v1412, %v1411
        %v1426 = vpack.c.b16 %v1414, %v1413
        %v1427 = vpack.c.b16 %v1416, %v1415
        %v1428 = vpack.c.b16 %v1418, %v1417
        %v1429 = vpack.c.b16 %v1420, %v1419
        %v1430 = vpack.c.b16 %v1422, %v1421
        %1439 = vmatprep.subr.bf16.mxu0 0
        %1440 = vmatpush1.bf16.msra.mxu0 %v600
        %1441 = vmatprep.subr.bf16.mxu0 0
        %1442 = vmatpush1.bf16.msra.mxu0 %v601
        %1443 = vmatprep.subr.bf16.mxu0 0
        %1444 = vmatpush1.bf16.msra.mxu0 %v602
        %1445 = vmatprep.subr.bf16.mxu0 0
        %1446 = vmatpush1.bf16.msra.mxu0 %v603
        %1447 = vmatprep.subr.bf16.mxu0 0
        %1448 = vmatpush1.bf16.msra.mxu0 %v604
        %1449 = vmatprep.subr.bf16.mxu0 0
        %1450 = vmatpush1.bf16.msra.mxu0 %v605
        %1451 = vmatprep.subr.bf16.mxu0 0
        %1452 = vmatpush1.bf16.msra.mxu0 %v606
        %1453 = vmatprep.subr.bf16.mxu0 0
        %1454 = vmatpush1.bf16.msra.mxu0 %v607
        %1455 = vmatprep.subr.bf16.mxu0 0
        %1456 = vmatpush1.bf16.msra.mxu0 0
        %1457 = vmatprep.subr.bf16.mxu0 0
        %1458 = vmatpush1.bf16.msra.mxu0 0
        %1459 = vmatprep.subr.bf16.mxu0 0
        %1460 = vmatpush1.bf16.msra.mxu0 0
        %1461 = vmatprep.subr.bf16.mxu0 0
        %1462 = vmatpush1.bf16.msra.mxu0 0
        %1463 = vmatprep.subr.bf16.mxu0 0
        %1464 = vmatpush1.bf16.msra.mxu0 0
        %1465 = vmatprep.subr.bf16.mxu0 0
        %1466 = vmatpush1.bf16.msra.mxu0 0
        %1467 = vmatprep.subr.bf16.mxu0 0
        %1468 = vmatpush1.bf16.msra.mxu0 0
        %1469 = vmatprep.subr.bf16.mxu0 0
        %1470 = vmatpush1.bf16.msra.mxu0 0
        %1471 = vmatprep.mubr.bf16.mxu0 0
        %1472 = vmatmul.mubr.bf16.gmra.mrb[0].mxu0 %v1423
        %v1473 = vpop.f32.mrb[0].mxu0
        %v1474 = vadd.f32 0.0, %v1473
        %v1475 = vpop.f32.mrb[0].mxu0
        %v1476 = vpop.f32.mrb[0].mxu0
        %v1477 = vadd.f32 0.0, %v1476
        %v1478 = vpop.f32.mrb[0].mxu0
        %1479 = vmatprep.mubr.bf16.mxu0 0
        %1480 = vmatmul.mubr.bf16.gmra.mrb[0].mxu0 %v1424
        %v1481 = vpop.f32.mrb[0].mxu0
        %v1482 = vadd.f32 0.0, %v1481
        %v1483 = vpop.f32.mrb[0].mxu0
        %v1484 = vpop.f32.mrb[0].mxu0
        %v1485 = vadd.f32 0.0, %v1484
        %v1486 = vpop.f32.mrb[0].mxu0
        %1487 = vmatprep.mubr.bf16.mxu0 0
        %1488 = vmatmul.mubr.bf16.gmra.mrb[0].mxu0 %v1425
        %v1489 = vpop.f32.mrb[0].mxu0
        %v1490 = vadd.f32 0.0, %v1489
        %v1491 = vpop.f32.mrb[0].mxu0
        %v1492 = vpop.f32.mrb[0].mxu0
        %v1493 = vadd.f32 0.0, %v1492
        %v1494 = vpop.f32.mrb[0].mxu0
        %1495 = vmatprep.mubr.bf16.mxu0 0
        %1496 = vmatmul.mubr.bf16.gmra.mrb[0].mxu0 %v1426
        %v1497 = vpop.f32.mrb[0].mxu0
        %v1498 = vadd.f32 0.0, %v1497
        %v1499 = vpop.f32.mrb[0].mxu0
        %v1500 = vpop.f32.mrb[0].mxu0
        %v1501 = vadd.f32 0.0, %v1500
        %v1502 = vpop.f32.mrb[0].mxu0
        %1503 = vmatprep.mubr.bf16.mxu0 0
        %1504 = vmatmul.mubr.bf16.gmra.mrb[0].mxu0 %v1427
        %v1505 = vpop.f32.mrb[0].mxu0
        %v1506 = vadd.f32 0.0, %v1505
        %v1507 = vpop.f32.mrb[0].mxu0
        %v1508 = vpop.f32.mrb[0].mxu0
        %v1509 = vadd.f32 0.0, %v1508
        %v1510 = vpop.f32.mrb[0].mxu0
        %1511 = vmatprep.mubr.bf16.mxu0 0
        %1512 = vmatmul.mubr.bf16.gmra.mrb[0].mxu0 %v1428
        %v1513 = vpop.f32.mrb[0].mxu0
        %v1514 = vadd.f32 0.0, %v1513
        %v1515 = vpop.f32.mrb[0].mxu0
        %v1516 = vpop.f32.mrb[0].mxu0
        %v1517 = vadd.f32 0.0, %v1516
        %v1518 = vpop.f32.mrb[0].mxu0
        %1519 = vmatprep.mubr.bf16.mxu0 0
        %1520 = vmatmul.mubr.bf16.gmra.mrb[0].mxu0 %v1429
        %v1521 = vpop.f32.mrb[0].mxu0
        %v1522 = vadd.f32 0.0, %v1521
        %v1523 = vpop.f32.mrb[0].mxu0
        %v1524 = vpop.f32.mrb[0].mxu0
        %v1525 = vadd.f32 0.0, %v1524
        %v1526 = vpop.f32.mrb[0].mxu0
        %1527 = vmatprep.mubr.bf16.mxu0 0
        %1528 = vmatmul.mubr.bf16.gmra.mrb[0].mxu0 %v1430
        %v1529 = vpop.f32.mrb[0].mxu0
        %v1530 = vadd.f32 0.0, %v1529
        %v1531 = vpop.f32.mrb[0].mxu0
        %v1532 = vpop.f32.mrb[0].mxu0
        %v1533 = vadd.f32 0.0, %v1532
        %v1534 = vpop.f32.mrb[0].mxu0
        %1535 = vdwg.mxu0
        %v1536 = vpack.c.bf16 %v1477, %v1474
        %v1537 = vpack.c.bf16 %v1485, %v1482
        %v1538 = vpack.c.bf16 %v1493, %v1490
        %v1539 = vpack.c.bf16 %v1501, %v1498
        %v1540 = vpack.c.bf16 %v1509, %v1506
        %v1541 = vpack.c.bf16 %v1517, %v1514
        %v1542 = vpack.c.bf16 %v1525, %v1522
        %v1543 = vpack.c.bf16 %v1533, %v1530
        %v1544 = vld [vmem:[#allocation5 + $0xc0] sm:$0xf]
        %v1545 = vld [vmem:[#allocation5 + $0xc4] sm:$0xf]
        %v1546 = vld [vmem:[#allocation5 + $0xc8] sm:$0xf]
        %v1547 = vld [vmem:[#allocation5 + $0xcc] sm:$0xf]
        %v1548 = vld [vmem:[#allocation5 + $0xd0] sm:$0xf]
        %v1549 = vld [vmem:[#allocation5 + $0xd4] sm:$0xf]
        %v1550 = vld [vmem:[#allocation5 + $0xd8] sm:$0xf]
        %v1551 = vld [vmem:[#allocation5 + $0xdc] sm:$0xf]
        %v1552 = vld [vmem:[#allocation5 + $0xe0] sm:$0xf]
        %v1553 = vld [vmem:[#allocation5 + $0xe4] sm:$0xf]
        %v1554 = vld [vmem:[#allocation5 + $0xe8] sm:$0xf]
        %v1555 = vld [vmem:[#allocation5 + $0xec] sm:$0xf]
        %v1556 = vld [vmem:[#allocation5 + $0xf0] sm:$0xf]
        %v1557 = vld [vmem:[#allocation5 + $0xf4] sm:$0xf]
        %v1558 = vld [vmem:[#allocation5 + $0xf8] sm:$0xf]
        %v1559 = vld [vmem:[#allocation5 + $0xfc] sm:$0xf]
        %v1576 = vunpack.c.l.b16 %v1544
        %v1577 = vunpack.c.l.b16 %v1545
        %v1578 = vunpack.c.l.b16 %v1546
        %v1579 = vunpack.c.l.b16 %v1547
        %v1580 = vunpack.c.l.b16 %v1548
        %v1581 = vunpack.c.l.b16 %v1549
        %v1582 = vunpack.c.l.b16 %v1550
        %v1583 = vunpack.c.l.b16 %v1551
        %v1584 = vunpack.c.l.b16 %v1552
        %v1585 = vunpack.c.l.b16 %v1553
        %v1586 = vunpack.c.l.b16 %v1554
        %v1587 = vunpack.c.l.b16 %v1555
        %v1588 = vunpack.c.l.b16 %v1556
        %v1589 = vunpack.c.l.b16 %v1557
        %v1590 = vunpack.c.l.b16 %v1558
        %v1591 = vunpack.c.l.b16 %v1559
        %v1592 = vpack.c.b16 %v1577, %v1576
        %v1593 = vpack.c.b16 %v1579, %v1578
        %v1594 = vpack.c.b16 %v1581, %v1580
        %v1595 = vpack.c.b16 %v1583, %v1582
        %v1596 = vpack.c.b16 %v1585, %v1584
        %v1597 = vpack.c.b16 %v1587, %v1586
        %v1598 = vpack.c.b16 %v1589, %v1588
        %v1599 = vpack.c.b16 %v1591, %v1590
        %1608 = vmatprep.subr.bf16.mxu0 0
        %1609 = vmatpush1.bf16.msra.mxu0 %v1592
        %1610 = vmatprep.subr.bf16.mxu0 0
        %1611 = vmatpush1.bf16.msra.mxu0 %v1593
        %1612 = vmatprep.subr.bf16.mxu0 0
        %1613 = vmatpush1.bf16.msra.mxu0 %v1594
        %1614 = vmatprep.subr.bf16.mxu0 0
        %1615 = vmatpush1.bf16.msra.mxu0 %v1595
        %1616 = vmatprep.subr.bf16.mxu0 0
        %1617 = vmatpush1.bf16.msra.mxu0 %v1596
        %1618 = vmatprep.subr.bf16.mxu0 0
        %1619 = vmatpush1.bf16.msra.mxu0 %v1597
        %1620 = vmatprep.subr.bf16.mxu0 0
        %1621 = vmatpush1.bf16.msra.mxu0 %v1598
        %1622 = vmatprep.subr.bf16.mxu0 0
        %1623 = vmatpush1.bf16.msra.mxu0 %v1599
        %1624 = vmatprep.subr.bf16.mxu0 0
        %1625 = vmatpush1.bf16.msra.mxu0 0
        %1626 = vmatprep.subr.bf16.mxu0 0
        %1627 = vmatpush1.bf16.msra.mxu0 0
        %1628 = vmatprep.subr.bf16.mxu0 0
        %1629 = vmatpush1.bf16.msra.mxu0 0
        %1630 = vmatprep.subr.bf16.mxu0 0
        %1631 = vmatpush1.bf16.msra.mxu0 0
        %1632 = vmatprep.subr.bf16.mxu0 0
        %1633 = vmatpush1.bf16.msra.mxu0 0
        %1634 = vmatprep.subr.bf16.mxu0 0
        %1635 = vmatpush1.bf16.msra.mxu0 0
        %1636 = vmatprep.subr.bf16.mxu0 0
        %1637 = vmatpush1.bf16.msra.mxu0 0
        %1638 = vmatprep.subr.bf16.mxu0 0
        %1639 = vmatpush1.bf16.msra.mxu0 0
        %1640 = vmatprep.mubr.bf16.mxu0 0
        %1641 = vmatmul.mubr.bf16.gmra.mrb[0].mxu0 %v1536
        %v1642 = vpop.f32.mrb[0].mxu0
        %v1643 = vadd.f32 0.0, %v1642
        %v1644 = vpop.f32.mrb[0].mxu0
        %v1645 = vpop.f32.mrb[0].mxu0
        %v1646 = vadd.f32 0.0, %v1645
        %v1647 = vpop.f32.mrb[0].mxu0
        %1648 = vmatprep.mubr.bf16.mxu0 0
        %1649 = vmatmul.mubr.bf16.gmra.mrb[0].mxu0 %v1537
        %v1650 = vpop.f32.mrb[0].mxu0
        %v1651 = vadd.f32 0.0, %v1650
        %v1652 = vpop.f32.mrb[0].mxu0
        %v1653 = vpop.f32.mrb[0].mxu0
        %v1654 = vadd.f32 0.0, %v1653
        %v1655 = vpop.f32.mrb[0].mxu0
        %1656 = vmatprep.mubr.bf16.mxu0 0
        %1657 = vmatmul.mubr.bf16.gmra.mrb[0].mxu0 %v1538
        %v1658 = vpop.f32.mrb[0].mxu0
        %v1659 = vadd.f32 0.0, %v1658
        %v1660 = vpop.f32.mrb[0].mxu0
        %v1661 = vpop.f32.mrb[0].mxu0
        %v1662 = vadd.f32 0.0, %v1661
        %v1663 = vpop.f32.mrb[0].mxu0
        %1664 = vmatprep.mubr.bf16.mxu0 0
        %1665 = vmatmul.mubr.bf16.gmra.mrb[0].mxu0 %v1539
        %v1666 = vpop.f32.mrb[0].mxu0
        %v1667 = vadd.f32 0.0, %v1666
        %v1668 = vpop.f32.mrb[0].mxu0
        %v1669 = vpop.f32.mrb[0].mxu0
        %v1670 = vadd.f32 0.0, %v1669
        %v1671 = vpop.f32.mrb[0].mxu0
        %1672 = vmatprep.mubr.bf16.mxu0 0
        %1673 = vmatmul.mubr.bf16.gmra.mrb[0].mxu0 %v1540
        %v1674 = vpop.f32.mrb[0].mxu0
        %v1675 = vadd.f32 0.0, %v1674
        %v1676 = vpop.f32.mrb[0].mxu0
        %v1677 = vpop.f32.mrb[0].mxu0
        %v1678 = vadd.f32 0.0, %v1677
        %v1679 = vpop.f32.mrb[0].mxu0
        %1680 = vmatprep.mubr.bf16.mxu0 0
        %1681 = vmatmul.mubr.bf16.gmra.mrb[0].mxu0 %v1541
        %v1682 = vpop.f32.mrb[0].mxu0
        %v1683 = vadd.f32 0.0, %v1682
        %v1684 = vpop.f32.mrb[0].mxu0
        %v1685 = vpop.f32.mrb[0].mxu0
        %v1686 = vadd.f32 0.0, %v1685
        %v1687 = vpop.f32.mrb[0].mxu0
        %1688 = vmatprep.mubr.bf16.mxu0 0
        %1689 = vmatmul.mubr.bf16.gmra.mrb[0].mxu0 %v1542
        %v1690 = vpop.f32.mrb[0].mxu0
        %v1691 = vadd.f32 0.0, %v1690
        %v1692 = vpop.f32.mrb[0].mxu0
        %v1693 = vpop.f32.mrb[0].mxu0
        %v1694 = vadd.f32 0.0, %v1693
        %v1695 = vpop.f32.mrb[0].mxu0
        %1696 = vmatprep.mubr.bf16.mxu0 0
        %1697 = vmatmul.mubr.bf16.gmra.mrb[0].mxu0 %v1543
        %v1698 = vpop.f32.mrb[0].mxu0
        %v1699 = vadd.f32 0.0, %v1698
        %v1700 = vpop.f32.mrb[0].mxu0
        %v1701 = vpop.f32.mrb[0].mxu0
        %v1702 = vadd.f32 0.0, %v1701
        %v1703 = vpop.f32.mrb[0].mxu0
        %1704 = vdwg.mxu0
        %v1705 = vadd.f32 %v1358, %v1643
        %v1706 = vadd.f32 %v1359, %v1646
        %v1707 = vadd.f32 %v1360, %v1651
        %v1708 = vadd.f32 %v1361, %v1654
        %v1709 = vadd.f32 %v1362, %v1659
        %v1710 = vadd.f32 %v1363, %v1662
        %v1711 = vadd.f32 %v1364, %v1667
        %v1712 = vadd.f32 %v1365, %v1670
        %v1713 = vadd.f32 %v1366, %v1675
        %v1714 = vadd.f32 %v1367, %v1678
        %v1715 = vadd.f32 %v1368, %v1683
        %v1716 = vadd.f32 %v1369, %v1686
        %v1717 = vadd.f32 %v1370, %v1691
        %v1718 = vadd.f32 %v1371, %v1694
        %v1719 = vadd.f32 %v1372, %v1699
        %v1720 = vadd.f32 %v1373, %v1702
        %v1721 = vld [vmem:[%s9] sm:$0x1]
        %v1722 = vlaneseq
        %v1723 = vshrl.u32 %v1722, 7
        %v1724 = vsub.s32 0, %v1723
        %v1725 = vrot.slane %v1721, %v1724
        %v1726 = vadd.f32 %v1705, %v1725
        %v1727 = vadd.f32 %v1706, %v1725
        %v1728 = vadd.f32 %v1707, %v1725
        %v1729 = vadd.f32 %v1708, %v1725
        %v1730 = vadd.f32 %v1709, %v1725
        %v1731 = vadd.f32 %v1710, %v1725
        %v1732 = vadd.f32 %v1711, %v1725
        %v1733 = vadd.f32 %v1712, %v1725
        %v1734 = vadd.f32 %v1713, %v1725
        %v1735 = vadd.f32 %v1714, %v1725
        %v1736 = vadd.f32 %v1715, %v1725
        %v1737 = vadd.f32 %v1716, %v1725
        %v1738 = vadd.f32 %v1717, %v1725
        %v1739 = vadd.f32 %v1718, %v1725
        %v1740 = vadd.f32 %v1719, %v1725
        %v1741 = vadd.f32 %v1720, %v1725
        %v1742 = vmax.f32 %v1726, 0.0
        %v1743 = vmax.f32 %v1727, 0.0
        %v1744 = vmax.f32 %v1728, 0.0
        %v1745 = vmax.f32 %v1729, 0.0
        %v1746 = vmax.f32 %v1730, 0.0
        %v1747 = vmax.f32 %v1731, 0.0
        %v1748 = vmax.f32 %v1732, 0.0
        %v1749 = vmax.f32 %v1733, 0.0
        %v1750 = vmax.f32 %v1734, 0.0
        %v1751 = vmax.f32 %v1735, 0.0
        %v1752 = vmax.f32 %v1736, 0.0
        %v1753 = vmax.f32 %v1737, 0.0
        %v1754 = vmax.f32 %v1738, 0.0
        %v1755 = vmax.f32 %v1739, 0.0
        %v1756 = vmax.f32 %v1740, 0.0
        %v1757 = vmax.f32 %v1741, 0.0
        %v1758 = vpack.c.bf16 %v1743, %v1742
        %v1759 = vpack.c.bf16 %v1745, %v1744
        %v1760 = vpack.c.bf16 %v1747, %v1746
        %v1761 = vpack.c.bf16 %v1749, %v1748
        %v1762 = vpack.c.bf16 %v1751, %v1750
        %v1763 = vpack.c.bf16 %v1753, %v1752
        %v1764 = vpack.c.bf16 %v1755, %v1754
        %v1765 = vpack.c.bf16 %v1757, %v1756
        %v1766 = vld [vmem:[#allocation7] sm:$0xf]
        %v1767 = vld [vmem:[#allocation7 + $0x4] sm:$0xf]
        %v1768 = vld [vmem:[#allocation7 + $0x8] sm:$0xf]
        %v1769 = vld [vmem:[#allocation7 + $0xc] sm:$0xf]
        %v1770 = vld [vmem:[#allocation7 + $0x10] sm:$0xf]
        %v1771 = vld [vmem:[#allocation7 + $0x14] sm:$0xf]
        %v1772 = vld [vmem:[#allocation7 + $0x18] sm:$0xf]
        %v1773 = vld [vmem:[#allocation7 + $0x1c] sm:$0xf]
        %v1774 = vld [vmem:[#allocation7 + $0x20] sm:$0xf]
        %v1775 = vld [vmem:[#allocation7 + $0x24] sm:$0xf]
        %v1776 = vld [vmem:[#allocation7 + $0x28] sm:$0xf]
        %v1777 = vld [vmem:[#allocation7 + $0x2c] sm:$0xf]
        %v1778 = vld [vmem:[#allocation7 + $0x30] sm:$0xf]
        %v1779 = vld [vmem:[#allocation7 + $0x34] sm:$0xf]
        %v1780 = vld [vmem:[#allocation7 + $0x38] sm:$0xf]
        %v1781 = vld [vmem:[#allocation7 + $0x3c] sm:$0xf]
        %1782 = vmatprep.subr.bf16.mxu0 0
        %1783 = vmatpush1.bf16.msra.mxu0 %v1758
        %1784 = vmatprep.subr.bf16.mxu0 0
        %1785 = vmatpush1.bf16.msra.mxu0 %v1759
        %1786 = vmatprep.subr.bf16.mxu0 0
        %1787 = vmatpush1.bf16.msra.mxu0 %v1760
        %1788 = vmatprep.subr.bf16.mxu0 0
        %1789 = vmatpush1.bf16.msra.mxu0 %v1761
        %1790 = vmatprep.subr.bf16.mxu0 0
        %1791 = vmatpush1.bf16.msra.mxu0 %v1762
        %1792 = vmatprep.subr.bf16.mxu0 0
        %1793 = vmatpush1.bf16.msra.mxu0 %v1763
        %1794 = vmatprep.subr.bf16.mxu0 0
        %1795 = vmatpush1.bf16.msra.mxu0 %v1764
        %1796 = vmatprep.subr.bf16.mxu0 0
        %1797 = vmatpush1.bf16.msra.mxu0 %v1765
        %1798 = vmatprep.subr.bf16.mxu0 0
        %1799 = vmatpush1.bf16.msra.mxu0 0
        %1800 = vmatprep.subr.bf16.mxu0 0
        %1801 = vmatpush1.bf16.msra.mxu0 0
        %1802 = vmatprep.subr.bf16.mxu0 0
        %1803 = vmatpush1.bf16.msra.mxu0 0
        %1804 = vmatprep.subr.bf16.mxu0 0
        %1805 = vmatpush1.bf16.msra.mxu0 0
        %1806 = vmatprep.subr.bf16.mxu0 0
        %1807 = vmatpush1.bf16.msra.mxu0 0
        %1808 = vmatprep.subr.bf16.mxu0 0
        %1809 = vmatpush1.bf16.msra.mxu0 0
        %1810 = vmatprep.subr.bf16.mxu0 0
        %1811 = vmatpush1.bf16.msra.mxu0 0
        %1812 = vmatprep.subr.bf16.mxu0 0
        %1813 = vmatpush1.bf16.msra.mxu0 0
        %1814 = vmatprep.mubr.bf16.mxu0 0
        %1815 = vmatmul.mubr.bf16.gmra.mrb[0].mxu0 %v552
        %v1816 = vpop.f32.mrb[0].mxu0
        %v1817 = vadd.f32 0.0, %v1816
        %v1818 = vpop.f32.mrb[0].mxu0
        %v1819 = vpop.f32.mrb[0].mxu0
        %v1820 = vadd.f32 0.0, %v1819
        %v1821 = vpop.f32.mrb[0].mxu0
        %1822 = vmatprep.mubr.bf16.mxu0 0
        %1823 = vmatmul.mubr.bf16.gmra.mrb[0].mxu0 %v553
        %v1824 = vpop.f32.mrb[0].mxu0
        %v1825 = vadd.f32 0.0, %v1824
        %v1826 = vpop.f32.mrb[0].mxu0
        %v1827 = vpop.f32.mrb[0].mxu0
        %v1828 = vadd.f32 0.0, %v1827
        %v1829 = vpop.f32.mrb[0].mxu0
        %1830 = vmatprep.mubr.bf16.mxu0 0
        %1831 = vmatmul.mubr.bf16.gmra.mrb[0].mxu0 %v554
        %v1832 = vpop.f32.mrb[0].mxu0
        %v1833 = vadd.f32 0.0, %v1832
        %v1834 = vpop.f32.mrb[0].mxu0
        %v1835 = vpop.f32.mrb[0].mxu0
        %v1836 = vadd.f32 0.0, %v1835
        %v1837 = vpop.f32.mrb[0].mxu0
        %1838 = vmatprep.mubr.bf16.mxu0 0
        %1839 = vmatmul.mubr.bf16.gmra.mrb[0].mxu0 %v555
        %v1840 = vpop.f32.mrb[0].mxu0
        %v1841 = vadd.f32 0.0, %v1840
        %v1842 = vpop.f32.mrb[0].mxu0
        %v1843 = vpop.f32.mrb[0].mxu0
        %v1844 = vadd.f32 0.0, %v1843
        %v1845 = vpop.f32.mrb[0].mxu0
        %1846 = vmatprep.mubr.bf16.mxu0 0
        %1847 = vmatmul.mubr.bf16.gmra.mrb[0].mxu0 %v556
        %v1848 = vpop.f32.mrb[0].mxu0
        %v1849 = vadd.f32 0.0, %v1848
        %v1850 = vpop.f32.mrb[0].mxu0
        %v1851 = vpop.f32.mrb[0].mxu0
        %v1852 = vadd.f32 0.0, %v1851
        %v1853 = vpop.f32.mrb[0].mxu0
        %1854 = vmatprep.mubr.bf16.mxu0 0
        %1855 = vmatmul.mubr.bf16.gmra.mrb[0].mxu0 %v557
        %v1856 = vpop.f32.mrb[0].mxu0
        %v1857 = vadd.f32 0.0, %v1856
        %v1858 = vpop.f32.mrb[0].mxu0
        %v1859 = vpop.f32.mrb[0].mxu0
        %v1860 = vadd.f32 0.0, %v1859
        %v1861 = vpop.f32.mrb[0].mxu0
        %1862 = vmatprep.mubr.bf16.mxu0 0
        %1863 = vmatmul.mubr.bf16.gmra.mrb[0].mxu0 %v558
        %v1864 = vpop.f32.mrb[0].mxu0
        %v1865 = vadd.f32 0.0, %v1864
        %v1866 = vpop.f32.mrb[0].mxu0
        %v1867 = vpop.f32.mrb[0].mxu0
        %v1868 = vadd.f32 0.0, %v1867
        %v1869 = vpop.f32.mrb[0].mxu0
        %1870 = vmatprep.mubr.bf16.mxu0 0
        %1871 = vmatmul.mubr.bf16.gmra.mrb[0].mxu0 %v559
        %v1872 = vpop.f32.mrb[0].mxu0
        %v1873 = vadd.f32 0.0, %v1872
        %v1874 = vpop.f32.mrb[0].mxu0
        %v1875 = vpop.f32.mrb[0].mxu0
        %v1876 = vadd.f32 0.0, %v1875
        %v1877 = vpop.f32.mrb[0].mxu0
        %1878 = vdwg.mxu0
        %v1879 = vpack.c.bf16 %v1820, %v1817
        %v1880 = vpack.c.bf16 %v1828, %v1825
        %v1881 = vpack.c.bf16 %v1836, %v1833
        %v1882 = vpack.c.bf16 %v1844, %v1841
        %v1883 = vpack.c.bf16 %v1852, %v1849
        %v1884 = vpack.c.bf16 %v1860, %v1857
        %v1885 = vpack.c.bf16 %v1868, %v1865
        %v1886 = vpack.c.bf16 %v1876, %v1873
        %v1887 = vld [vmem:[#allocation7 + $0x40] sm:$0xf]
        %v1888 = vld [vmem:[#allocation7 + $0x44] sm:$0xf]
        %v1889 = vld [vmem:[#allocation7 + $0x48] sm:$0xf]
        %v1890 = vld [vmem:[#allocation7 + $0x4c] sm:$0xf]
        %v1891 = vld [vmem:[#allocation7 + $0x50] sm:$0xf]
        %v1892 = vld [vmem:[#allocation7 + $0x54] sm:$0xf]
        %v1893 = vld [vmem:[#allocation7 + $0x58] sm:$0xf]
        %v1894 = vld [vmem:[#allocation7 + $0x5c] sm:$0xf]
        %v1895 = vld [vmem:[#allocation7 + $0x60] sm:$0xf]
        %v1896 = vld [vmem:[#allocation7 + $0x64] sm:$0xf]
        %v1897 = vld [vmem:[#allocation7 + $0x68] sm:$0xf]
        %v1898 = vld [vmem:[#allocation7 + $0x6c] sm:$0xf]
        %v1899 = vld [vmem:[#allocation7 + $0x70] sm:$0xf]
        %v1900 = vld [vmem:[#allocation7 + $0x74] sm:$0xf]
        %v1901 = vld [vmem:[#allocation7 + $0x78] sm:$0xf]
        %v1902 = vld [vmem:[#allocation7 + $0x7c] sm:$0xf]
        %v1919 = vunpack.c.l.b16 %v1887
        %v1920 = vunpack.c.l.b16 %v1888
        %v1921 = vunpack.c.l.b16 %v1889
        %v1922 = vunpack.c.l.b16 %v1890
        %v1923 = vunpack.c.l.b16 %v1891
        %v1924 = vunpack.c.l.b16 %v1892
        %v1925 = vunpack.c.l.b16 %v1893
        %v1926 = vunpack.c.l.b16 %v1894
        %v1927 = vunpack.c.l.b16 %v1895
        %v1928 = vunpack.c.l.b16 %v1896
        %v1929 = vunpack.c.l.b16 %v1897
        %v1930 = vunpack.c.l.b16 %v1898
        %v1931 = vunpack.c.l.b16 %v1899
        %v1932 = vunpack.c.l.b16 %v1900
        %v1933 = vunpack.c.l.b16 %v1901
        %v1934 = vunpack.c.l.b16 %v1902
        %v1935 = vpack.c.b16 %v1920, %v1919
        %v1936 = vpack.c.b16 %v1922, %v1921
        %v1937 = vpack.c.b16 %v1924, %v1923
        %v1938 = vpack.c.b16 %v1926, %v1925
        %v1939 = vpack.c.b16 %v1928, %v1927
        %v1940 = vpack.c.b16 %v1930, %v1929
        %v1941 = vpack.c.b16 %v1932, %v1931
        %v1942 = vpack.c.b16 %v1934, %v1933
        %1951 = vmatprep.subr.bf16.mxu0 0
        %1952 = vmatpush1.bf16.msra.mxu0 %v1935
        %1953 = vmatprep.subr.bf16.mxu0 0
        %1954 = vmatpush1.bf16.msra.mxu0 %v1936
        %1955 = vmatprep.subr.bf16.mxu0 0
        %1956 = vmatpush1.bf16.msra.mxu0 %v1937
        %1957 = vmatprep.subr.bf16.mxu0 0
        %1958 = vmatpush1.bf16.msra.mxu0 %v1938
        %1959 = vmatprep.subr.bf16.mxu0 0
        %1960 = vmatpush1.bf16.msra.mxu0 %v1939
        %1961 = vmatprep.subr.bf16.mxu0 0
        %1962 = vmatpush1.bf16.msra.mxu0 %v1940
        %1963 = vmatprep.subr.bf16.mxu0 0
        %1964 = vmatpush1.bf16.msra.mxu0 %v1941
        %1965 = vmatprep.subr.bf16.mxu0 0
        %1966 = vmatpush1.bf16.msra.mxu0 %v1942
        %1967 = vmatprep.subr.bf16.mxu0 0
        %1968 = vmatpush1.bf16.msra.mxu0 0
        %1969 = vmatprep.subr.bf16.mxu0 0
        %1970 = vmatpush1.bf16.msra.mxu0 0
        %1971 = vmatprep.subr.bf16.mxu0 0
        %1972 = vmatpush1.bf16.msra.mxu0 0
        %1973 = vmatprep.subr.bf16.mxu0 0
        %1974 = vmatpush1.bf16.msra.mxu0 0
        %1975 = vmatprep.subr.bf16.mxu0 0
        %1976 = vmatpush1.bf16.msra.mxu0 0
        %1977 = vmatprep.subr.bf16.mxu0 0
        %1978 = vmatpush1.bf16.msra.mxu0 0
        %1979 = vmatprep.subr.bf16.mxu0 0
        %1980 = vmatpush1.bf16.msra.mxu0 0
        %1981 = vmatprep.subr.bf16.mxu0 0
        %1982 = vmatpush1.bf16.msra.mxu0 0
        %1983 = vmatprep.mubr.bf16.mxu0 0
        %1984 = vmatmul.mubr.bf16.gmra.mrb[0].mxu0 %v1879
        %v1985 = vpop.f32.mrb[0].mxu0
        %v1986 = vadd.f32 0.0, %v1985
        %v1987 = vpop.f32.mrb[0].mxu0
        %v1988 = vpop.f32.mrb[0].mxu0
        %v1989 = vadd.f32 0.0, %v1988
        %v1990 = vpop.f32.mrb[0].mxu0
        %1991 = vmatprep.mubr.bf16.mxu0 0
        %1992 = vmatmul.mubr.bf16.gmra.mrb[0].mxu0 %v1880
        %v1993 = vpop.f32.mrb[0].mxu0
        %v1994 = vadd.f32 0.0, %v1993
        %v1995 = vpop.f32.mrb[0].mxu0
        %v1996 = vpop.f32.mrb[0].mxu0
        %v1997 = vadd.f32 0.0, %v1996
        %v1998 = vpop.f32.mrb[0].mxu0
        %1999 = vmatprep.mubr.bf16.mxu0 0
        %2000 = vmatmul.mubr.bf16.gmra.mrb[0].mxu0 %v1881
        %v2001 = vpop.f32.mrb[0].mxu0
        %v2002 = vadd.f32 0.0, %v2001
        %v2003 = vpop.f32.mrb[0].mxu0
        %v2004 = vpop.f32.mrb[0].mxu0
        %v2005 = vadd.f32 0.0, %v2004
        %v2006 = vpop.f32.mrb[0].mxu0
        %2007 = vmatprep.mubr.bf16.mxu0 0
        %2008 = vmatmul.mubr.bf16.gmra.mrb[0].mxu0 %v1882
        %v2009 = vpop.f32.mrb[0].mxu0
        %v2010 = vadd.f32 0.0, %v2009
        %v2011 = vpop.f32.mrb[0].mxu0
        %v2012 = vpop.f32.mrb[0].mxu0
        %v2013 = vadd.f32 0.0, %v2012
        %v2014 = vpop.f32.mrb[0].mxu0
        %2015 = vmatprep.mubr.bf16.mxu0 0
        %2016 = vmatmul.mubr.bf16.gmra.mrb[0].mxu0 %v1883
        %v2017 = vpop.f32.mrb[0].mxu0
        %v2018 = vadd.f32 0.0, %v2017
        %v2019 = vpop.f32.mrb[0].mxu0
        %v2020 = vpop.f32.mrb[0].mxu0
        %v2021 = vadd.f32 0.0, %v2020
        %v2022 = vpop.f32.mrb[0].mxu0
        %2023 = vmatprep.mubr.bf16.mxu0 0
        %2024 = vmatmul.mubr.bf16.gmra.mrb[0].mxu0 %v1884
        %v2025 = vpop.f32.mrb[0].mxu0
        %v2026 = vadd.f32 0.0, %v2025
        %v2027 = vpop.f32.mrb[0].mxu0
        %v2028 = vpop.f32.mrb[0].mxu0
        %v2029 = vadd.f32 0.0, %v2028
        %v2030 = vpop.f32.mrb[0].mxu0
        %2031 = vmatprep.mubr.bf16.mxu0 0
        %2032 = vmatmul.mubr.bf16.gmra.mrb[0].mxu0 %v1885
        %v2033 = vpop.f32.mrb[0].mxu0
        %v2034 = vadd.f32 0.0, %v2033
        %v2035 = vpop.f32.mrb[0].mxu0
        %v2036 = vpop.f32.mrb[0].mxu0
        %v2037 = vadd.f32 0.0, %v2036
        %v2038 = vpop.f32.mrb[0].mxu0
        %2039 = vmatprep.mubr.bf16.mxu0 0
        %2040 = vmatmul.mubr.bf16.gmra.mrb[0].mxu0 %v1886
        %v2041 = vpop.f32.mrb[0].mxu0
        %v2042 = vadd.f32 0.0, %v2041
        %v2043 = vpop.f32.mrb[0].mxu0
        %v2044 = vpop.f32.mrb[0].mxu0
        %v2045 = vadd.f32 0.0, %v2044
        %v2046 = vpop.f32.mrb[0].mxu0
        %2047 = vdwg.mxu0
        %v2064 = vunpack.c.l.b16 %v1766
        %v2065 = vunpack.c.l.b16 %v1767
        %v2066 = vunpack.c.l.b16 %v1768
        %v2067 = vunpack.c.l.b16 %v1769
        %v2068 = vunpack.c.l.b16 %v1770
        %v2069 = vunpack.c.l.b16 %v1771
        %v2070 = vunpack.c.l.b16 %v1772
        %v2071 = vunpack.c.l.b16 %v1773
        %v2072 = vunpack.c.l.b16 %v1774
        %v2073 = vunpack.c.l.b16 %v1775
        %v2074 = vunpack.c.l.b16 %v1776
        %v2075 = vunpack.c.l.b16 %v1777
        %v2076 = vunpack.c.l.b16 %v1778
        %v2077 = vunpack.c.l.b16 %v1779
        %v2078 = vunpack.c.l.b16 %v1780
        %v2079 = vunpack.c.l.b16 %v1781
        %v2080 = vpack.c.b16 %v2065, %v2064
        %v2081 = vpack.c.b16 %v2067, %v2066
        %v2082 = vpack.c.b16 %v2069, %v2068
        %v2083 = vpack.c.b16 %v2071, %v2070
        %v2084 = vpack.c.b16 %v2073, %v2072
        %v2085 = vpack.c.b16 %v2075, %v2074
        %v2086 = vpack.c.b16 %v2077, %v2076
        %v2087 = vpack.c.b16 %v2079, %v2078
        %2096 = vmatprep.subr.bf16.mxu0 0
        %2097 = vmatpush1.bf16.msra.mxu0 %v2080
        %2098 = vmatprep.subr.bf16.mxu0 0
        %2099 = vmatpush1.bf16.msra.mxu0 %v2081
        %2100 = vmatprep.subr.bf16.mxu0 0
        %2101 = vmatpush1.bf16.msra.mxu0 %v2082
        %2102 = vmatprep.subr.bf16.mxu0 0
        %2103 = vmatpush1.bf16.msra.mxu0 %v2083
        %2104 = vmatprep.subr.bf16.mxu0 0
        %2105 = vmatpush1.bf16.msra.mxu0 %v2084
        %2106 = vmatprep.subr.bf16.mxu0 0
        %2107 = vmatpush1.bf16.msra.mxu0 %v2085
        %2108 = vmatprep.subr.bf16.mxu0 0
        %2109 = vmatpush1.bf16.msra.mxu0 %v2086
        %2110 = vmatprep.subr.bf16.mxu0 0
        %2111 = vmatpush1.bf16.msra.mxu0 %v2087
        %2112 = vmatprep.subr.bf16.mxu0 0
        %2113 = vmatpush1.bf16.msra.mxu0 0
        %2114 = vmatprep.subr.bf16.mxu0 0
        %2115 = vmatpush1.bf16.msra.mxu0 0
        %2116 = vmatprep.subr.bf16.mxu0 0
        %2117 = vmatpush1.bf16.msra.mxu0 0
        %2118 = vmatprep.subr.bf16.mxu0 0
        %2119 = vmatpush1.bf16.msra.mxu0 0
        %2120 = vmatprep.subr.bf16.mxu0 0
        %2121 = vmatpush1.bf16.msra.mxu0 0
        %2122 = vmatprep.subr.bf16.mxu0 0
        %2123 = vmatpush1.bf16.msra.mxu0 0
        %2124 = vmatprep.subr.bf16.mxu0 0
        %2125 = vmatpush1.bf16.msra.mxu0 0
        %2126 = vmatprep.subr.bf16.mxu0 0
        %2127 = vmatpush1.bf16.msra.mxu0 0
        %2128 = vmatprep.mubr.bf16.mxu0 0
        %2129 = vmatmul.mubr.bf16.gmra.mrb[0].mxu0 %v1758
        %v2130 = vpop.f32.mrb[0].mxu0
        %v2131 = vadd.f32 %v1986, %v2130
        %v2132 = vpop.f32.mrb[0].mxu0
        %v2133 = vpop.f32.mrb[0].mxu0
        %v2134 = vadd.f32 %v1989, %v2133
        %v2135 = vpop.f32.mrb[0].mxu0
        %2136 = vmatprep.mubr.bf16.mxu0 0
        %2137 = vmatmul.mubr.bf16.gmra.mrb[0].mxu0 %v1759
        %v2138 = vpop.f32.mrb[0].mxu0
        %v2139 = vadd.f32 %v1994, %v2138
        %v2140 = vpop.f32.mrb[0].mxu0
        %v2141 = vpop.f32.mrb[0].mxu0
        %v2142 = vadd.f32 %v1997, %v2141
        %v2143 = vpop.f32.mrb[0].mxu0
        %2144 = vmatprep.mubr.bf16.mxu0 0
        %2145 = vmatmul.mubr.bf16.gmra.mrb[0].mxu0 %v1760
        %v2146 = vpop.f32.mrb[0].mxu0
        %v2147 = vadd.f32 %v2002, %v2146
        %v2148 = vpop.f32.mrb[0].mxu0
        %v2149 = vpop.f32.mrb[0].mxu0
        %v2150 = vadd.f32 %v2005, %v2149
        %v2151 = vpop.f32.mrb[0].mxu0
        %2152 = vmatprep.mubr.bf16.mxu0 0
        %2153 = vmatmul.mubr.bf16.gmra.mrb[0].mxu0 %v1761
        %v2154 = vpop.f32.mrb[0].mxu0
        %v2155 = vadd.f32 %v2010, %v2154
        %v2156 = vpop.f32.mrb[0].mxu0
        %v2157 = vpop.f32.mrb[0].mxu0
        %v2158 = vadd.f32 %v2013, %v2157
        %v2159 = vpop.f32.mrb[0].mxu0
        %2160 = vmatprep.mubr.bf16.mxu0 0
        %2161 = vmatmul.mubr.bf16.gmra.mrb[0].mxu0 %v1762
        %v2162 = vpop.f32.mrb[0].mxu0
        %v2163 = vadd.f32 %v2018, %v2162
        %v2164 = vpop.f32.mrb[0].mxu0
        %v2165 = vpop.f32.mrb[0].mxu0
        %v2166 = vadd.f32 %v2021, %v2165
        %v2167 = vpop.f32.mrb[0].mxu0
        %2168 = vmatprep.mubr.bf16.mxu0 0
        %2169 = vmatmul.mubr.bf16.gmra.mrb[0].mxu0 %v1763
        %v2170 = vpop.f32.mrb[0].mxu0
        %v2171 = vadd.f32 %v2026, %v2170
        %v2172 = vpop.f32.mrb[0].mxu0
        %v2173 = vpop.f32.mrb[0].mxu0
        %v2174 = vadd.f32 %v2029, %v2173
        %v2175 = vpop.f32.mrb[0].mxu0
        %2176 = vmatprep.mubr.bf16.mxu0 0
        %2177 = vmatmul.mubr.bf16.gmra.mrb[0].mxu0 %v1764
        %v2178 = vpop.f32.mrb[0].mxu0
        %v2179 = vadd.f32 %v2034, %v2178
        %v2180 = vpop.f32.mrb[0].mxu0
        %v2181 = vpop.f32.mrb[0].mxu0
        %v2182 = vadd.f32 %v2037, %v2181
        %v2183 = vpop.f32.mrb[0].mxu0
        %2184 = vmatprep.mubr.bf16.mxu0 0
        %2185 = vmatmul.mubr.bf16.gmra.mrb[0].mxu0 %v1765
        %v2186 = vpop.f32.mrb[0].mxu0
        %v2187 = vadd.f32 %v2042, %v2186
        %v2188 = vpop.f32.mrb[0].mxu0
        %v2189 = vpop.f32.mrb[0].mxu0
        %v2190 = vadd.f32 %v2045, %v2189
        %v2191 = vpop.f32.mrb[0].mxu0
        %2192 = vdwg.mxu0
        %2193 = vmatprep.subr.bf16.mxu0 0
        %2194 = vmatpush1.bf16.msra.mxu0 %v1758
        %2195 = vmatprep.subr.bf16.mxu0 0
        %2196 = vmatpush1.bf16.msra.mxu0 %v1759
        %2197 = vmatprep.subr.bf16.mxu0 0
        %2198 = vmatpush1.bf16.msra.mxu0 %v1760
        %2199 = vmatprep.subr.bf16.mxu0 0
        %2200 = vmatpush1.bf16.msra.mxu0 %v1761
        %2201 = vmatprep.subr.bf16.mxu0 0
        %2202 = vmatpush1.bf16.msra.mxu0 %v1762
        %2203 = vmatprep.subr.bf16.mxu0 0
        %2204 = vmatpush1.bf16.msra.mxu0 %v1763
        %2205 = vmatprep.subr.bf16.mxu0 0
        %2206 = vmatpush1.bf16.msra.mxu0 %v1764
        %2207 = vmatprep.subr.bf16.mxu0 0
        %2208 = vmatpush1.bf16.msra.mxu0 %v1765
        %2209 = vmatprep.subr.bf16.mxu0 0
        %2210 = vmatpush1.bf16.msra.mxu0 0
        %2211 = vmatprep.subr.bf16.mxu0 0
        %2212 = vmatpush1.bf16.msra.mxu0 0
        %2213 = vmatprep.subr.bf16.mxu0 0
        %2214 = vmatpush1.bf16.msra.mxu0 0
        %2215 = vmatprep.subr.bf16.mxu0 0
        %2216 = vmatpush1.bf16.msra.mxu0 0
        %2217 = vmatprep.subr.bf16.mxu0 0
        %2218 = vmatpush1.bf16.msra.mxu0 0
        %2219 = vmatprep.subr.bf16.mxu0 0
        %2220 = vmatpush1.bf16.msra.mxu0 0
        %2221 = vmatprep.subr.bf16.mxu0 0
        %2222 = vmatpush1.bf16.msra.mxu0 0
        %2223 = vmatprep.subr.bf16.mxu0 0
        %2224 = vmatpush1.bf16.msra.mxu0 0
        %2225 = vmatprep.mubr.bf16.mxu0 0
        %2226 = vmatmul.mubr.bf16.gmra.mrb[0].mxu0 %v1076
        %v2227 = vpop.f32.mrb[0].mxu0
        %v2228 = vadd.f32 0.0, %v2227
        %v2229 = vpop.f32.mrb[0].mxu0
        %v2230 = vpop.f32.mrb[0].mxu0
        %v2231 = vadd.f32 0.0, %v2230
        %v2232 = vpop.f32.mrb[0].mxu0
        %2233 = vmatprep.mubr.bf16.mxu0 0
        %2234 = vmatmul.mubr.bf16.gmra.mrb[0].mxu0 %v1077
        %v2235 = vpop.f32.mrb[0].mxu0
        %v2236 = vadd.f32 0.0, %v2235
        %v2237 = vpop.f32.mrb[0].mxu0
        %v2238 = vpop.f32.mrb[0].mxu0
        %v2239 = vadd.f32 0.0, %v2238
        %v2240 = vpop.f32.mrb[0].mxu0
        %2241 = vmatprep.mubr.bf16.mxu0 0
        %2242 = vmatmul.mubr.bf16.gmra.mrb[0].mxu0 %v1078
        %v2243 = vpop.f32.mrb[0].mxu0
        %v2244 = vadd.f32 0.0, %v2243
        %v2245 = vpop.f32.mrb[0].mxu0
        %v2246 = vpop.f32.mrb[0].mxu0
        %v2247 = vadd.f32 0.0, %v2246
        %v2248 = vpop.f32.mrb[0].mxu0
        %2249 = vmatprep.mubr.bf16.mxu0 0
        %2250 = vmatmul.mubr.bf16.gmra.mrb[0].mxu0 %v1079
        %v2251 = vpop.f32.mrb[0].mxu0
        %v2252 = vadd.f32 0.0, %v2251
        %v2253 = vpop.f32.mrb[0].mxu0
        %v2254 = vpop.f32.mrb[0].mxu0
        %v2255 = vadd.f32 0.0, %v2254
        %v2256 = vpop.f32.mrb[0].mxu0
        %2257 = vmatprep.mubr.bf16.mxu0 0
        %2258 = vmatmul.mubr.bf16.gmra.mrb[0].mxu0 %v1080
        %v2259 = vpop.f32.mrb[0].mxu0
        %v2260 = vadd.f32 0.0, %v2259
        %v2261 = vpop.f32.mrb[0].mxu0
        %v2262 = vpop.f32.mrb[0].mxu0
        %v2263 = vadd.f32 0.0, %v2262
        %v2264 = vpop.f32.mrb[0].mxu0
        %2265 = vmatprep.mubr.bf16.mxu0 0
        %2266 = vmatmul.mubr.bf16.gmra.mrb[0].mxu0 %v1081
        %v2267 = vpop.f32.mrb[0].mxu0
        %v2268 = vadd.f32 0.0, %v2267
        %v2269 = vpop.f32.mrb[0].mxu0
        %v2270 = vpop.f32.mrb[0].mxu0
        %v2271 = vadd.f32 0.0, %v2270
        %v2272 = vpop.f32.mrb[0].mxu0
        %2273 = vmatprep.mubr.bf16.mxu0 0
        %2274 = vmatmul.mubr.bf16.gmra.mrb[0].mxu0 %v1082
        %v2275 = vpop.f32.mrb[0].mxu0
        %v2276 = vadd.f32 0.0, %v2275
        %v2277 = vpop.f32.mrb[0].mxu0
        %v2278 = vpop.f32.mrb[0].mxu0
        %v2279 = vadd.f32 0.0, %v2278
        %v2280 = vpop.f32.mrb[0].mxu0
        %2281 = vmatprep.mubr.bf16.mxu0 0
        %2282 = vmatmul.mubr.bf16.gmra.mrb[0].mxu0 %v1083
        %v2283 = vpop.f32.mrb[0].mxu0
        %v2284 = vadd.f32 0.0, %v2283
        %v2285 = vpop.f32.mrb[0].mxu0
        %v2286 = vpop.f32.mrb[0].mxu0
        %v2287 = vadd.f32 0.0, %v2286
        %v2288 = vpop.f32.mrb[0].mxu0
        %2289 = vdwg.mxu0
        %v2290 = vpack.c.bf16 %v2231, %v2228
        %v2291 = vpack.c.bf16 %v2239, %v2236
        %v2292 = vpack.c.bf16 %v2247, %v2244
        %v2293 = vpack.c.bf16 %v2255, %v2252
        %v2294 = vpack.c.bf16 %v2263, %v2260
        %v2295 = vpack.c.bf16 %v2271, %v2268
        %v2296 = vpack.c.bf16 %v2279, %v2276
        %v2297 = vpack.c.bf16 %v2287, %v2284
        %v2298 = vld [vmem:[#allocation7 + $0x80] sm:$0xf]
        %v2299 = vld [vmem:[#allocation7 + $0x84] sm:$0xf]
        %v2300 = vld [vmem:[#allocation7 + $0x88] sm:$0xf]
        %v2301 = vld [vmem:[#allocation7 + $0x8c] sm:$0xf]
        %v2302 = vld [vmem:[#allocation7 + $0x90] sm:$0xf]
        %v2303 = vld [vmem:[#allocation7 + $0x94] sm:$0xf]
        %v2304 = vld [vmem:[#allocation7 + $0x98] sm:$0xf]
        %v2305 = vld [vmem:[#allocation7 + $0x9c] sm:$0xf]
        %v2306 = vld [vmem:[#allocation7 + $0xa0] sm:$0xf]
        %v2307 = vld [vmem:[#allocation7 + $0xa4] sm:$0xf]
        %v2308 = vld [vmem:[#allocation7 + $0xa8] sm:$0xf]
        %v2309 = vld [vmem:[#allocation7 + $0xac] sm:$0xf]
        %v2310 = vld [vmem:[#allocation7 + $0xb0] sm:$0xf]
        %v2311 = vld [vmem:[#allocation7 + $0xb4] sm:$0xf]
        %v2312 = vld [vmem:[#allocation7 + $0xb8] sm:$0xf]
        %v2313 = vld [vmem:[#allocation7 + $0xbc] sm:$0xf]
        %v2330 = vunpack.c.l.b16 %v2298
        %v2331 = vunpack.c.l.b16 %v2299
        %v2332 = vunpack.c.l.b16 %v2300
        %v2333 = vunpack.c.l.b16 %v2301
        %v2334 = vunpack.c.l.b16 %v2302
        %v2335 = vunpack.c.l.b16 %v2303
        %v2336 = vunpack.c.l.b16 %v2304
        %v2337 = vunpack.c.l.b16 %v2305
        %v2338 = vunpack.c.l.b16 %v2306
        %v2339 = vunpack.c.l.b16 %v2307
        %v2340 = vunpack.c.l.b16 %v2308
        %v2341 = vunpack.c.l.b16 %v2309
        %v2342 = vunpack.c.l.b16 %v2310
        %v2343 = vunpack.c.l.b16 %v2311
        %v2344 = vunpack.c.l.b16 %v2312
        %v2345 = vunpack.c.l.b16 %v2313
        %v2346 = vpack.c.b16 %v2331, %v2330
        %v2347 = vpack.c.b16 %v2333, %v2332
        %v2348 = vpack.c.b16 %v2335, %v2334
        %v2349 = vpack.c.b16 %v2337, %v2336
        %v2350 = vpack.c.b16 %v2339, %v2338
        %v2351 = vpack.c.b16 %v2341, %v2340
        %v2352 = vpack.c.b16 %v2343, %v2342
        %v2353 = vpack.c.b16 %v2345, %v2344
        %2362 = vmatprep.subr.bf16.mxu0 0
        %2363 = vmatpush1.bf16.msra.mxu0 %v2346
        %2364 = vmatprep.subr.bf16.mxu0 0
        %2365 = vmatpush1.bf16.msra.mxu0 %v2347
        %2366 = vmatprep.subr.bf16.mxu0 0
        %2367 = vmatpush1.bf16.msra.mxu0 %v2348
        %2368 = vmatprep.subr.bf16.mxu0 0
        %2369 = vmatpush1.bf16.msra.mxu0 %v2349
        %2370 = vmatprep.subr.bf16.mxu0 0
        %2371 = vmatpush1.bf16.msra.mxu0 %v2350
        %2372 = vmatprep.subr.bf16.mxu0 0
        %2373 = vmatpush1.bf16.msra.mxu0 %v2351
        %2374 = vmatprep.subr.bf16.mxu0 0
        %2375 = vmatpush1.bf16.msra.mxu0 %v2352
        %2376 = vmatprep.subr.bf16.mxu0 0
        %2377 = vmatpush1.bf16.msra.mxu0 %v2353
        %2378 = vmatprep.subr.bf16.mxu0 0
        %2379 = vmatpush1.bf16.msra.mxu0 0
        %2380 = vmatprep.subr.bf16.mxu0 0
        %2381 = vmatpush1.bf16.msra.mxu0 0
        %2382 = vmatprep.subr.bf16.mxu0 0
        %2383 = vmatpush1.bf16.msra.mxu0 0
        %2384 = vmatprep.subr.bf16.mxu0 0
        %2385 = vmatpush1.bf16.msra.mxu0 0
        %2386 = vmatprep.subr.bf16.mxu0 0
        %2387 = vmatpush1.bf16.msra.mxu0 0
        %2388 = vmatprep.subr.bf16.mxu0 0
        %2389 = vmatpush1.bf16.msra.mxu0 0
        %2390 = vmatprep.subr.bf16.mxu0 0
        %2391 = vmatpush1.bf16.msra.mxu0 0
        %2392 = vmatprep.subr.bf16.mxu0 0
        %2393 = vmatpush1.bf16.msra.mxu0 0
        %2394 = vmatprep.mubr.bf16.mxu0 0
        %2395 = vmatmul.mubr.bf16.gmra.mrb[0].mxu0 %v2290
        %v2396 = vpop.f32.mrb[0].mxu0
        %v2397 = vadd.f32 0.0, %v2396
        %v2398 = vpop.f32.mrb[0].mxu0
        %v2399 = vpop.f32.mrb[0].mxu0
        %v2400 = vadd.f32 0.0, %v2399
        %v2401 = vpop.f32.mrb[0].mxu0
        %2402 = vmatprep.mubr.bf16.mxu0 0
        %2403 = vmatmul.mubr.bf16.gmra.mrb[0].mxu0 %v2291
        %v2404 = vpop.f32.mrb[0].mxu0
        %v2405 = vadd.f32 0.0, %v2404
        %v2406 = vpop.f32.mrb[0].mxu0
        %v2407 = vpop.f32.mrb[0].mxu0
        %v2408 = vadd.f32 0.0, %v2407
        %v2409 = vpop.f32.mrb[0].mxu0
        %2410 = vmatprep.mubr.bf16.mxu0 0
        %2411 = vmatmul.mubr.bf16.gmra.mrb[0].mxu0 %v2292
        %v2412 = vpop.f32.mrb[0].mxu0
        %v2413 = vadd.f32 0.0, %v2412
        %v2414 = vpop.f32.mrb[0].mxu0
        %v2415 = vpop.f32.mrb[0].mxu0
        %v2416 = vadd.f32 0.0, %v2415
        %v2417 = vpop.f32.mrb[0].mxu0
        %2418 = vmatprep.mubr.bf16.mxu0 0
        %2419 = vmatmul.mubr.bf16.gmra.mrb[0].mxu0 %v2293
        %v2420 = vpop.f32.mrb[0].mxu0
        %v2421 = vadd.f32 0.0, %v2420
        %v2422 = vpop.f32.mrb[0].mxu0
        %v2423 = vpop.f32.mrb[0].mxu0
        %v2424 = vadd.f32 0.0, %v2423
        %v2425 = vpop.f32.mrb[0].mxu0
        %2426 = vmatprep.mubr.bf16.mxu0 0
        %2427 = vmatmul.mubr.bf16.gmra.mrb[0].mxu0 %v2294
        %v2428 = vpop.f32.mrb[0].mxu0
        %v2429 = vadd.f32 0.0, %v2428
        %v2430 = vpop.f32.mrb[0].mxu0
        %v2431 = vpop.f32.mrb[0].mxu0
        %v2432 = vadd.f32 0.0, %v2431
        %v2433 = vpop.f32.mrb[0].mxu0
        %2434 = vmatprep.mubr.bf16.mxu0 0
        %2435 = vmatmul.mubr.bf16.gmra.mrb[0].mxu0 %v2295
        %v2436 = vpop.f32.mrb[0].mxu0
        %v2437 = vadd.f32 0.0, %v2436
        %v2438 = vpop.f32.mrb[0].mxu0
        %v2439 = vpop.f32.mrb[0].mxu0
        %v2440 = vadd.f32 0.0, %v2439
        %v2441 = vpop.f32.mrb[0].mxu0
        %2442 = vmatprep.mubr.bf16.mxu0 0
        %2443 = vmatmul.mubr.bf16.gmra.mrb[0].mxu0 %v2296
        %v2444 = vpop.f32.mrb[0].mxu0
        %v2445 = vadd.f32 0.0, %v2444
        %v2446 = vpop.f32.mrb[0].mxu0
        %v2447 = vpop.f32.mrb[0].mxu0
        %v2448 = vadd.f32 0.0, %v2447
        %v2449 = vpop.f32.mrb[0].mxu0
        %2450 = vmatprep.mubr.bf16.mxu0 0
        %2451 = vmatmul.mubr.bf16.gmra.mrb[0].mxu0 %v2297
        %v2452 = vpop.f32.mrb[0].mxu0
        %v2453 = vadd.f32 0.0, %v2452
        %v2454 = vpop.f32.mrb[0].mxu0
        %v2455 = vpop.f32.mrb[0].mxu0
        %v2456 = vadd.f32 0.0, %v2455
        %v2457 = vpop.f32.mrb[0].mxu0
        %2458 = vdwg.mxu0
        %v2459 = vadd.f32 %v2131, %v2397
        %v2460 = vadd.f32 %v2134, %v2400
        %v2461 = vadd.f32 %v2139, %v2405
        %v2462 = vadd.f32 %v2142, %v2408
        %v2463 = vadd.f32 %v2147, %v2413
        %v2464 = vadd.f32 %v2150, %v2416
        %v2465 = vadd.f32 %v2155, %v2421
        %v2466 = vadd.f32 %v2158, %v2424
        %v2467 = vadd.f32 %v2163, %v2429
        %v2468 = vadd.f32 %v2166, %v2432
        %v2469 = vadd.f32 %v2171, %v2437
        %v2470 = vadd.f32 %v2174, %v2440
        %v2471 = vadd.f32 %v2179, %v2445
        %v2472 = vadd.f32 %v2182, %v2448
        %v2473 = vadd.f32 %v2187, %v2453
        %v2474 = vadd.f32 %v2190, %v2456
        %2475 = vmatprep.subr.bf16.mxu0 0
        %2476 = vmatpush1.bf16.msra.mxu0 %v1758
        %2477 = vmatprep.subr.bf16.mxu0 0
        %2478 = vmatpush1.bf16.msra.mxu0 %v1759
        %2479 = vmatprep.subr.bf16.mxu0 0
        %2480 = vmatpush1.bf16.msra.mxu0 %v1760
        %2481 = vmatprep.subr.bf16.mxu0 0
        %2482 = vmatpush1.bf16.msra.mxu0 %v1761
        %2483 = vmatprep.subr.bf16.mxu0 0
        %2484 = vmatpush1.bf16.msra.mxu0 %v1762
        %2485 = vmatprep.subr.bf16.mxu0 0
        %2486 = vmatpush1.bf16.msra.mxu0 %v1763
        %2487 = vmatprep.subr.bf16.mxu0 0
        %2488 = vmatpush1.bf16.msra.mxu0 %v1764
        %2489 = vmatprep.subr.bf16.mxu0 0
        %2490 = vmatpush1.bf16.msra.mxu0 %v1765
        %2491 = vmatprep.subr.bf16.mxu0 0
        %2492 = vmatpush1.bf16.msra.mxu0 0
        %2493 = vmatprep.subr.bf16.mxu0 0
        %2494 = vmatpush1.bf16.msra.mxu0 0
        %2495 = vmatprep.subr.bf16.mxu0 0
        %2496 = vmatpush1.bf16.msra.mxu0 0
        %2497 = vmatprep.subr.bf16.mxu0 0
        %2498 = vmatpush1.bf16.msra.mxu0 0
        %2499 = vmatprep.subr.bf16.mxu0 0
        %2500 = vmatpush1.bf16.msra.mxu0 0
        %2501 = vmatprep.subr.bf16.mxu0 0
        %2502 = vmatpush1.bf16.msra.mxu0 0
        %2503 = vmatprep.subr.bf16.mxu0 0
        %2504 = vmatpush1.bf16.msra.mxu0 0
        %2505 = vmatprep.subr.bf16.mxu0 0
        %2506 = vmatpush1.bf16.msra.mxu0 0
        %2507 = vmatprep.mubr.bf16.mxu0 0
        %2508 = vmatmul.mubr.bf16.gmra.mrb[0].mxu0 %v1423
        %v2509 = vpop.f32.mrb[0].mxu0
        %v2510 = vadd.f32 0.0, %v2509
        %v2511 = vpop.f32.mrb[0].mxu0
        %v2512 = vpop.f32.mrb[0].mxu0
        %v2513 = vadd.f32 0.0, %v2512
        %v2514 = vpop.f32.mrb[0].mxu0
        %2515 = vmatprep.mubr.bf16.mxu0 0
        %2516 = vmatmul.mubr.bf16.gmra.mrb[0].mxu0 %v1424
        %v2517 = vpop.f32.mrb[0].mxu0
        %v2518 = vadd.f32 0.0, %v2517
        %v2519 = vpop.f32.mrb[0].mxu0
        %v2520 = vpop.f32.mrb[0].mxu0
        %v2521 = vadd.f32 0.0, %v2520
        %v2522 = vpop.f32.mrb[0].mxu0
        %2523 = vmatprep.mubr.bf16.mxu0 0
        %2524 = vmatmul.mubr.bf16.gmra.mrb[0].mxu0 %v1425
        %v2525 = vpop.f32.mrb[0].mxu0
        %v2526 = vadd.f32 0.0, %v2525
        %v2527 = vpop.f32.mrb[0].mxu0
        %v2528 = vpop.f32.mrb[0].mxu0
        %v2529 = vadd.f32 0.0, %v2528
        %v2530 = vpop.f32.mrb[0].mxu0
        %2531 = vmatprep.mubr.bf16.mxu0 0
        %2532 = vmatmul.mubr.bf16.gmra.mrb[0].mxu0 %v1426
        %v2533 = vpop.f32.mrb[0].mxu0
        %v2534 = vadd.f32 0.0, %v2533
        %v2535 = vpop.f32.mrb[0].mxu0
        %v2536 = vpop.f32.mrb[0].mxu0
        %v2537 = vadd.f32 0.0, %v2536
        %v2538 = vpop.f32.mrb[0].mxu0
        %2539 = vmatprep.mubr.bf16.mxu0 0
        %2540 = vmatmul.mubr.bf16.gmra.mrb[0].mxu0 %v1427
        %v2541 = vpop.f32.mrb[0].mxu0
        %v2542 = vadd.f32 0.0, %v2541
        %v2543 = vpop.f32.mrb[0].mxu0
        %v2544 = vpop.f32.mrb[0].mxu0
        %v2545 = vadd.f32 0.0, %v2544
        %v2546 = vpop.f32.mrb[0].mxu0
        %2547 = vmatprep.mubr.bf16.mxu0 0
        %2548 = vmatmul.mubr.bf16.gmra.mrb[0].mxu0 %v1428
        %v2549 = vpop.f32.mrb[0].mxu0
        %v2550 = vadd.f32 0.0, %v2549
        %v2551 = vpop.f32.mrb[0].mxu0
        %v2552 = vpop.f32.mrb[0].mxu0
        %v2553 = vadd.f32 0.0, %v2552
        %v2554 = vpop.f32.mrb[0].mxu0
        %2555 = vmatprep.mubr.bf16.mxu0 0
        %2556 = vmatmul.mubr.bf16.gmra.mrb[0].mxu0 %v1429
        %v2557 = vpop.f32.mrb[0].mxu0
        %v2558 = vadd.f32 0.0, %v2557
        %v2559 = vpop.f32.mrb[0].mxu0
        %v2560 = vpop.f32.mrb[0].mxu0
        %v2561 = vadd.f32 0.0, %v2560
        %v2562 = vpop.f32.mrb[0].mxu0
        %2563 = vmatprep.mubr.bf16.mxu0 0
        %2564 = vmatmul.mubr.bf16.gmra.mrb[0].mxu0 %v1430
        %v2565 = vpop.f32.mrb[0].mxu0
        %v2566 = vadd.f32 0.0, %v2565
        %v2567 = vpop.f32.mrb[0].mxu0
        %v2568 = vpop.f32.mrb[0].mxu0
        %v2569 = vadd.f32 0.0, %v2568
        %v2570 = vpop.f32.mrb[0].mxu0
        %2571 = vdwg.mxu0
        %v2572 = vpack.c.bf16 %v2513, %v2510
        %v2573 = vpack.c.bf16 %v2521, %v2518
        %v2574 = vpack.c.bf16 %v2529, %v2526
        %v2575 = vpack.c.bf16 %v2537, %v2534
        %v2576 = vpack.c.bf16 %v2545, %v2542
        %v2577 = vpack.c.bf16 %v2553, %v2550
        %v2578 = vpack.c.bf16 %v2561, %v2558
        %v2579 = vpack.c.bf16 %v2569, %v2566
        %v2580 = vld [vmem:[#allocation7 + $0xc0] sm:$0xf]
        %v2581 = vld [vmem:[#allocation7 + $0xc4] sm:$0xf]
        %v2582 = vld [vmem:[#allocation7 + $0xc8] sm:$0xf]
        %v2583 = vld [vmem:[#allocation7 + $0xcc] sm:$0xf]
        %v2584 = vld [vmem:[#allocation7 + $0xd0] sm:$0xf]
        %v2585 = vld [vmem:[#allocation7 + $0xd4] sm:$0xf]
        %v2586 = vld [vmem:[#allocation7 + $0xd8] sm:$0xf]
        %v2587 = vld [vmem:[#allocation7 + $0xdc] sm:$0xf]
        %v2588 = vld [vmem:[#allocation7 + $0xe0] sm:$0xf]
        %v2589 = vld [vmem:[#allocation7 + $0xe4] sm:$0xf]
        %v2590 = vld [vmem:[#allocation7 + $0xe8] sm:$0xf]
        %v2591 = vld [vmem:[#allocation7 + $0xec] sm:$0xf]
        %v2592 = vld [vmem:[#allocation7 + $0xf0] sm:$0xf]
        %v2593 = vld [vmem:[#allocation7 + $0xf4] sm:$0xf]
        %v2594 = vld [vmem:[#allocation7 + $0xf8] sm:$0xf]
        %v2595 = vld [vmem:[#allocation7 + $0xfc] sm:$0xf]
        %v2612 = vunpack.c.l.b16 %v2580
        %v2613 = vunpack.c.l.b16 %v2581
        %v2614 = vunpack.c.l.b16 %v2582
        %v2615 = vunpack.c.l.b16 %v2583
        %v2616 = vunpack.c.l.b16 %v2584
        %v2617 = vunpack.c.l.b16 %v2585
        %v2618 = vunpack.c.l.b16 %v2586
        %v2619 = vunpack.c.l.b16 %v2587
        %v2620 = vunpack.c.l.b16 %v2588
        %v2621 = vunpack.c.l.b16 %v2589
        %v2622 = vunpack.c.l.b16 %v2590
        %v2623 = vunpack.c.l.b16 %v2591
        %v2624 = vunpack.c.l.b16 %v2592
        %v2625 = vunpack.c.l.b16 %v2593
        %v2626 = vunpack.c.l.b16 %v2594
        %v2627 = vunpack.c.l.b16 %v2595
        %v2628 = vpack.c.b16 %v2613, %v2612
        %v2629 = vpack.c.b16 %v2615, %v2614
        %v2630 = vpack.c.b16 %v2617, %v2616
        %v2631 = vpack.c.b16 %v2619, %v2618
        %v2632 = vpack.c.b16 %v2621, %v2620
        %v2633 = vpack.c.b16 %v2623, %v2622
        %v2634 = vpack.c.b16 %v2625, %v2624
        %v2635 = vpack.c.b16 %v2627, %v2626
        %2644 = vmatprep.subr.bf16.mxu0 0
        %2645 = vmatpush1.bf16.msra.mxu0 %v2628
        %2646 = vmatprep.subr.bf16.mxu0 0
        %2647 = vmatpush1.bf16.msra.mxu0 %v2629
        %2648 = vmatprep.subr.bf16.mxu0 0
        %2649 = vmatpush1.bf16.msra.mxu0 %v2630
        %2650 = vmatprep.subr.bf16.mxu0 0
        %2651 = vmatpush1.bf16.msra.mxu0 %v2631
        %2652 = vmatprep.subr.bf16.mxu0 0
        %2653 = vmatpush1.bf16.msra.mxu0 %v2632
        %2654 = vmatprep.subr.bf16.mxu0 0
        %2655 = vmatpush1.bf16.msra.mxu0 %v2633
        %2656 = vmatprep.subr.bf16.mxu0 0
        %2657 = vmatpush1.bf16.msra.mxu0 %v2634
        %2658 = vmatprep.subr.bf16.mxu0 0
        %2659 = vmatpush1.bf16.msra.mxu0 %v2635
        %2660 = vmatprep.subr.bf16.mxu0 0
        %2661 = vmatpush1.bf16.msra.mxu0 0
        %2662 = vmatprep.subr.bf16.mxu0 0
        %2663 = vmatpush1.bf16.msra.mxu0 0
        %2664 = vmatprep.subr.bf16.mxu0 0
        %2665 = vmatpush1.bf16.msra.mxu0 0
        %2666 = vmatprep.subr.bf16.mxu0 0
        %2667 = vmatpush1.bf16.msra.mxu0 0
        %2668 = vmatprep.subr.bf16.mxu0 0
        %2669 = vmatpush1.bf16.msra.mxu0 0
        %2670 = vmatprep.subr.bf16.mxu0 0
        %2671 = vmatpush1.bf16.msra.mxu0 0
        %2672 = vmatprep.subr.bf16.mxu0 0
        %2673 = vmatpush1.bf16.msra.mxu0 0
        %2674 = vmatprep.subr.bf16.mxu0 0
        %2675 = vmatpush1.bf16.msra.mxu0 0
        %2676 = vmatprep.mubr.bf16.mxu0 0
        %2677 = vmatmul.mubr.bf16.gmra.mrb[0].mxu0 %v2572
        %v2678 = vpop.f32.mrb[0].mxu0
        %v2679 = vadd.f32 0.0, %v2678
        %v2680 = vpop.f32.mrb[0].mxu0
        %v2681 = vpop.f32.mrb[0].mxu0
        %v2682 = vadd.f32 0.0, %v2681
        %v2683 = vpop.f32.mrb[0].mxu0
        %2684 = vmatprep.mubr.bf16.mxu0 0
        %2685 = vmatmul.mubr.bf16.gmra.mrb[0].mxu0 %v2573
        %v2686 = vpop.f32.mrb[0].mxu0
        %v2687 = vadd.f32 0.0, %v2686
        %v2688 = vpop.f32.mrb[0].mxu0
        %v2689 = vpop.f32.mrb[0].mxu0
        %v2690 = vadd.f32 0.0, %v2689
        %v2691 = vpop.f32.mrb[0].mxu0
        %2692 = vmatprep.mubr.bf16.mxu0 0
        %2693 = vmatmul.mubr.bf16.gmra.mrb[0].mxu0 %v2574
        %v2694 = vpop.f32.mrb[0].mxu0
        %v2695 = vadd.f32 0.0, %v2694
        %v2696 = vpop.f32.mrb[0].mxu0
        %v2697 = vpop.f32.mrb[0].mxu0
        %v2698 = vadd.f32 0.0, %v2697
        %v2699 = vpop.f32.mrb[0].mxu0
        %2700 = vmatprep.mubr.bf16.mxu0 0
        %2701 = vmatmul.mubr.bf16.gmra.mrb[0].mxu0 %v2575
        %v2702 = vpop.f32.mrb[0].mxu0
        %v2703 = vadd.f32 0.0, %v2702
        %v2704 = vpop.f32.mrb[0].mxu0
        %v2705 = vpop.f32.mrb[0].mxu0
        %v2706 = vadd.f32 0.0, %v2705
        %v2707 = vpop.f32.mrb[0].mxu0
        %2708 = vmatprep.mubr.bf16.mxu0 0
        %2709 = vmatmul.mubr.bf16.gmra.mrb[0].mxu0 %v2576
        %v2710 = vpop.f32.mrb[0].mxu0
        %v2711 = vadd.f32 0.0, %v2710
        %v2712 = vpop.f32.mrb[0].mxu0
        %v2713 = vpop.f32.mrb[0].mxu0
        %v2714 = vadd.f32 0.0, %v2713
        %v2715 = vpop.f32.mrb[0].mxu0
        %2716 = vmatprep.mubr.bf16.mxu0 0
        %2717 = vmatmul.mubr.bf16.gmra.mrb[0].mxu0 %v2577
        %v2718 = vpop.f32.mrb[0].mxu0
        %v2719 = vadd.f32 0.0, %v2718
        %v2720 = vpop.f32.mrb[0].mxu0
        %v2721 = vpop.f32.mrb[0].mxu0
        %v2722 = vadd.f32 0.0, %v2721
        %v2723 = vpop.f32.mrb[0].mxu0
        %2724 = vmatprep.mubr.bf16.mxu0 0
        %2725 = vmatmul.mubr.bf16.gmra.mrb[0].mxu0 %v2578
        %v2726 = vpop.f32.mrb[0].mxu0
        %v2727 = vadd.f32 0.0, %v2726
        %v2728 = vpop.f32.mrb[0].mxu0
        %v2729 = vpop.f32.mrb[0].mxu0
        %v2730 = vadd.f32 0.0, %v2729
        %v2731 = vpop.f32.mrb[0].mxu0
        %2732 = vmatprep.mubr.bf16.mxu0 0
        %2733 = vmatmul.mubr.bf16.gmra.mrb[0].mxu0 %v2579
        %v2734 = vpop.f32.mrb[0].mxu0
        %v2735 = vadd.f32 0.0, %v2734
        %v2736 = vpop.f32.mrb[0].mxu0
        %v2737 = vpop.f32.mrb[0].mxu0
        %v2738 = vadd.f32 0.0, %v2737
        %v2739 = vpop.f32.mrb[0].mxu0
        %2740 = vdwg.mxu0
        %v2741 = vadd.f32 %v2459, %v2679
        %v2742 = vadd.f32 %v2460, %v2682
        %v2743 = vadd.f32 %v2461, %v2687
        %v2744 = vadd.f32 %v2462, %v2690
        %v2745 = vadd.f32 %v2463, %v2695
        %v2746 = vadd.f32 %v2464, %v2698
        %v2747 = vadd.f32 %v2465, %v2703
        %v2748 = vadd.f32 %v2466, %v2706
        %v2749 = vadd.f32 %v2467, %v2711
        %v2750 = vadd.f32 %v2468, %v2714
        %v2751 = vadd.f32 %v2469, %v2719
        %v2752 = vadd.f32 %v2470, %v2722
        %v2753 = vadd.f32 %v2471, %v2727
        %v2754 = vadd.f32 %v2472, %v2730
        %v2755 = vadd.f32 %v2473, %v2735
        %v2756 = vadd.f32 %v2474, %v2738
        %v2757 = vld [vmem:[%s9 + $0x1] sm:$0x1]
        %v2758 = vlaneseq
        %v2759 = vshrl.u32 %v2758, 7
        %v2760 = vsub.s32 0, %v2759
        %v2761 = vrot.slane %v2757, %v2760
        %v2762 = vadd.f32 %v2741, %v2761
        %v2763 = vadd.f32 %v2742, %v2761
        %v2764 = vadd.f32 %v2743, %v2761
        %v2765 = vadd.f32 %v2744, %v2761
        %v2766 = vadd.f32 %v2745, %v2761
        %v2767 = vadd.f32 %v2746, %v2761
        %v2768 = vadd.f32 %v2747, %v2761
        %v2769 = vadd.f32 %v2748, %v2761
        %v2770 = vadd.f32 %v2749, %v2761
        %v2771 = vadd.f32 %v2750, %v2761
        %v2772 = vadd.f32 %v2751, %v2761
        %v2773 = vadd.f32 %v2752, %v2761
        %v2774 = vadd.f32 %v2753, %v2761
        %v2775 = vadd.f32 %v2754, %v2761
        %v2776 = vadd.f32 %v2755, %v2761
        %v2777 = vadd.f32 %v2756, %v2761
        %v2778 = vmax.f32 %v2762, 0.0
        %v2779 = vmax.f32 %v2763, 0.0
        %v2780 = vmax.f32 %v2764, 0.0
        %v2781 = vmax.f32 %v2765, 0.0
        %v2782 = vmax.f32 %v2766, 0.0
        %v2783 = vmax.f32 %v2767, 0.0
        %v2784 = vmax.f32 %v2768, 0.0
        %v2785 = vmax.f32 %v2769, 0.0
        %v2786 = vmax.f32 %v2770, 0.0
        %v2787 = vmax.f32 %v2771, 0.0
        %v2788 = vmax.f32 %v2772, 0.0
        %v2789 = vmax.f32 %v2773, 0.0
        %v2790 = vmax.f32 %v2774, 0.0
        %v2791 = vmax.f32 %v2775, 0.0
        %v2792 = vmax.f32 %v2776, 0.0
        %v2793 = vmax.f32 %v2777, 0.0
        %v2794 = vpack.c.bf16 %v2779, %v2778
        %v2795 = vpack.c.bf16 %v2781, %v2780
        %v2796 = vpack.c.bf16 %v2783, %v2782
        %v2797 = vpack.c.bf16 %v2785, %v2784
        %v2798 = vpack.c.bf16 %v2787, %v2786
        %v2799 = vpack.c.bf16 %v2789, %v2788
        %v2800 = vpack.c.bf16 %v2791, %v2790
        %v2801 = vpack.c.bf16 %v2793, %v2792
        %v2802 = vld [vmem:[#allocation7 + $0x100] sm:$0xf]
        %v2803 = vld [vmem:[#allocation7 + $0x104] sm:$0xf]
        %v2804 = vld [vmem:[#allocation7 + $0x108] sm:$0xf]
        %v2805 = vld [vmem:[#allocation7 + $0x10c] sm:$0xf]
        %v2806 = vld [vmem:[#allocation7 + $0x110] sm:$0xf]
        %v2807 = vld [vmem:[#allocation7 + $0x114] sm:$0xf]
        %v2808 = vld [vmem:[#allocation7 + $0x118] sm:$0xf]
        %v2809 = vld [vmem:[#allocation7 + $0x11c] sm:$0xf]
        %v2810 = vld [vmem:[#allocation7 + $0x120] sm:$0xf]
        %v2811 = vld [vmem:[#allocation7 + $0x124] sm:$0xf]
        %v2812 = vld [vmem:[#allocation7 + $0x128] sm:$0xf]
        %v2813 = vld [vmem:[#allocation7 + $0x12c] sm:$0xf]
        %v2814 = vld [vmem:[#allocation7 + $0x130] sm:$0xf]
        %v2815 = vld [vmem:[#allocation7 + $0x134] sm:$0xf]
        %v2816 = vld [vmem:[#allocation7 + $0x138] sm:$0xf]
        %v2817 = vld [vmem:[#allocation7 + $0x13c] sm:$0xf]
        %2818 = vmatprep.subr.bf16.mxu0 0
        %2819 = vmatpush1.bf16.msra.mxu0 %v2794
        %2820 = vmatprep.subr.bf16.mxu0 0
        %2821 = vmatpush1.bf16.msra.mxu0 %v2795
        %2822 = vmatprep.subr.bf16.mxu0 0
        %2823 = vmatpush1.bf16.msra.mxu0 %v2796
        %2824 = vmatprep.subr.bf16.mxu0 0
        %2825 = vmatpush1.bf16.msra.mxu0 %v2797
        %2826 = vmatprep.subr.bf16.mxu0 0
        %2827 = vmatpush1.bf16.msra.mxu0 %v2798
        %2828 = vmatprep.subr.bf16.mxu0 0
        %2829 = vmatpush1.bf16.msra.mxu0 %v2799
        %2830 = vmatprep.subr.bf16.mxu0 0
        %2831 = vmatpush1.bf16.msra.mxu0 %v2800
        %2832 = vmatprep.subr.bf16.mxu0 0
        %2833 = vmatpush1.bf16.msra.mxu0 %v2801
        %2834 = vmatprep.subr.bf16.mxu0 0
        %2835 = vmatpush1.bf16.msra.mxu0 0
        %2836 = vmatprep.subr.bf16.mxu0 0
        %2837 = vmatpush1.bf16.msra.mxu0 0
        %2838 = vmatprep.subr.bf16.mxu0 0
        %2839 = vmatpush1.bf16.msra.mxu0 0
        %2840 = vmatprep.subr.bf16.mxu0 0
        %2841 = vmatpush1.bf16.msra.mxu0 0
        %2842 = vmatprep.subr.bf16.mxu0 0
        %2843 = vmatpush1.bf16.msra.mxu0 0
        %2844 = vmatprep.subr.bf16.mxu0 0
        %2845 = vmatpush1.bf16.msra.mxu0 0
        %2846 = vmatprep.subr.bf16.mxu0 0
        %2847 = vmatpush1.bf16.msra.mxu0 0
        %2848 = vmatprep.subr.bf16.mxu0 0
        %2849 = vmatpush1.bf16.msra.mxu0 0
        %2850 = vmatprep.mubr.bf16.mxu0 0
        %2851 = vmatmul.mubr.bf16.gmra.mrb[0].mxu0 %v552
        %v2852 = vpop.f32.mrb[0].mxu0
        %v2853 = vadd.f32 0.0, %v2852
        %v2854 = vpop.f32.mrb[0].mxu0
        %v2855 = vpop.f32.mrb[0].mxu0
        %v2856 = vadd.f32 0.0, %v2855
        %v2857 = vpop.f32.mrb[0].mxu0
        %2858 = vmatprep.mubr.bf16.mxu0 0
        %2859 = vmatmul.mubr.bf16.gmra.mrb[0].mxu0 %v553
        %v2860 = vpop.f32.mrb[0].mxu0
        %v2861 = vadd.f32 0.0, %v2860
        %v2862 = vpop.f32.mrb[0].mxu0
        %v2863 = vpop.f32.mrb[0].mxu0
        %v2864 = vadd.f32 0.0, %v2863
        %v2865 = vpop.f32.mrb[0].mxu0
        %2866 = vmatprep.mubr.bf16.mxu0 0
        %2867 = vmatmul.mubr.bf16.gmra.mrb[0].mxu0 %v554
        %v2868 = vpop.f32.mrb[0].mxu0
        %v2869 = vadd.f32 0.0, %v2868
        %v2870 = vpop.f32.mrb[0].mxu0
        %v2871 = vpop.f32.mrb[0].mxu0
        %v2872 = vadd.f32 0.0, %v2871
        %v2873 = vpop.f32.mrb[0].mxu0
        %2874 = vmatprep.mubr.bf16.mxu0 0
        %2875 = vmatmul.mubr.bf16.gmra.mrb[0].mxu0 %v555
        %v2876 = vpop.f32.mrb[0].mxu0
        %v2877 = vadd.f32 0.0, %v2876
        %v2878 = vpop.f32.mrb[0].mxu0
        %v2879 = vpop.f32.mrb[0].mxu0
        %v2880 = vadd.f32 0.0, %v2879
        %v2881 = vpop.f32.mrb[0].mxu0
        %2882 = vmatprep.mubr.bf16.mxu0 0
        %2883 = vmatmul.mubr.bf16.gmra.mrb[0].mxu0 %v556
        %v2884 = vpop.f32.mrb[0].mxu0
        %v2885 = vadd.f32 0.0, %v2884
        %v2886 = vpop.f32.mrb[0].mxu0
        %v2887 = vpop.f32.mrb[0].mxu0
        %v2888 = vadd.f32 0.0, %v2887
        %v2889 = vpop.f32.mrb[0].mxu0
        %2890 = vmatprep.mubr.bf16.mxu0 0
        %2891 = vmatmul.mubr.bf16.gmra.mrb[0].mxu0 %v557
        %v2892 = vpop.f32.mrb[0].mxu0
        %v2893 = vadd.f32 0.0, %v2892
        %v2894 = vpop.f32.mrb[0].mxu0
        %v2895 = vpop.f32.mrb[0].mxu0
        %v2896 = vadd.f32 0.0, %v2895
        %v2897 = vpop.f32.mrb[0].mxu0
        %2898 = vmatprep.mubr.bf16.mxu0 0
        %2899 = vmatmul.mubr.bf16.gmra.mrb[0].mxu0 %v558
        %v2900 = vpop.f32.mrb[0].mxu0
        %v2901 = vadd.f32 0.0, %v2900
        %v2902 = vpop.f32.mrb[0].mxu0
        %v2903 = vpop.f32.mrb[0].mxu0
        %v2904 = vadd.f32 0.0, %v2903
        %v2905 = vpop.f32.mrb[0].mxu0
        %2906 = vmatprep.mubr.bf16.mxu0 0
        %2907 = vmatmul.mubr.bf16.gmra.mrb[0].mxu0 %v559
        %v2908 = vpop.f32.mrb[0].mxu0
        %v2909 = vadd.f32 0.0, %v2908
        %v2910 = vpop.f32.mrb[0].mxu0
        %v2911 = vpop.f32.mrb[0].mxu0
        %v2912 = vadd.f32 0.0, %v2911
        %v2913 = vpop.f32.mrb[0].mxu0
        %2914 = vdwg.mxu0
        %v2915 = vpack.c.bf16 %v2856, %v2853
        %v2916 = vpack.c.bf16 %v2864, %v2861
        %v2917 = vpack.c.bf16 %v2872, %v2869
        %v2918 = vpack.c.bf16 %v2880, %v2877
        %v2919 = vpack.c.bf16 %v2888, %v2885
        %v2920 = vpack.c.bf16 %v2896, %v2893
        %v2921 = vpack.c.bf16 %v2904, %v2901
        %v2922 = vpack.c.bf16 %v2912, %v2909
        %v2923 = vld [vmem:[#allocation7 + $0x140] sm:$0xf]
        %v2924 = vld [vmem:[#allocation7 + $0x144] sm:$0xf]
        %v2925 = vld [vmem:[#allocation7 + $0x148] sm:$0xf]
        %v2926 = vld [vmem:[#allocation7 + $0x14c] sm:$0xf]
        %v2927 = vld [vmem:[#allocation7 + $0x150] sm:$0xf]
        %v2928 = vld [vmem:[#allocation7 + $0x154] sm:$0xf]
        %v2929 = vld [vmem:[#allocation7 + $0x158] sm:$0xf]
        %v2930 = vld [vmem:[#allocation7 + $0x15c] sm:$0xf]
        %v2931 = vld [vmem:[#allocation7 + $0x160] sm:$0xf]
        %v2932 = vld [vmem:[#allocation7 + $0x164] sm:$0xf]
        %v2933 = vld [vmem:[#allocation7 + $0x168] sm:$0xf]
        %v2934 = vld [vmem:[#allocation7 + $0x16c] sm:$0xf]
        %v2935 = vld [vmem:[#allocation7 + $0x170] sm:$0xf]
        %v2936 = vld [vmem:[#allocation7 + $0x174] sm:$0xf]
        %v2937 = vld [vmem:[#allocation7 + $0x178] sm:$0xf]
        %v2938 = vld [vmem:[#allocation7 + $0x17c] sm:$0xf]
        %v2955 = vunpack.c.l.b16 %v2923
        %v2956 = vunpack.c.l.b16 %v2924
        %v2957 = vunpack.c.l.b16 %v2925
        %v2958 = vunpack.c.l.b16 %v2926
        %v2959 = vunpack.c.l.b16 %v2927
        %v2960 = vunpack.c.l.b16 %v2928
        %v2961 = vunpack.c.l.b16 %v2929
        %v2962 = vunpack.c.l.b16 %v2930
        %v2963 = vunpack.c.l.b16 %v2931
        %v2964 = vunpack.c.l.b16 %v2932
        %v2965 = vunpack.c.l.b16 %v2933
        %v2966 = vunpack.c.l.b16 %v2934
        %v2967 = vunpack.c.l.b16 %v2935
        %v2968 = vunpack.c.l.b16 %v2936
        %v2969 = vunpack.c.l.b16 %v2937
        %v2970 = vunpack.c.l.b16 %v2938
        %v2971 = vpack.c.b16 %v2956, %v2955
        %v2972 = vpack.c.b16 %v2958, %v2957
        %v2973 = vpack.c.b16 %v2960, %v2959
        %v2974 = vpack.c.b16 %v2962, %v2961
        %v2975 = vpack.c.b16 %v2964, %v2963
        %v2976 = vpack.c.b16 %v2966, %v2965
        %v2977 = vpack.c.b16 %v2968, %v2967
        %v2978 = vpack.c.b16 %v2970, %v2969
        %2987 = vmatprep.subr.bf16.mxu0 0
        %2988 = vmatpush1.bf16.msra.mxu0 %v2971
        %2989 = vmatprep.subr.bf16.mxu0 0
        %2990 = vmatpush1.bf16.msra.mxu0 %v2972
        %2991 = vmatprep.subr.bf16.mxu0 0
        %2992 = vmatpush1.bf16.msra.mxu0 %v2973
        %2993 = vmatprep.subr.bf16.mxu0 0
        %2994 = vmatpush1.bf16.msra.mxu0 %v2974
        %2995 = vmatprep.subr.bf16.mxu0 0
        %2996 = vmatpush1.bf16.msra.mxu0 %v2975
        %2997 = vmatprep.subr.bf16.mxu0 0
        %2998 = vmatpush1.bf16.msra.mxu0 %v2976
        %2999 = vmatprep.subr.bf16.mxu0 0
        %3000 = vmatpush1.bf16.msra.mxu0 %v2977
        %3001 = vmatprep.subr.bf16.mxu0 0
        %3002 = vmatpush1.bf16.msra.mxu0 %v2978
        %3003 = vmatprep.subr.bf16.mxu0 0
        %3004 = vmatpush1.bf16.msra.mxu0 0
        %3005 = vmatprep.subr.bf16.mxu0 0
        %3006 = vmatpush1.bf16.msra.mxu0 0
        %3007 = vmatprep.subr.bf16.mxu0 0
        %3008 = vmatpush1.bf16.msra.mxu0 0
        %3009 = vmatprep.subr.bf16.mxu0 0
        %3010 = vmatpush1.bf16.msra.mxu0 0
        %3011 = vmatprep.subr.bf16.mxu0 0
        %3012 = vmatpush1.bf16.msra.mxu0 0
        %3013 = vmatprep.subr.bf16.mxu0 0
        %3014 = vmatpush1.bf16.msra.mxu0 0
        %3015 = vmatprep.subr.bf16.mxu0 0
        %3016 = vmatpush1.bf16.msra.mxu0 0
        %3017 = vmatprep.subr.bf16.mxu0 0
        %3018 = vmatpush1.bf16.msra.mxu0 0
        %3019 = vmatprep.mubr.bf16.mxu0 0
        %3020 = vmatmul.mubr.bf16.gmra.mrb[0].mxu0 %v2915
        %v3021 = vpop.f32.mrb[0].mxu0
        %v3022 = vadd.f32 0.0, %v3021
        %v3023 = vpop.f32.mrb[0].mxu0
        %v3024 = vpop.f32.mrb[0].mxu0
        %v3025 = vadd.f32 0.0, %v3024
        %v3026 = vpop.f32.mrb[0].mxu0
        %3027 = vmatprep.mubr.bf16.mxu0 0
        %3028 = vmatmul.mubr.bf16.gmra.mrb[0].mxu0 %v2916
        %v3029 = vpop.f32.mrb[0].mxu0
        %v3030 = vadd.f32 0.0, %v3029
        %v3031 = vpop.f32.mrb[0].mxu0
        %v3032 = vpop.f32.mrb[0].mxu0
        %v3033 = vadd.f32 0.0, %v3032
        %v3034 = vpop.f32.mrb[0].mxu0
        %3035 = vmatprep.mubr.bf16.mxu0 0
        %3036 = vmatmul.mubr.bf16.gmra.mrb[0].mxu0 %v2917
        %v3037 = vpop.f32.mrb[0].mxu0
        %v3038 = vadd.f32 0.0, %v3037
        %v3039 = vpop.f32.mrb[0].mxu0
        %v3040 = vpop.f32.mrb[0].mxu0
        %v3041 = vadd.f32 0.0, %v3040
        %v3042 = vpop.f32.mrb[0].mxu0
        %3043 = vmatprep.mubr.bf16.mxu0 0
        %3044 = vmatmul.mubr.bf16.gmra.mrb[0].mxu0 %v2918
        %v3045 = vpop.f32.mrb[0].mxu0
        %v3046 = vadd.f32 0.0, %v3045
        %v3047 = vpop.f32.mrb[0].mxu0
        %v3048 = vpop.f32.mrb[0].mxu0
        %v3049 = vadd.f32 0.0, %v3048
        %v3050 = vpop.f32.mrb[0].mxu0
        %3051 = vmatprep.mubr.bf16.mxu0 0
        %3052 = vmatmul.mubr.bf16.gmra.mrb[0].mxu0 %v2919
        %v3053 = vpop.f32.mrb[0].mxu0
        %v3054 = vadd.f32 0.0, %v3053
        %v3055 = vpop.f32.mrb[0].mxu0
        %v3056 = vpop.f32.mrb[0].mxu0
        %v3057 = vadd.f32 0.0, %v3056
        %v3058 = vpop.f32.mrb[0].mxu0
        %3059 = vmatprep.mubr.bf16.mxu0 0
        %3060 = vmatmul.mubr.bf16.gmra.mrb[0].mxu0 %v2920
        %v3061 = vpop.f32.mrb[0].mxu0
        %v3062 = vadd.f32 0.0, %v3061
        %v3063 = vpop.f32.mrb[0].mxu0
        %v3064 = vpop.f32.mrb[0].mxu0
        %v3065 = vadd.f32 0.0, %v3064
        %v3066 = vpop.f32.mrb[0].mxu0
        %3067 = vmatprep.mubr.bf16.mxu0 0
        %3068 = vmatmul.mubr.bf16.gmra.mrb[0].mxu0 %v2921
        %v3069 = vpop.f32.mrb[0].mxu0
        %v3070 = vadd.f32 0.0, %v3069
        %v3071 = vpop.f32.mrb[0].mxu0
        %v3072 = vpop.f32.mrb[0].mxu0
        %v3073 = vadd.f32 0.0, %v3072
        %v3074 = vpop.f32.mrb[0].mxu0
        %3075 = vmatprep.mubr.bf16.mxu0 0
        %3076 = vmatmul.mubr.bf16.gmra.mrb[0].mxu0 %v2922
        %v3077 = vpop.f32.mrb[0].mxu0
        %v3078 = vadd.f32 0.0, %v3077
        %v3079 = vpop.f32.mrb[0].mxu0
        %v3080 = vpop.f32.mrb[0].mxu0
        %v3081 = vadd.f32 0.0, %v3080
        %v3082 = vpop.f32.mrb[0].mxu0
        %3083 = vdwg.mxu0
        %v3100 = vunpack.c.l.b16 %v2802
        %v3101 = vunpack.c.l.b16 %v2803
        %v3102 = vunpack.c.l.b16 %v2804
        %v3103 = vunpack.c.l.b16 %v2805
        %v3104 = vunpack.c.l.b16 %v2806
        %v3105 = vunpack.c.l.b16 %v2807
        %v3106 = vunpack.c.l.b16 %v2808
        %v3107 = vunpack.c.l.b16 %v2809
        %v3108 = vunpack.c.l.b16 %v2810
        %v3109 = vunpack.c.l.b16 %v2811
        %v3110 = vunpack.c.l.b16 %v2812
        %v3111 = vunpack.c.l.b16 %v2813
        %v3112 = vunpack.c.l.b16 %v2814
        %v3113 = vunpack.c.l.b16 %v2815
        %v3114 = vunpack.c.l.b16 %v2816
        %v3115 = vunpack.c.l.b16 %v2817
        %v3116 = vpack.c.b16 %v3101, %v3100
        %v3117 = vpack.c.b16 %v3103, %v3102
        %v3118 = vpack.c.b16 %v3105, %v3104
        %v3119 = vpack.c.b16 %v3107, %v3106
        %v3120 = vpack.c.b16 %v3109, %v3108
        %v3121 = vpack.c.b16 %v3111, %v3110
        %v3122 = vpack.c.b16 %v3113, %v3112
        %v3123 = vpack.c.b16 %v3115, %v3114
        %3132 = vmatprep.subr.bf16.mxu0 0
        %3133 = vmatpush1.bf16.msra.mxu0 %v3116
        %3134 = vmatprep.subr.bf16.mxu0 0
        %3135 = vmatpush1.bf16.msra.mxu0 %v3117
        %3136 = vmatprep.subr.bf16.mxu0 0
        %3137 = vmatpush1.bf16.msra.mxu0 %v3118
        %3138 = vmatprep.subr.bf16.mxu0 0
        %3139 = vmatpush1.bf16.msra.mxu0 %v3119
        %3140 = vmatprep.subr.bf16.mxu0 0
        %3141 = vmatpush1.bf16.msra.mxu0 %v3120
        %3142 = vmatprep.subr.bf16.mxu0 0
        %3143 = vmatpush1.bf16.msra.mxu0 %v3121
        %3144 = vmatprep.subr.bf16.mxu0 0
        %3145 = vmatpush1.bf16.msra.mxu0 %v3122
        %3146 = vmatprep.subr.bf16.mxu0 0
        %3147 = vmatpush1.bf16.msra.mxu0 %v3123
        %3148 = vmatprep.subr.bf16.mxu0 0
        %3149 = vmatpush1.bf16.msra.mxu0 0
        %3150 = vmatprep.subr.bf16.mxu0 0
        %3151 = vmatpush1.bf16.msra.mxu0 0
        %3152 = vmatprep.subr.bf16.mxu0 0
        %3153 = vmatpush1.bf16.msra.mxu0 0
        %3154 = vmatprep.subr.bf16.mxu0 0
        %3155 = vmatpush1.bf16.msra.mxu0 0
        %3156 = vmatprep.subr.bf16.mxu0 0
        %3157 = vmatpush1.bf16.msra.mxu0 0
        %3158 = vmatprep.subr.bf16.mxu0 0
        %3159 = vmatpush1.bf16.msra.mxu0 0
        %3160 = vmatprep.subr.bf16.mxu0 0
        %3161 = vmatpush1.bf16.msra.mxu0 0
        %3162 = vmatprep.subr.bf16.mxu0 0
        %3163 = vmatpush1.bf16.msra.mxu0 0
        %3164 = vmatprep.mubr.bf16.mxu0 0
        %3165 = vmatmul.mubr.bf16.gmra.mrb[0].mxu0 %v2794
        %v3166 = vpop.f32.mrb[0].mxu0
        %v3167 = vadd.f32 %v3022, %v3166
        %v3168 = vpop.f32.mrb[0].mxu0
        %v3169 = vpop.f32.mrb[0].mxu0
        %v3170 = vadd.f32 %v3025, %v3169
        %v3171 = vpop.f32.mrb[0].mxu0
        %3172 = vmatprep.mubr.bf16.mxu0 0
        %3173 = vmatmul.mubr.bf16.gmra.mrb[0].mxu0 %v2795
        %v3174 = vpop.f32.mrb[0].mxu0
        %v3175 = vadd.f32 %v3030, %v3174
        %v3176 = vpop.f32.mrb[0].mxu0
        %v3177 = vpop.f32.mrb[0].mxu0
        %v3178 = vadd.f32 %v3033, %v3177
        %v3179 = vpop.f32.mrb[0].mxu0
        %3180 = vmatprep.mubr.bf16.mxu0 0
        %3181 = vmatmul.mubr.bf16.gmra.mrb[0].mxu0 %v2796
        %v3182 = vpop.f32.mrb[0].mxu0
        %v3183 = vadd.f32 %v3038, %v3182
        %v3184 = vpop.f32.mrb[0].mxu0
        %v3185 = vpop.f32.mrb[0].mxu0
        %v3186 = vadd.f32 %v3041, %v3185
        %v3187 = vpop.f32.mrb[0].mxu0
        %3188 = vmatprep.mubr.bf16.mxu0 0
        %3189 = vmatmul.mubr.bf16.gmra.mrb[0].mxu0 %v2797
        %v3190 = vpop.f32.mrb[0].mxu0
        %v3191 = vadd.f32 %v3046, %v3190
        %v3192 = vpop.f32.mrb[0].mxu0
        %v3193 = vpop.f32.mrb[0].mxu0
        %v3194 = vadd.f32 %v3049, %v3193
        %v3195 = vpop.f32.mrb[0].mxu0
        %3196 = vmatprep.mubr.bf16.mxu0 0
        %3197 = vmatmul.mubr.bf16.gmra.mrb[0].mxu0 %v2798
        %v3198 = vpop.f32.mrb[0].mxu0
        %v3199 = vadd.f32 %v3054, %v3198
        %v3200 = vpop.f32.mrb[0].mxu0
        %v3201 = vpop.f32.mrb[0].mxu0
        %v3202 = vadd.f32 %v3057, %v3201
        %v3203 = vpop.f32.mrb[0].mxu0
        %3204 = vmatprep.mubr.bf16.mxu0 0
        %3205 = vmatmul.mubr.bf16.gmra.mrb[0].mxu0 %v2799
        %v3206 = vpop.f32.mrb[0].mxu0
        %v3207 = vadd.f32 %v3062, %v3206
        %v3208 = vpop.f32.mrb[0].mxu0
        %v3209 = vpop.f32.mrb[0].mxu0
        %v3210 = vadd.f32 %v3065, %v3209
        %v3211 = vpop.f32.mrb[0].mxu0
        %3212 = vmatprep.mubr.bf16.mxu0 0
        %3213 = vmatmul.mubr.bf16.gmra.mrb[0].mxu0 %v2800
        %v3214 = vpop.f32.mrb[0].mxu0
        %v3215 = vadd.f32 %v3070, %v3214
        %v3216 = vpop.f32.mrb[0].mxu0
        %v3217 = vpop.f32.mrb[0].mxu0
        %v3218 = vadd.f32 %v3073, %v3217
        %v3219 = vpop.f32.mrb[0].mxu0
        %3220 = vmatprep.mubr.bf16.mxu0 0
        %3221 = vmatmul.mubr.bf16.gmra.mrb[0].mxu0 %v2801
        %v3222 = vpop.f32.mrb[0].mxu0
        %v3223 = vadd.f32 %v3078, %v3222
        %v3224 = vpop.f32.mrb[0].mxu0
        %v3225 = vpop.f32.mrb[0].mxu0
        %v3226 = vadd.f32 %v3081, %v3225
        %v3227 = vpop.f32.mrb[0].mxu0
        %3228 = vdwg.mxu0
        %3229 = vmatprep.subr.bf16.mxu0 0
        %3230 = vmatpush1.bf16.msra.mxu0 %v2794
        %3231 = vmatprep.subr.bf16.mxu0 0
        %3232 = vmatpush1.bf16.msra.mxu0 %v2795
        %3233 = vmatprep.subr.bf16.mxu0 0
        %3234 = vmatpush1.bf16.msra.mxu0 %v2796
        %3235 = vmatprep.subr.bf16.mxu0 0
        %3236 = vmatpush1.bf16.msra.mxu0 %v2797
        %3237 = vmatprep.subr.bf16.mxu0 0
        %3238 = vmatpush1.bf16.msra.mxu0 %v2798
        %3239 = vmatprep.subr.bf16.mxu0 0
        %3240 = vmatpush1.bf16.msra.mxu0 %v2799
        %3241 = vmatprep.subr.bf16.mxu0 0
        %3242 = vmatpush1.bf16.msra.mxu0 %v2800
        %3243 = vmatprep.subr.bf16.mxu0 0
        %3244 = vmatpush1.bf16.msra.mxu0 %v2801
        %3245 = vmatprep.subr.bf16.mxu0 0
        %3246 = vmatpush1.bf16.msra.mxu0 0
        %3247 = vmatprep.subr.bf16.mxu0 0
        %3248 = vmatpush1.bf16.msra.mxu0 0
        %3249 = vmatprep.subr.bf16.mxu0 0
        %3250 = vmatpush1.bf16.msra.mxu0 0
        %3251 = vmatprep.subr.bf16.mxu0 0
        %3252 = vmatpush1.bf16.msra.mxu0 0
        %3253 = vmatprep.subr.bf16.mxu0 0
        %3254 = vmatpush1.bf16.msra.mxu0 0
        %3255 = vmatprep.subr.bf16.mxu0 0
        %3256 = vmatpush1.bf16.msra.mxu0 0
        %3257 = vmatprep.subr.bf16.mxu0 0
        %3258 = vmatpush1.bf16.msra.mxu0 0
        %3259 = vmatprep.subr.bf16.mxu0 0
        %3260 = vmatpush1.bf16.msra.mxu0 0
        %3261 = vmatprep.mubr.bf16.mxu0 0
        %3262 = vmatmul.mubr.bf16.gmra.mrb[0].mxu0 %v1076
        %v3263 = vpop.f32.mrb[0].mxu0
        %v3264 = vadd.f32 0.0, %v3263
        %v3265 = vpop.f32.mrb[0].mxu0
        %v3266 = vpop.f32.mrb[0].mxu0
        %v3267 = vadd.f32 0.0, %v3266
        %v3268 = vpop.f32.mrb[0].mxu0
        %3269 = vmatprep.mubr.bf16.mxu0 0
        %3270 = vmatmul.mubr.bf16.gmra.mrb[0].mxu0 %v1077
        %v3271 = vpop.f32.mrb[0].mxu0
        %v3272 = vadd.f32 0.0, %v3271
        %v3273 = vpop.f32.mrb[0].mxu0
        %v3274 = vpop.f32.mrb[0].mxu0
        %v3275 = vadd.f32 0.0, %v3274
        %v3276 = vpop.f32.mrb[0].mxu0
        %3277 = vmatprep.mubr.bf16.mxu0 0
        %3278 = vmatmul.mubr.bf16.gmra.mrb[0].mxu0 %v1078
        %v3279 = vpop.f32.mrb[0].mxu0
        %v3280 = vadd.f32 0.0, %v3279
        %v3281 = vpop.f32.mrb[0].mxu0
        %v3282 = vpop.f32.mrb[0].mxu0
        %v3283 = vadd.f32 0.0, %v3282
        %v3284 = vpop.f32.mrb[0].mxu0
        %3285 = vmatprep.mubr.bf16.mxu0 0
        %3286 = vmatmul.mubr.bf16.gmra.mrb[0].mxu0 %v1079
        %v3287 = vpop.f32.mrb[0].mxu0
        %v3288 = vadd.f32 0.0, %v3287
        %v3289 = vpop.f32.mrb[0].mxu0
        %v3290 = vpop.f32.mrb[0].mxu0
        %v3291 = vadd.f32 0.0, %v3290
        %v3292 = vpop.f32.mrb[0].mxu0
        %3293 = vmatprep.mubr.bf16.mxu0 0
        %3294 = vmatmul.mubr.bf16.gmra.mrb[0].mxu0 %v1080
        %v3295 = vpop.f32.mrb[0].mxu0
        %v3296 = vadd.f32 0.0, %v3295
        %v3297 = vpop.f32.mrb[0].mxu0
        %v3298 = vpop.f32.mrb[0].mxu0
        %v3299 = vadd.f32 0.0, %v3298
        %v3300 = vpop.f32.mrb[0].mxu0
        %3301 = vmatprep.mubr.bf16.mxu0 0
        %3302 = vmatmul.mubr.bf16.gmra.mrb[0].mxu0 %v1081
        %v3303 = vpop.f32.mrb[0].mxu0
        %v3304 = vadd.f32 0.0, %v3303
        %v3305 = vpop.f32.mrb[0].mxu0
        %v3306 = vpop.f32.mrb[0].mxu0
        %v3307 = vadd.f32 0.0, %v3306
        %v3308 = vpop.f32.mrb[0].mxu0
        %3309 = vmatprep.mubr.bf16.mxu0 0
        %3310 = vmatmul.mubr.bf16.gmra.mrb[0].mxu0 %v1082
        %v3311 = vpop.f32.mrb[0].mxu0
        %v3312 = vadd.f32 0.0, %v3311
        %v3313 = vpop.f32.mrb[0].mxu0
        %v3314 = vpop.f32.mrb[0].mxu0
        %v3315 = vadd.f32 0.0, %v3314
        %v3316 = vpop.f32.mrb[0].mxu0
        %3317 = vmatprep.mubr.bf16.mxu0 0
        %3318 = vmatmul.mubr.bf16.gmra.mrb[0].mxu0 %v1083
        %v3319 = vpop.f32.mrb[0].mxu0
        %v3320 = vadd.f32 0.0, %v3319
        %v3321 = vpop.f32.mrb[0].mxu0
        %v3322 = vpop.f32.mrb[0].mxu0
        %v3323 = vadd.f32 0.0, %v3322
        %v3324 = vpop.f32.mrb[0].mxu0
        %3325 = vdwg.mxu0
        %v3326 = vpack.c.bf16 %v3267, %v3264
        %v3327 = vpack.c.bf16 %v3275, %v3272
        %v3328 = vpack.c.bf16 %v3283, %v3280
        %v3329 = vpack.c.bf16 %v3291, %v3288
        %v3330 = vpack.c.bf16 %v3299, %v3296
        %v3331 = vpack.c.bf16 %v3307, %v3304
        %v3332 = vpack.c.bf16 %v3315, %v3312
        %v3333 = vpack.c.bf16 %v3323, %v3320
        %v3334 = vld [vmem:[#allocation7 + $0x180] sm:$0xf]
        %v3335 = vld [vmem:[#allocation7 + $0x184] sm:$0xf]
        %v3336 = vld [vmem:[#allocation7 + $0x188] sm:$0xf]
        %v3337 = vld [vmem:[#allocation7 + $0x18c] sm:$0xf]
        %v3338 = vld [vmem:[#allocation7 + $0x190] sm:$0xf]
        %v3339 = vld [vmem:[#allocation7 + $0x194] sm:$0xf]
        %v3340 = vld [vmem:[#allocation7 + $0x198] sm:$0xf]
        %v3341 = vld [vmem:[#allocation7 + $0x19c] sm:$0xf]
        %v3342 = vld [vmem:[#allocation7 + $0x1a0] sm:$0xf]
        %v3343 = vld [vmem:[#allocation7 + $0x1a4] sm:$0xf]
        %v3344 = vld [vmem:[#allocation7 + $0x1a8] sm:$0xf]
        %v3345 = vld [vmem:[#allocation7 + $0x1ac] sm:$0xf]
        %v3346 = vld [vmem:[#allocation7 + $0x1b0] sm:$0xf]
        %v3347 = vld [vmem:[#allocation7 + $0x1b4] sm:$0xf]
        %v3348 = vld [vmem:[#allocation7 + $0x1b8] sm:$0xf]
        %v3349 = vld [vmem:[#allocation7 + $0x1bc] sm:$0xf]
        %v3366 = vunpack.c.l.b16 %v3334
        %v3367 = vunpack.c.l.b16 %v3335
        %v3368 = vunpack.c.l.b16 %v3336
        %v3369 = vunpack.c.l.b16 %v3337
        %v3370 = vunpack.c.l.b16 %v3338
        %v3371 = vunpack.c.l.b16 %v3339
        %v3372 = vunpack.c.l.b16 %v3340
        %v3373 = vunpack.c.l.b16 %v3341
        %v3374 = vunpack.c.l.b16 %v3342
        %v3375 = vunpack.c.l.b16 %v3343
        %v3376 = vunpack.c.l.b16 %v3344
        %v3377 = vunpack.c.l.b16 %v3345
        %v3378 = vunpack.c.l.b16 %v3346
        %v3379 = vunpack.c.l.b16 %v3347
        %v3380 = vunpack.c.l.b16 %v3348
        %v3381 = vunpack.c.l.b16 %v3349
        %v3382 = vpack.c.b16 %v3367, %v3366
        %v3383 = vpack.c.b16 %v3369, %v3368
        %v3384 = vpack.c.b16 %v3371, %v3370
        %v3385 = vpack.c.b16 %v3373, %v3372
        %v3386 = vpack.c.b16 %v3375, %v3374
        %v3387 = vpack.c.b16 %v3377, %v3376
        %v3388 = vpack.c.b16 %v3379, %v3378
        %v3389 = vpack.c.b16 %v3381, %v3380
        %3398 = vmatprep.subr.bf16.mxu0 0
        %3399 = vmatpush1.bf16.msra.mxu0 %v3382
        %3400 = vmatprep.subr.bf16.mxu0 0
        %3401 = vmatpush1.bf16.msra.mxu0 %v3383
        %3402 = vmatprep.subr.bf16.mxu0 0
        %3403 = vmatpush1.bf16.msra.mxu0 %v3384
        %3404 = vmatprep.subr.bf16.mxu0 0
        %3405 = vmatpush1.bf16.msra.mxu0 %v3385
        %3406 = vmatprep.subr.bf16.mxu0 0
        %3407 = vmatpush1.bf16.msra.mxu0 %v3386
        %3408 = vmatprep.subr.bf16.mxu0 0
        %3409 = vmatpush1.bf16.msra.mxu0 %v3387
        %3410 = vmatprep.subr.bf16.mxu0 0
        %3411 = vmatpush1.bf16.msra.mxu0 %v3388
        %3412 = vmatprep.subr.bf16.mxu0 0
        %3413 = vmatpush1.bf16.msra.mxu0 %v3389
        %3414 = vmatprep.subr.bf16.mxu0 0
        %3415 = vmatpush1.bf16.msra.mxu0 0
        %3416 = vmatprep.subr.bf16.mxu0 0
        %3417 = vmatpush1.bf16.msra.mxu0 0
        %3418 = vmatprep.subr.bf16.mxu0 0
        %3419 = vmatpush1.bf16.msra.mxu0 0
        %3420 = vmatprep.subr.bf16.mxu0 0
        %3421 = vmatpush1.bf16.msra.mxu0 0
        %3422 = vmatprep.subr.bf16.mxu0 0
        %3423 = vmatpush1.bf16.msra.mxu0 0
        %3424 = vmatprep.subr.bf16.mxu0 0
        %3425 = vmatpush1.bf16.msra.mxu0 0
        %3426 = vmatprep.subr.bf16.mxu0 0
        %3427 = vmatpush1.bf16.msra.mxu0 0
        %3428 = vmatprep.subr.bf16.mxu0 0
        %3429 = vmatpush1.bf16.msra.mxu0 0
        %3430 = vmatprep.mubr.bf16.mxu0 0
        %3431 = vmatmul.mubr.bf16.gmra.mrb[0].mxu0 %v3326
        %v3432 = vpop.f32.mrb[0].mxu0
        %v3433 = vadd.f32 0.0, %v3432
        %v3434 = vpop.f32.mrb[0].mxu0
        %v3435 = vpop.f32.mrb[0].mxu0
        %v3436 = vadd.f32 0.0, %v3435
        %v3437 = vpop.f32.mrb[0].mxu0
        %3438 = vmatprep.mubr.bf16.mxu0 0
        %3439 = vmatmul.mubr.bf16.gmra.mrb[0].mxu0 %v3327
        %v3440 = vpop.f32.mrb[0].mxu0
        %v3441 = vadd.f32 0.0, %v3440
        %v3442 = vpop.f32.mrb[0].mxu0
        %v3443 = vpop.f32.mrb[0].mxu0
        %v3444 = vadd.f32 0.0, %v3443
        %v3445 = vpop.f32.mrb[0].mxu0
        %3446 = vmatprep.mubr.bf16.mxu0 0
        %3447 = vmatmul.mubr.bf16.gmra.mrb[0].mxu0 %v3328
        %v3448 = vpop.f32.mrb[0].mxu0
        %v3449 = vadd.f32 0.0, %v3448
        %v3450 = vpop.f32.mrb[0].mxu0
        %v3451 = vpop.f32.mrb[0].mxu0
        %v3452 = vadd.f32 0.0, %v3451
        %v3453 = vpop.f32.mrb[0].mxu0
        %3454 = vmatprep.mubr.bf16.mxu0 0
        %3455 = vmatmul.mubr.bf16.gmra.mrb[0].mxu0 %v3329
        %v3456 = vpop.f32.mrb[0].mxu0
        %v3457 = vadd.f32 0.0, %v3456
        %v3458 = vpop.f32.mrb[0].mxu0
        %v3459 = vpop.f32.mrb[0].mxu0
        %v3460 = vadd.f32 0.0, %v3459
        %v3461 = vpop.f32.mrb[0].mxu0
        %3462 = vmatprep.mubr.bf16.mxu0 0
        %3463 = vmatmul.mubr.bf16.gmra.mrb[0].mxu0 %v3330
        %v3464 = vpop.f32.mrb[0].mxu0
        %v3465 = vadd.f32 0.0, %v3464
        %v3466 = vpop.f32.mrb[0].mxu0
        %v3467 = vpop.f32.mrb[0].mxu0
        %v3468 = vadd.f32 0.0, %v3467
        %v3469 = vpop.f32.mrb[0].mxu0
        %3470 = vmatprep.mubr.bf16.mxu0 0
        %3471 = vmatmul.mubr.bf16.gmra.mrb[0].mxu0 %v3331
        %v3472 = vpop.f32.mrb[0].mxu0
        %v3473 = vadd.f32 0.0, %v3472
        %v3474 = vpop.f32.mrb[0].mxu0
        %v3475 = vpop.f32.mrb[0].mxu0
        %v3476 = vadd.f32 0.0, %v3475
        %v3477 = vpop.f32.mrb[0].mxu0
        %3478 = vmatprep.mubr.bf16.mxu0 0
        %3479 = vmatmul.mubr.bf16.gmra.mrb[0].mxu0 %v3332
        %v3480 = vpop.f32.mrb[0].mxu0
        %v3481 = vadd.f32 0.0, %v3480
        %v3482 = vpop.f32.mrb[0].mxu0
        %v3483 = vpop.f32.mrb[0].mxu0
        %v3484 = vadd.f32 0.0, %v3483
        %v3485 = vpop.f32.mrb[0].mxu0
        %3486 = vmatprep.mubr.bf16.mxu0 0
        %3487 = vmatmul.mubr.bf16.gmra.mrb[0].mxu0 %v3333
        %v3488 = vpop.f32.mrb[0].mxu0
        %v3489 = vadd.f32 0.0, %v3488
        %v3490 = vpop.f32.mrb[0].mxu0
        %v3491 = vpop.f32.mrb[0].mxu0
        %v3492 = vadd.f32 0.0, %v3491
        %v3493 = vpop.f32.mrb[0].mxu0
        %3494 = vdwg.mxu0
        %v3495 = vadd.f32 %v3167, %v3433
        %v3496 = vadd.f32 %v3170, %v3436
        %v3497 = vadd.f32 %v3175, %v3441
        %v3498 = vadd.f32 %v3178, %v3444
        %v3499 = vadd.f32 %v3183, %v3449
        %v3500 = vadd.f32 %v3186, %v3452
        %v3501 = vadd.f32 %v3191, %v3457
        %v3502 = vadd.f32 %v3194, %v3460
        %v3503 = vadd.f32 %v3199, %v3465
        %v3504 = vadd.f32 %v3202, %v3468
        %v3505 = vadd.f32 %v3207, %v3473
        %v3506 = vadd.f32 %v3210, %v3476
        %v3507 = vadd.f32 %v3215, %v3481
        %v3508 = vadd.f32 %v3218, %v3484
        %v3509 = vadd.f32 %v3223, %v3489
        %v3510 = vadd.f32 %v3226, %v3492
        %3511 = vmatprep.subr.bf16.mxu0 0
        %3512 = vmatpush1.bf16.msra.mxu0 %v2794
        %3513 = vmatprep.subr.bf16.mxu0 0
        %3514 = vmatpush1.bf16.msra.mxu0 %v2795
        %3515 = vmatprep.subr.bf16.mxu0 0
        %3516 = vmatpush1.bf16.msra.mxu0 %v2796
        %3517 = vmatprep.subr.bf16.mxu0 0
        %3518 = vmatpush1.bf16.msra.mxu0 %v2797
        %3519 = vmatprep.subr.bf16.mxu0 0
        %3520 = vmatpush1.bf16.msra.mxu0 %v2798
        %3521 = vmatprep.subr.bf16.mxu0 0
        %3522 = vmatpush1.bf16.msra.mxu0 %v2799
        %3523 = vmatprep.subr.bf16.mxu0 0
        %3524 = vmatpush1.bf16.msra.mxu0 %v2800
        %3525 = vmatprep.subr.bf16.mxu0 0
        %3526 = vmatpush1.bf16.msra.mxu0 %v2801
        %3527 = vmatprep.subr.bf16.mxu0 0
        %3528 = vmatpush1.bf16.msra.mxu0 0
        %3529 = vmatprep.subr.bf16.mxu0 0
        %3530 = vmatpush1.bf16.msra.mxu0 0
        %3531 = vmatprep.subr.bf16.mxu0 0
        %3532 = vmatpush1.bf16.msra.mxu0 0
        %3533 = vmatprep.subr.bf16.mxu0 0
        %3534 = vmatpush1.bf16.msra.mxu0 0
        %3535 = vmatprep.subr.bf16.mxu0 0
        %3536 = vmatpush1.bf16.msra.mxu0 0
        %3537 = vmatprep.subr.bf16.mxu0 0
        %3538 = vmatpush1.bf16.msra.mxu0 0
        %3539 = vmatprep.subr.bf16.mxu0 0
        %3540 = vmatpush1.bf16.msra.mxu0 0
        %3541 = vmatprep.subr.bf16.mxu0 0
        %3542 = vmatpush1.bf16.msra.mxu0 0
        %3543 = vmatprep.mubr.bf16.mxu0 0
        %3544 = vmatmul.mubr.bf16.gmra.mrb[0].mxu0 %v1423
        %v3545 = vpop.f32.mrb[0].mxu0
        %v3546 = vadd.f32 0.0, %v3545
        %v3547 = vpop.f32.mrb[0].mxu0
        %v3548 = vpop.f32.mrb[0].mxu0
        %v3549 = vadd.f32 0.0, %v3548
        %v3550 = vpop.f32.mrb[0].mxu0
        %3551 = vmatprep.mubr.bf16.mxu0 0
        %3552 = vmatmul.mubr.bf16.gmra.mrb[0].mxu0 %v1424
        %v3553 = vpop.f32.mrb[0].mxu0
        %v3554 = vadd.f32 0.0, %v3553
        %v3555 = vpop.f32.mrb[0].mxu0
        %v3556 = vpop.f32.mrb[0].mxu0
        %v3557 = vadd.f32 0.0, %v3556
        %v3558 = vpop.f32.mrb[0].mxu0
        %3559 = vmatprep.mubr.bf16.mxu0 0
        %3560 = vmatmul.mubr.bf16.gmra.mrb[0].mxu0 %v1425
        %v3561 = vpop.f32.mrb[0].mxu0
        %v3562 = vadd.f32 0.0, %v3561
        %v3563 = vpop.f32.mrb[0].mxu0
        %v3564 = vpop.f32.mrb[0].mxu0
        %v3565 = vadd.f32 0.0, %v3564
        %v3566 = vpop.f32.mrb[0].mxu0
        %3567 = vmatprep.mubr.bf16.mxu0 0
        %3568 = vmatmul.mubr.bf16.gmra.mrb[0].mxu0 %v1426
        %v3569 = vpop.f32.mrb[0].mxu0
        %v3570 = vadd.f32 0.0, %v3569
        %v3571 = vpop.f32.mrb[0].mxu0
        %v3572 = vpop.f32.mrb[0].mxu0
        %v3573 = vadd.f32 0.0, %v3572
        %v3574 = vpop.f32.mrb[0].mxu0
        %3575 = vmatprep.mubr.bf16.mxu0 0
        %3576 = vmatmul.mubr.bf16.gmra.mrb[0].mxu0 %v1427
        %v3577 = vpop.f32.mrb[0].mxu0
        %v3578 = vadd.f32 0.0, %v3577
        %v3579 = vpop.f32.mrb[0].mxu0
        %v3580 = vpop.f32.mrb[0].mxu0
        %v3581 = vadd.f32 0.0, %v3580
        %v3582 = vpop.f32.mrb[0].mxu0
        %3583 = vmatprep.mubr.bf16.mxu0 0
        %3584 = vmatmul.mubr.bf16.gmra.mrb[0].mxu0 %v1428
        %v3585 = vpop.f32.mrb[0].mxu0
        %v3586 = vadd.f32 0.0, %v3585
        %v3587 = vpop.f32.mrb[0].mxu0
        %v3588 = vpop.f32.mrb[0].mxu0
        %v3589 = vadd.f32 0.0, %v3588
        %v3590 = vpop.f32.mrb[0].mxu0
        %3591 = vmatprep.mubr.bf16.mxu0 0
        %3592 = vmatmul.mubr.bf16.gmra.mrb[0].mxu0 %v1429
        %v3593 = vpop.f32.mrb[0].mxu0
        %v3594 = vadd.f32 0.0, %v3593
        %v3595 = vpop.f32.mrb[0].mxu0
        %v3596 = vpop.f32.mrb[0].mxu0
        %v3597 = vadd.f32 0.0, %v3596
        %v3598 = vpop.f32.mrb[0].mxu0
        %3599 = vmatprep.mubr.bf16.mxu0 0
        %3600 = vmatmul.mubr.bf16.gmra.mrb[0].mxu0 %v1430
        %v3601 = vpop.f32.mrb[0].mxu0
        %v3602 = vadd.f32 0.0, %v3601
        %v3603 = vpop.f32.mrb[0].mxu0
        %v3604 = vpop.f32.mrb[0].mxu0
        %v3605 = vadd.f32 0.0, %v3604
        %v3606 = vpop.f32.mrb[0].mxu0
        %3607 = vdwg.mxu0
        %v3608 = vpack.c.bf16 %v3549, %v3546
        %v3609 = vpack.c.bf16 %v3557, %v3554
        %v3610 = vpack.c.bf16 %v3565, %v3562
        %v3611 = vpack.c.bf16 %v3573, %v3570
        %v3612 = vpack.c.bf16 %v3581, %v3578
        %v3613 = vpack.c.bf16 %v3589, %v3586
        %v3614 = vpack.c.bf16 %v3597, %v3594
        %v3615 = vpack.c.bf16 %v3605, %v3602
        %v3616 = vld [vmem:[#allocation7 + $0x1c0] sm:$0xf]
        %v3617 = vld [vmem:[#allocation7 + $0x1c4] sm:$0xf]
        %v3618 = vld [vmem:[#allocation7 + $0x1c8] sm:$0xf]
        %v3619 = vld [vmem:[#allocation7 + $0x1cc] sm:$0xf]
        %v3620 = vld [vmem:[#allocation7 + $0x1d0] sm:$0xf]
        %v3621 = vld [vmem:[#allocation7 + $0x1d4] sm:$0xf]
        %v3622 = vld [vmem:[#allocation7 + $0x1d8] sm:$0xf]
        %v3623 = vld [vmem:[#allocation7 + $0x1dc] sm:$0xf]
        %v3624 = vld [vmem:[#allocation7 + $0x1e0] sm:$0xf]
        %v3625 = vld [vmem:[#allocation7 + $0x1e4] sm:$0xf]
        %v3626 = vld [vmem:[#allocation7 + $0x1e8] sm:$0xf]
        %v3627 = vld [vmem:[#allocation7 + $0x1ec] sm:$0xf]
        %v3628 = vld [vmem:[#allocation7 + $0x1f0] sm:$0xf]
        %v3629 = vld [vmem:[#allocation7 + $0x1f4] sm:$0xf]
        %v3630 = vld [vmem:[#allocation7 + $0x1f8] sm:$0xf]
        %v3631 = vld [vmem:[#allocation7 + $0x1fc] sm:$0xf]
        %v3648 = vunpack.c.l.b16 %v3616
        %v3649 = vunpack.c.l.b16 %v3617
        %v3650 = vunpack.c.l.b16 %v3618
        %v3651 = vunpack.c.l.b16 %v3619
        %v3652 = vunpack.c.l.b16 %v3620
        %v3653 = vunpack.c.l.b16 %v3621
        %v3654 = vunpack.c.l.b16 %v3622
        %v3655 = vunpack.c.l.b16 %v3623
        %v3656 = vunpack.c.l.b16 %v3624
        %v3657 = vunpack.c.l.b16 %v3625
        %v3658 = vunpack.c.l.b16 %v3626
        %v3659 = vunpack.c.l.b16 %v3627
        %v3660 = vunpack.c.l.b16 %v3628
        %v3661 = vunpack.c.l.b16 %v3629
        %v3662 = vunpack.c.l.b16 %v3630
        %v3663 = vunpack.c.l.b16 %v3631
        %v3664 = vpack.c.b16 %v3649, %v3648
        %v3665 = vpack.c.b16 %v3651, %v3650
        %v3666 = vpack.c.b16 %v3653, %v3652
        %v3667 = vpack.c.b16 %v3655, %v3654
        %v3668 = vpack.c.b16 %v3657, %v3656
        %v3669 = vpack.c.b16 %v3659, %v3658
        %v3670 = vpack.c.b16 %v3661, %v3660
        %v3671 = vpack.c.b16 %v3663, %v3662
        %3680 = vmatprep.subr.bf16.mxu0 0
        %3681 = vmatpush1.bf16.msra.mxu0 %v3664
        %3682 = vmatprep.subr.bf16.mxu0 0
        %3683 = vmatpush1.bf16.msra.mxu0 %v3665
        %3684 = vmatprep.subr.bf16.mxu0 0
        %3685 = vmatpush1.bf16.msra.mxu0 %v3666
        %3686 = vmatprep.subr.bf16.mxu0 0
        %3687 = vmatpush1.bf16.msra.mxu0 %v3667
        %3688 = vmatprep.subr.bf16.mxu0 0
        %3689 = vmatpush1.bf16.msra.mxu0 %v3668
        %3690 = vmatprep.subr.bf16.mxu0 0
        %3691 = vmatpush1.bf16.msra.mxu0 %v3669
        %3692 = vmatprep.subr.bf16.mxu0 0
        %3693 = vmatpush1.bf16.msra.mxu0 %v3670
        %3694 = vmatprep.subr.bf16.mxu0 0
        %3695 = vmatpush1.bf16.msra.mxu0 %v3671
        %3696 = vmatprep.subr.bf16.mxu0 0
        %3697 = vmatpush1.bf16.msra.mxu0 0
        %3698 = vmatprep.subr.bf16.mxu0 0
        %3699 = vmatpush1.bf16.msra.mxu0 0
        %3700 = vmatprep.subr.bf16.mxu0 0
        %3701 = vmatpush1.bf16.msra.mxu0 0
        %3702 = vmatprep.subr.bf16.mxu0 0
        %3703 = vmatpush1.bf16.msra.mxu0 0
        %3704 = vmatprep.subr.bf16.mxu0 0
        %3705 = vmatpush1.bf16.msra.mxu0 0
        %3706 = vmatprep.subr.bf16.mxu0 0
        %3707 = vmatpush1.bf16.msra.mxu0 0
        %3708 = vmatprep.subr.bf16.mxu0 0
        %3709 = vmatpush1.bf16.msra.mxu0 0
        %3710 = vmatprep.subr.bf16.mxu0 0
        %3711 = vmatpush1.bf16.msra.mxu0 0
        %3712 = vmatprep.mubr.bf16.mxu0 0
        %3713 = vmatmul.mubr.bf16.gmra.mrb[0].mxu0 %v3608
        %v3714 = vpop.f32.mrb[0].mxu0
        %v3715 = vadd.f32 0.0, %v3714
        %v3716 = vpop.f32.mrb[0].mxu0
        %v3717 = vpop.f32.mrb[0].mxu0
        %v3718 = vadd.f32 0.0, %v3717
        %v3719 = vpop.f32.mrb[0].mxu0
        %3720 = vmatprep.mubr.bf16.mxu0 0
        %3721 = vmatmul.mubr.bf16.gmra.mrb[0].mxu0 %v3609
        %v3722 = vpop.f32.mrb[0].mxu0
        %v3723 = vadd.f32 0.0, %v3722
        %v3724 = vpop.f32.mrb[0].mxu0
        %v3725 = vpop.f32.mrb[0].mxu0
        %v3726 = vadd.f32 0.0, %v3725
        %v3727 = vpop.f32.mrb[0].mxu0
        %3728 = vmatprep.mubr.bf16.mxu0 0
        %3729 = vmatmul.mubr.bf16.gmra.mrb[0].mxu0 %v3610
        %v3730 = vpop.f32.mrb[0].mxu0
        %v3731 = vadd.f32 0.0, %v3730
        %v3732 = vpop.f32.mrb[0].mxu0
        %v3733 = vpop.f32.mrb[0].mxu0
        %v3734 = vadd.f32 0.0, %v3733
        %v3735 = vpop.f32.mrb[0].mxu0
        %3736 = vmatprep.mubr.bf16.mxu0 0
        %3737 = vmatmul.mubr.bf16.gmra.mrb[0].mxu0 %v3611
        %v3738 = vpop.f32.mrb[0].mxu0
        %v3739 = vadd.f32 0.0, %v3738
        %v3740 = vpop.f32.mrb[0].mxu0
        %v3741 = vpop.f32.mrb[0].mxu0
        %v3742 = vadd.f32 0.0, %v3741
        %v3743 = vpop.f32.mrb[0].mxu0
        %3744 = vmatprep.mubr.bf16.mxu0 0
        %3745 = vmatmul.mubr.bf16.gmra.mrb[0].mxu0 %v3612
        %v3746 = vpop.f32.mrb[0].mxu0
        %v3747 = vadd.f32 0.0, %v3746
        %v3748 = vpop.f32.mrb[0].mxu0
        %v3749 = vpop.f32.mrb[0].mxu0
        %v3750 = vadd.f32 0.0, %v3749
        %v3751 = vpop.f32.mrb[0].mxu0
        %3752 = vmatprep.mubr.bf16.mxu0 0
        %3753 = vmatmul.mubr.bf16.gmra.mrb[0].mxu0 %v3613
        %v3754 = vpop.f32.mrb[0].mxu0
        %v3755 = vadd.f32 0.0, %v3754
        %v3756 = vpop.f32.mrb[0].mxu0
        %v3757 = vpop.f32.mrb[0].mxu0
        %v3758 = vadd.f32 0.0, %v3757
        %v3759 = vpop.f32.mrb[0].mxu0
        %3760 = vmatprep.mubr.bf16.mxu0 0
        %3761 = vmatmul.mubr.bf16.gmra.mrb[0].mxu0 %v3614
        %v3762 = vpop.f32.mrb[0].mxu0
        %v3763 = vadd.f32 0.0, %v3762
        %v3764 = vpop.f32.mrb[0].mxu0
        %v3765 = vpop.f32.mrb[0].mxu0
        %v3766 = vadd.f32 0.0, %v3765
        %v3767 = vpop.f32.mrb[0].mxu0
        %3768 = vmatprep.mubr.bf16.mxu0 0
        %3769 = vmatmul.mubr.bf16.gmra.mrb[0].mxu0 %v3615
        %v3770 = vpop.f32.mrb[0].mxu0
        %v3771 = vadd.f32 0.0, %v3770
        %v3772 = vpop.f32.mrb[0].mxu0
        %v3773 = vpop.f32.mrb[0].mxu0
        %v3774 = vadd.f32 0.0, %v3773
        %v3775 = vpop.f32.mrb[0].mxu0
        %3776 = vdwg.mxu0
        %v3777 = vadd.f32 %v3495, %v3715
        %v3778 = vadd.f32 %v3496, %v3718
        %v3779 = vadd.f32 %v3497, %v3723
        %v3780 = vadd.f32 %v3498, %v3726
        %v3781 = vadd.f32 %v3499, %v3731
        %v3782 = vadd.f32 %v3500, %v3734
        %v3783 = vadd.f32 %v3501, %v3739
        %v3784 = vadd.f32 %v3502, %v3742
        %v3785 = vadd.f32 %v3503, %v3747
        %v3786 = vadd.f32 %v3504, %v3750
        %v3787 = vadd.f32 %v3505, %v3755
        %v3788 = vadd.f32 %v3506, %v3758
        %v3789 = vadd.f32 %v3507, %v3763
        %v3790 = vadd.f32 %v3508, %v3766
        %v3791 = vadd.f32 %v3509, %v3771
        %v3792 = vadd.f32 %v3510, %v3774
        %v3793 = vld [vmem:[%s9 + $0x2] sm:$0x1]
        %v3794 = vlaneseq
        %v3795 = vshrl.u32 %v3794, 7
        %v3796 = vsub.s32 0, %v3795
        %v3797 = vrot.slane %v3793, %v3796
        %v3798 = vadd.f32 %v3777, %v3797
        %v3799 = vadd.f32 %v3778, %v3797
        %v3800 = vadd.f32 %v3779, %v3797
        %v3801 = vadd.f32 %v3780, %v3797
        %v3802 = vadd.f32 %v3781, %v3797
        %v3803 = vadd.f32 %v3782, %v3797
        %v3804 = vadd.f32 %v3783, %v3797
        %v3805 = vadd.f32 %v3784, %v3797
        %v3806 = vadd.f32 %v3785, %v3797
        %v3807 = vadd.f32 %v3786, %v3797
        %v3808 = vadd.f32 %v3787, %v3797
        %v3809 = vadd.f32 %v3788, %v3797
        %v3810 = vadd.f32 %v3789, %v3797
        %v3811 = vadd.f32 %v3790, %v3797
        %v3812 = vadd.f32 %v3791, %v3797
        %v3813 = vadd.f32 %v3792, %v3797
        %v3814 = vadd.f32 %v3798, %v1742
        %v3815 = vadd.f32 %v3799, %v1743
        %v3816 = vadd.f32 %v3800, %v1744
        %v3817 = vadd.f32 %v3801, %v1745
        %v3818 = vadd.f32 %v3802, %v1746
        %v3819 = vadd.f32 %v3803, %v1747
        %v3820 = vadd.f32 %v3804, %v1748
        %v3821 = vadd.f32 %v3805, %v1749
        %v3822 = vadd.f32 %v3806, %v1750
        %v3823 = vadd.f32 %v3807, %v1751
        %v3824 = vadd.f32 %v3808, %v1752
        %v3825 = vadd.f32 %v3809, %v1753
        %v3826 = vadd.f32 %v3810, %v1754
        %v3827 = vadd.f32 %v3811, %v1755
        %v3828 = vadd.f32 %v3812, %v1756
        %v3829 = vadd.f32 %v3813, %v1757
        %v3830 = vpack.c.bf16 %v3815, %v3814
        %v3831 = vpack.c.bf16 %v3817, %v3816
        %v3832 = vpack.c.bf16 %v3819, %v3818
        %v3833 = vpack.c.bf16 %v3821, %v3820
        %v3834 = vpack.c.bf16 %v3823, %v3822
        %v3835 = vpack.c.bf16 %v3825, %v3824
        %v3836 = vpack.c.bf16 %v3827, %v3826
        %v3837 = vpack.c.bf16 %v3829, %v3828
        %v3838 = vlaneseq
        %v3839 = vand.u32 %v3838, 127
        %v3840 = vld [vmem:[%s462] sm:$0xff]
        %v3841 = vld [vmem:[%s462 + $0x8] sm:$0xff]
        %3842 = vset.pattern.permute.xlu0 0
        %3843 = vperm.xlu0 %3842, %v3840
        %v3844 = vpop.permute.xlu0 %3843
        %3845 = vset.pattern.permute.xlu0 0
        %3846 = vperm.xlu0 %3845, %v3841
        %v3847 = vpop.permute.xlu0 %3846
        %vm3848 = vcmp.eq.s32.totalorder %v3839, %v3844
        %vm3849 = vcmp.eq.s32.totalorder %v3839, %v3847
        %v3850 = vsel %vm3848, 1, 0
        %v3851 = vsel %vm3849, 1, 0
        %v3852 = vcvt.s32.f32 %v3850
        %v3853 = vcvt.s32.f32 %v3851
        %v3854 = vpack.c.bf16 %v3853, %v3852
        %v3855 = vld [vmem:[%s468] sm:$0xff]
        %v3856 = vld [vmem:[%s468 + $0x8] sm:$0xff]
        %3857 = vset.pattern.permute.xlu0 0
        %3858 = vperm.xlu0 %3857, %v3855
        %v3859 = vpop.permute.xlu0 %3858
        %3860 = vset.pattern.permute.xlu0 0
        %3861 = vperm.xlu0 %3860, %v3856
        %v3862 = vpop.permute.xlu0 %3861
        %vm3863 = vcmp.eq.s32.totalorder %v3839, %v3859
        %vm3864 = vcmp.eq.s32.totalorder %v3839, %v3862
        %v3865 = vsel %vm3863, 1, 0
        %v3866 = vsel %vm3864, 1, 0
        %v3867 = vcvt.s32.f32 %v3865
        %v3868 = vcvt.s32.f32 %v3866
        %v3869 = vpack.c.bf16 %v3868, %v3867
        %3870 = vmatprep.subr.bf16.mxu0 0
        %3871 = vmatpush1.bf16.msra.mxu0 %v3830
        %3872 = vmatprep.subr.bf16.mxu0 0
        %3873 = vmatpush1.bf16.msra.mxu0 %v3831
        %3874 = vmatprep.subr.bf16.mxu0 0
        %3875 = vmatpush1.bf16.msra.mxu0 %v3832
        %3876 = vmatprep.subr.bf16.mxu0 0
        %3877 = vmatpush1.bf16.msra.mxu0 %v3833
        %3878 = vmatprep.subr.bf16.mxu0 0
        %3879 = vmatpush1.bf16.msra.mxu0 %v3834
        %3880 = vmatprep.subr.bf16.mxu0 0
        %3881 = vmatpush1.bf16.msra.mxu0 %v3835
        %3882 = vmatprep.subr.bf16.mxu0 0
        %3883 = vmatpush1.bf16.msra.mxu0 %v3836
        %3884 = vmatprep.subr.bf16.mxu0 0
        %3885 = vmatpush1.bf16.msra.mxu0 %v3837
        %3886 = vmatprep.subr.bf16.mxu0 0
        %3887 = vmatpush1.bf16.msra.mxu0 0
        %3888 = vmatprep.subr.bf16.mxu0 0
        %3889 = vmatpush1.bf16.msra.mxu0 0
        %3890 = vmatprep.subr.bf16.mxu0 0
        %3891 = vmatpush1.bf16.msra.mxu0 0
        %3892 = vmatprep.subr.bf16.mxu0 0
        %3893 = vmatpush1.bf16.msra.mxu0 0
        %3894 = vmatprep.subr.bf16.mxu0 0
        %3895 = vmatpush1.bf16.msra.mxu0 0
        %3896 = vmatprep.subr.bf16.mxu0 0
        %3897 = vmatpush1.bf16.msra.mxu0 0
        %3898 = vmatprep.subr.bf16.mxu0 0
        %3899 = vmatpush1.bf16.msra.mxu0 0
        %3900 = vmatprep.subr.bf16.mxu0 0
        %3901 = vmatpush1.bf16.msra.mxu0 0
        %3902 = vmatprep.mubr.bf16.mxu0 0
        %3903 = vmatmul.mubr.bf16.gmra.mrb[0].mxu0 %v3854
        %v3904 = vpop.f32.mrb[0].mxu0
        %v3905 = vadd.f32 0.0, %v3904
        %v3906 = vpop.f32.mrb[0].mxu0
        %v3907 = vpop.f32.mrb[0].mxu0
        %v3908 = vadd.f32 0.0, %v3907
        %v3909 = vpop.f32.mrb[0].mxu0
        %3910 = vdwg.mxu0
        %3911 = vmatprep.subr.bf16.mxu0 0
        %3912 = vmatpush1.bf16.msra.mxu0 %v3830
        %3913 = vmatprep.subr.bf16.mxu0 0
        %3914 = vmatpush1.bf16.msra.mxu0 %v3831
        %3915 = vmatprep.subr.bf16.mxu0 0
        %3916 = vmatpush1.bf16.msra.mxu0 %v3832
        %3917 = vmatprep.subr.bf16.mxu0 0
        %3918 = vmatpush1.bf16.msra.mxu0 %v3833
        %3919 = vmatprep.subr.bf16.mxu0 0
        %3920 = vmatpush1.bf16.msra.mxu0 %v3834
        %3921 = vmatprep.subr.bf16.mxu0 0
        %3922 = vmatpush1.bf16.msra.mxu0 %v3835
        %3923 = vmatprep.subr.bf16.mxu0 0
        %3924 = vmatpush1.bf16.msra.mxu0 %v3836
        %3925 = vmatprep.subr.bf16.mxu0 0
        %3926 = vmatpush1.bf16.msra.mxu0 %v3837
        %3927 = vmatprep.subr.bf16.mxu0 0
        %3928 = vmatpush1.bf16.msra.mxu0 0
        %3929 = vmatprep.subr.bf16.mxu0 0
        %3930 = vmatpush1.bf16.msra.mxu0 0
        %3931 = vmatprep.subr.bf16.mxu0 0
        %3932 = vmatpush1.bf16.msra.mxu0 0
        %3933 = vmatprep.subr.bf16.mxu0 0
        %3934 = vmatpush1.bf16.msra.mxu0 0
        %3935 = vmatprep.subr.bf16.mxu0 0
        %3936 = vmatpush1.bf16.msra.mxu0 0
        %3937 = vmatprep.subr.bf16.mxu0 0
        %3938 = vmatpush1.bf16.msra.mxu0 0
        %3939 = vmatprep.subr.bf16.mxu0 0
        %3940 = vmatpush1.bf16.msra.mxu0 0
        %3941 = vmatprep.subr.bf16.mxu0 0
        %3942 = vmatpush1.bf16.msra.mxu0 0
        %3943 = vmatprep.mubr.bf16.mxu0 0
        %3944 = vmatmul.mubr.bf16.gmra.mrb[0].mxu0 %v3869
        %v3945 = vpop.f32.mrb[0].mxu0
        %v3946 = vadd.f32 0.0, %v3945
        %v3947 = vpop.f32.mrb[0].mxu0
        %v3948 = vpop.f32.mrb[0].mxu0
        %v3949 = vadd.f32 0.0, %v3948
        %v3950 = vpop.f32.mrb[0].mxu0
        %3951 = vdwg.mxu0
        %v3952 = vpack.c.bf16 %v3908, %v3905
        %v3953 = vld [vmem:[#allocation8] sm:$0xf]
        %v3954 = vld [vmem:[#allocation8 + $0x4] sm:$0xf]
        %v3955 = vld [vmem:[#allocation8 + $0x8] sm:$0xf]
        %v3956 = vld [vmem:[#allocation8 + $0xc] sm:$0xf]
        %v3957 = vld [vmem:[#allocation8 + $0x10] sm:$0xf]
        %v3958 = vld [vmem:[#allocation8 + $0x14] sm:$0xf]
        %v3959 = vld [vmem:[#allocation8 + $0x18] sm:$0xf]
        %v3960 = vld [vmem:[#allocation8 + $0x1c] sm:$0xf]
        %v3961 = vld [vmem:[#allocation8 + $0x20] sm:$0xf]
        %v3962 = vld [vmem:[#allocation8 + $0x24] sm:$0xf]
        %v3963 = vld [vmem:[#allocation8 + $0x28] sm:$0xf]
        %v3964 = vld [vmem:[#allocation8 + $0x2c] sm:$0xf]
        %v3965 = vld [vmem:[#allocation8 + $0x30] sm:$0xf]
        %v3966 = vld [vmem:[#allocation8 + $0x34] sm:$0xf]
        %v3967 = vld [vmem:[#allocation8 + $0x38] sm:$0xf]
        %v3968 = vld [vmem:[#allocation8 + $0x3c] sm:$0xf]
        %v3969 = vpack.c.bf16 %v3949, %v3946
        %v3970 = vld [vmem:[#allocation8 + $0x40] sm:$0xf]
        %v3971 = vld [vmem:[#allocation8 + $0x44] sm:$0xf]
        %v3972 = vld [vmem:[#allocation8 + $0x48] sm:$0xf]
        %v3973 = vld [vmem:[#allocation8 + $0x4c] sm:$0xf]
        %v3974 = vld [vmem:[#allocation8 + $0x50] sm:$0xf]
        %v3975 = vld [vmem:[#allocation8 + $0x54] sm:$0xf]
        %v3976 = vld [vmem:[#allocation8 + $0x58] sm:$0xf]
        %v3977 = vld [vmem:[#allocation8 + $0x5c] sm:$0xf]
        %v3978 = vld [vmem:[#allocation8 + $0x60] sm:$0xf]
        %v3979 = vld [vmem:[#allocation8 + $0x64] sm:$0xf]
        %v3980 = vld [vmem:[#allocation8 + $0x68] sm:$0xf]
        %v3981 = vld [vmem:[#allocation8 + $0x6c] sm:$0xf]
        %v3982 = vld [vmem:[#allocation8 + $0x70] sm:$0xf]
        %v3983 = vld [vmem:[#allocation8 + $0x74] sm:$0xf]
        %v3984 = vld [vmem:[#allocation8 + $0x78] sm:$0xf]
        %v3985 = vld [vmem:[#allocation8 + $0x7c] sm:$0xf]
        %v4002 = vunpack.c.l.b16 %v3970
        %v4003 = vunpack.c.l.b16 %v3971
        %v4004 = vunpack.c.l.b16 %v3972
        %v4005 = vunpack.c.l.b16 %v3973
        %v4006 = vunpack.c.l.b16 %v3974
        %v4007 = vunpack.c.l.b16 %v3975
        %v4008 = vunpack.c.l.b16 %v3976
        %v4009 = vunpack.c.l.b16 %v3977
        %v4010 = vunpack.c.l.b16 %v3978
        %v4011 = vunpack.c.l.b16 %v3979
        %v4012 = vunpack.c.l.b16 %v3980
        %v4013 = vunpack.c.l.b16 %v3981
        %v4014 = vunpack.c.l.b16 %v3982
        %v4015 = vunpack.c.l.b16 %v3983
        %v4016 = vunpack.c.l.b16 %v3984
        %v4017 = vunpack.c.l.b16 %v3985
        %v4018 = vpack.c.b16 %v4003, %v4002
        %v4019 = vpack.c.b16 %v4005, %v4004
        %v4020 = vpack.c.b16 %v4007, %v4006
        %v4021 = vpack.c.b16 %v4009, %v4008
        %v4022 = vpack.c.b16 %v4011, %v4010
        %v4023 = vpack.c.b16 %v4013, %v4012
        %v4024 = vpack.c.b16 %v4015, %v4014
        %v4025 = vpack.c.b16 %v4017, %v4016
        %4034 = vmatprep.subr.bf16.mxu0 0
        %4035 = vmatpush1.bf16.msra.mxu0 %v4018
        %4036 = vmatprep.subr.bf16.mxu0 0
        %4037 = vmatpush1.bf16.msra.mxu0 %v4019
        %4038 = vmatprep.subr.bf16.mxu0 0
        %4039 = vmatpush1.bf16.msra.mxu0 %v4020
        %4040 = vmatprep.subr.bf16.mxu0 0
        %4041 = vmatpush1.bf16.msra.mxu0 %v4021
        %4042 = vmatprep.subr.bf16.mxu0 0
        %4043 = vmatpush1.bf16.msra.mxu0 %v4022
        %4044 = vmatprep.subr.bf16.mxu0 0
        %4045 = vmatpush1.bf16.msra.mxu0 %v4023
        %4046 = vmatprep.subr.bf16.mxu0 0
        %4047 = vmatpush1.bf16.msra.mxu0 %v4024
        %4048 = vmatprep.subr.bf16.mxu0 0
        %4049 = vmatpush1.bf16.msra.mxu0 %v4025
        %4050 = vmatprep.subr.bf16.mxu0 0
        %4051 = vmatpush1.bf16.msra.mxu0 0
        %4052 = vmatprep.subr.bf16.mxu0 0
        %4053 = vmatpush1.bf16.msra.mxu0 0
        %4054 = vmatprep.subr.bf16.mxu0 0
        %4055 = vmatpush1.bf16.msra.mxu0 0
        %4056 = vmatprep.subr.bf16.mxu0 0
        %4057 = vmatpush1.bf16.msra.mxu0 0
        %4058 = vmatprep.subr.bf16.mxu0 0
        %4059 = vmatpush1.bf16.msra.mxu0 0
        %4060 = vmatprep.subr.bf16.mxu0 0
        %4061 = vmatpush1.bf16.msra.mxu0 0
        %4062 = vmatprep.subr.bf16.mxu0 0
        %4063 = vmatpush1.bf16.msra.mxu0 0
        %4064 = vmatprep.subr.bf16.mxu0 0
        %4065 = vmatpush1.bf16.msra.mxu0 0
        %4066 = vmatprep.mubr.bf16.mxu0 0
        %4067 = vmatmul.mubr.bf16.gmra.mrb[0].mxu0 %v3969
        %v4068 = vpop.f32.mrb[0].mxu0
        %v4069 = vadd.f32 0.0, %v4068
        %v4070 = vpop.f32.mrb[0].mxu0
        %v4071 = vpop.f32.mrb[0].mxu0
        %v4072 = vadd.f32 0.0, %v4071
        %v4073 = vpop.f32.mrb[0].mxu0
        %4074 = vdwg.mxu0
        %v4091 = vunpack.c.l.b16 %v3953
        %v4092 = vunpack.c.l.b16 %v3954
        %v4093 = vunpack.c.l.b16 %v3955
        %v4094 = vunpack.c.l.b16 %v3956
        %v4095 = vunpack.c.l.b16 %v3957
        %v4096 = vunpack.c.l.b16 %v3958
        %v4097 = vunpack.c.l.b16 %v3959
        %v4098 = vunpack.c.l.b16 %v3960
        %v4099 = vunpack.c.l.b16 %v3961
        %v4100 = vunpack.c.l.b16 %v3962
        %v4101 = vunpack.c.l.b16 %v3963
        %v4102 = vunpack.c.l.b16 %v3964
        %v4103 = vunpack.c.l.b16 %v3965
        %v4104 = vunpack.c.l.b16 %v3966
        %v4105 = vunpack.c.l.b16 %v3967
        %v4106 = vunpack.c.l.b16 %v3968
        %v4107 = vpack.c.b16 %v4092, %v4091
        %v4108 = vpack.c.b16 %v4094, %v4093
        %v4109 = vpack.c.b16 %v4096, %v4095
        %v4110 = vpack.c.b16 %v4098, %v4097
        %v4111 = vpack.c.b16 %v4100, %v4099
        %v4112 = vpack.c.b16 %v4102, %v4101
        %v4113 = vpack.c.b16 %v4104, %v4103
        %v4114 = vpack.c.b16 %v4106, %v4105
        %4123 = vmatprep.subr.bf16.mxu0 0
        %4124 = vmatpush1.bf16.msra.mxu0 %v4107
        %4125 = vmatprep.subr.bf16.mxu0 0
        %4126 = vmatpush1.bf16.msra.mxu0 %v4108
        %4127 = vmatprep.subr.bf16.mxu0 0
        %4128 = vmatpush1.bf16.msra.mxu0 %v4109
        %4129 = vmatprep.subr.bf16.mxu0 0
        %4130 = vmatpush1.bf16.msra.mxu0 %v4110
        %4131 = vmatprep.subr.bf16.mxu0 0
        %4132 = vmatpush1.bf16.msra.mxu0 %v4111
        %4133 = vmatprep.subr.bf16.mxu0 0
        %4134 = vmatpush1.bf16.msra.mxu0 %v4112
        %4135 = vmatprep.subr.bf16.mxu0 0
        %4136 = vmatpush1.bf16.msra.mxu0 %v4113
        %4137 = vmatprep.subr.bf16.mxu0 0
        %4138 = vmatpush1.bf16.msra.mxu0 %v4114
        %4139 = vmatprep.subr.bf16.mxu0 0
        %4140 = vmatpush1.bf16.msra.mxu0 0
        %4141 = vmatprep.subr.bf16.mxu0 0
        %4142 = vmatpush1.bf16.msra.mxu0 0
        %4143 = vmatprep.subr.bf16.mxu0 0
        %4144 = vmatpush1.bf16.msra.mxu0 0
        %4145 = vmatprep.subr.bf16.mxu0 0
        %4146 = vmatpush1.bf16.msra.mxu0 0
        %4147 = vmatprep.subr.bf16.mxu0 0
        %4148 = vmatpush1.bf16.msra.mxu0 0
        %4149 = vmatprep.subr.bf16.mxu0 0
        %4150 = vmatpush1.bf16.msra.mxu0 0
        %4151 = vmatprep.subr.bf16.mxu0 0
        %4152 = vmatpush1.bf16.msra.mxu0 0
        %4153 = vmatprep.subr.bf16.mxu0 0
        %4154 = vmatpush1.bf16.msra.mxu0 0
        %4155 = vmatprep.mubr.bf16.mxu0 0
        %4156 = vmatmul.mubr.bf16.gmra.mrb[0].mxu0 %v3952
        %v4157 = vpop.f32.mrb[0].mxu0
        %v4158 = vadd.f32 %v4069, %v4157
        %v4159 = vpop.f32.mrb[0].mxu0
        %v4160 = vpop.f32.mrb[0].mxu0
        %v4161 = vadd.f32 %v4072, %v4160
        %v4162 = vpop.f32.mrb[0].mxu0
        %4163 = vdwg.mxu0
        %v4164 = vld [vmem:[%s9 + $0x3] sm:$0x1]
        %v4165 = vlaneseq
        %v4166 = vshrl.u32 %v4165, 7
        %v4167 = vsub.s32 0, %v4166
        %v4168 = vrot.slane %v4164, %v4167
        %v4169 = vadd.f32 %v4158, %v4168
        %v4170 = vadd.f32 %v4161, %v4168
        %v4171 = vmax.f32 %v4169, 0.0
        %v4172 = vmax.f32 %v4170, 0.0
        %v4173 = vpack.c.bf16 %v4172, %v4171
        %v4174 = vld [vmem:[#allocation10] sm:$0xf]
        %v4175 = vld [vmem:[#allocation10 + $0x4] sm:$0xf]
        %v4176 = vld [vmem:[#allocation10 + $0x8] sm:$0xf]
        %v4177 = vld [vmem:[#allocation10 + $0xc] sm:$0xf]
        %v4178 = vld [vmem:[#allocation10 + $0x10] sm:$0xf]
        %v4179 = vld [vmem:[#allocation10 + $0x14] sm:$0xf]
        %v4180 = vld [vmem:[#allocation10 + $0x18] sm:$0xf]
        %v4181 = vld [vmem:[#allocation10 + $0x1c] sm:$0xf]
        %v4182 = vld [vmem:[#allocation10 + $0x20] sm:$0xf]
        %v4183 = vld [vmem:[#allocation10 + $0x24] sm:$0xf]
        %v4184 = vld [vmem:[#allocation10 + $0x28] sm:$0xf]
        %v4185 = vld [vmem:[#allocation10 + $0x2c] sm:$0xf]
        %v4186 = vld [vmem:[#allocation10 + $0x30] sm:$0xf]
        %v4187 = vld [vmem:[#allocation10 + $0x34] sm:$0xf]
        %v4188 = vld [vmem:[#allocation10 + $0x38] sm:$0xf]
        %v4189 = vld [vmem:[#allocation10 + $0x3c] sm:$0xf]
        %v4190 = vld [vmem:[%s9 + $0x4] sm:$0x1]
        %v4191 = vlaneseq
        %v4192 = vshrl.u32 %v4191, 7
        %v4193 = vsub.s32 0, %v4192
        %v4194 = vrot.slane %v4190, %v4193
        %v4211 = vunpack.c.l.b16 %v4174
        %v4212 = vunpack.c.l.b16 %v4175
        %v4213 = vunpack.c.l.b16 %v4176
        %v4214 = vunpack.c.l.b16 %v4177
        %v4215 = vunpack.c.l.b16 %v4178
        %v4216 = vunpack.c.l.b16 %v4179
        %v4217 = vunpack.c.l.b16 %v4180
        %v4218 = vunpack.c.l.b16 %v4181
        %v4219 = vunpack.c.l.b16 %v4182
        %v4220 = vunpack.c.l.b16 %v4183
        %v4221 = vunpack.c.l.b16 %v4184
        %v4222 = vunpack.c.l.b16 %v4185
        %v4223 = vunpack.c.l.b16 %v4186
        %v4224 = vunpack.c.l.b16 %v4187
        %v4225 = vunpack.c.l.b16 %v4188
        %v4226 = vunpack.c.l.b16 %v4189
        %v4227 = vpack.c.b16 %v4212, %v4211
        %v4228 = vpack.c.b16 %v4214, %v4213
        %v4229 = vpack.c.b16 %v4216, %v4215
        %v4230 = vpack.c.b16 %v4218, %v4217
        %v4231 = vpack.c.b16 %v4220, %v4219
        %v4232 = vpack.c.b16 %v4222, %v4221
        %v4233 = vpack.c.b16 %v4224, %v4223
        %v4234 = vpack.c.b16 %v4226, %v4225
        %4243 = vmatprep.subr.bf16.mxu0 0
        %4244 = vmatpush1.bf16.msra.mxu0 %v4227
        %4245 = vmatprep.subr.bf16.mxu0 0
        %4246 = vmatpush1.bf16.msra.mxu0 %v4228
        %4247 = vmatprep.subr.bf16.mxu0 0
        %4248 = vmatpush1.bf16.msra.mxu0 %v4229
        %4249 = vmatprep.subr.bf16.mxu0 0
        %4250 = vmatpush1.bf16.msra.mxu0 %v4230
        %4251 = vmatprep.subr.bf16.mxu0 0
        %4252 = vmatpush1.bf16.msra.mxu0 %v4231
        %4253 = vmatprep.subr.bf16.mxu0 0
        %4254 = vmatpush1.bf16.msra.mxu0 %v4232
        %4255 = vmatprep.subr.bf16.mxu0 0
        %4256 = vmatpush1.bf16.msra.mxu0 %v4233
        %4257 = vmatprep.subr.bf16.mxu0 0
        %4258 = vmatpush1.bf16.msra.mxu0 %v4234
        %4259 = vmatprep.subr.bf16.mxu0 0
        %4260 = vmatpush1.bf16.msra.mxu0 0
        %4261 = vmatprep.subr.bf16.mxu0 0
        %4262 = vmatpush1.bf16.msra.mxu0 0
        %4263 = vmatprep.subr.bf16.mxu0 0
        %4264 = vmatpush1.bf16.msra.mxu0 0
        %4265 = vmatprep.subr.bf16.mxu0 0
        %4266 = vmatpush1.bf16.msra.mxu0 0
        %4267 = vmatprep.subr.bf16.mxu0 0
        %4268 = vmatpush1.bf16.msra.mxu0 0
        %4269 = vmatprep.subr.bf16.mxu0 0
        %4270 = vmatpush1.bf16.msra.mxu0 0
        %4271 = vmatprep.subr.bf16.mxu0 0
        %4272 = vmatpush1.bf16.msra.mxu0 0
        %4273 = vmatprep.subr.bf16.mxu0 0
        %4274 = vmatpush1.bf16.msra.mxu0 0
        %4275 = vmatprep.mubr.bf16.mxu0 0
        %4276 = vmatmul.mubr.bf16.gmra.mrb[0].mxu0 %v4173
        %v4277 = vpop.f32.mrb[0].mxu0
        %v4278 = vadd.f32 %v4194, %v4277
        %v4279 = vpop.f32.mrb[0].mxu0
        %v4280 = vpop.f32.mrb[0].mxu0
        %v4281 = vadd.f32 %v4194, %v4280
        %v4282 = vpop.f32.mrb[0].mxu0
        %4283 = vdwg.mxu0
        %v4284 = vmax.f32 %v4278, 0.0
        %v4285 = vmax.f32 %v4281, 0.0
        %v4286 = vpack.c.bf16 %v4285, %v4284
        %v4287 = vld [vmem:[#allocation11] sm:$0xf]
        %v4288 = vld [vmem:[#allocation11 + $0x4] sm:$0xf]
        %v4289 = vld [vmem:[#allocation11 + $0x8] sm:$0xf]
        %v4290 = vld [vmem:[#allocation11 + $0xc] sm:$0xf]
        %v4291 = vld [vmem:[#allocation11 + $0x10] sm:$0xf]
        %v4292 = vld [vmem:[#allocation11 + $0x14] sm:$0xf]
        %v4293 = vld [vmem:[#allocation11 + $0x18] sm:$0xf]
        %v4294 = vld [vmem:[#allocation11 + $0x1c] sm:$0xf]
        %v4295 = vld [vmem:[#allocation11 + $0x20] sm:$0xf]
        %v4296 = vld [vmem:[#allocation11 + $0x24] sm:$0xf]
        %v4297 = vld [vmem:[#allocation11 + $0x28] sm:$0xf]
        %v4298 = vld [vmem:[#allocation11 + $0x2c] sm:$0xf]
        %v4299 = vld [vmem:[#allocation11 + $0x30] sm:$0xf]
        %v4300 = vld [vmem:[#allocation11 + $0x34] sm:$0xf]
        %v4301 = vld [vmem:[#allocation11 + $0x38] sm:$0xf]
        %v4302 = vld [vmem:[#allocation11 + $0x3c] sm:$0xf]
        %v4303 = vld [vmem:[%s9 + $0x5] sm:$0x1]
        %v4304 = vlaneseq
        %v4305 = vshrl.u32 %v4304, 7
        %v4306 = vsub.s32 0, %v4305
        %v4307 = vrot.slane %v4303, %v4306
        %v4324 = vunpack.c.l.b16 %v4287
        %v4325 = vunpack.c.l.b16 %v4288
        %v4326 = vunpack.c.l.b16 %v4289
        %v4327 = vunpack.c.l.b16 %v4290
        %v4328 = vunpack.c.l.b16 %v4291
        %v4329 = vunpack.c.l.b16 %v4292
        %v4330 = vunpack.c.l.b16 %v4293
        %v4331 = vunpack.c.l.b16 %v4294
        %v4332 = vunpack.c.l.b16 %v4295
        %v4333 = vunpack.c.l.b16 %v4296
        %v4334 = vunpack.c.l.b16 %v4297
        %v4335 = vunpack.c.l.b16 %v4298
        %v4336 = vunpack.c.l.b16 %v4299
        %v4337 = vunpack.c.l.b16 %v4300
        %v4338 = vunpack.c.l.b16 %v4301
        %v4339 = vunpack.c.l.b16 %v4302
        %v4340 = vpack.c.b16 %v4325, %v4324
        %v4341 = vpack.c.b16 %v4327, %v4326
        %v4342 = vpack.c.b16 %v4329, %v4328
        %v4343 = vpack.c.b16 %v4331, %v4330
        %v4344 = vpack.c.b16 %v4333, %v4332
        %v4345 = vpack.c.b16 %v4335, %v4334
        %v4346 = vpack.c.b16 %v4337, %v4336
        %v4347 = vpack.c.b16 %v4339, %v4338
        %4356 = vmatprep.subr.bf16.mxu0 0
        %4357 = vmatpush1.bf16.msra.mxu0 %v4340
        %4358 = vmatprep.subr.bf16.mxu0 0
        %4359 = vmatpush1.bf16.msra.mxu0 %v4341
        %4360 = vmatprep.subr.bf16.mxu0 0
        %4361 = vmatpush1.bf16.msra.mxu0 %v4342
        %4362 = vmatprep.subr.bf16.mxu0 0
        %4363 = vmatpush1.bf16.msra.mxu0 %v4343
        %4364 = vmatprep.subr.bf16.mxu0 0
        %4365 = vmatpush1.bf16.msra.mxu0 %v4344
        %4366 = vmatprep.subr.bf16.mxu0 0
        %4367 = vmatpush1.bf16.msra.mxu0 %v4345
        %4368 = vmatprep.subr.bf16.mxu0 0
        %4369 = vmatpush1.bf16.msra.mxu0 %v4346
        %4370 = vmatprep.subr.bf16.mxu0 0
        %4371 = vmatpush1.bf16.msra.mxu0 %v4347
        %4372 = vmatprep.subr.bf16.mxu0 0
        %4373 = vmatpush1.bf16.msra.mxu0 0
        %4374 = vmatprep.subr.bf16.mxu0 0
        %4375 = vmatpush1.bf16.msra.mxu0 0
        %4376 = vmatprep.subr.bf16.mxu0 0
        %4377 = vmatpush1.bf16.msra.mxu0 0
        %4378 = vmatprep.subr.bf16.mxu0 0
        %4379 = vmatpush1.bf16.msra.mxu0 0
        %4380 = vmatprep.subr.bf16.mxu0 0
        %4381 = vmatpush1.bf16.msra.mxu0 0
        %4382 = vmatprep.subr.bf16.mxu0 0
        %4383 = vmatpush1.bf16.msra.mxu0 0
        %4384 = vmatprep.subr.bf16.mxu0 0
        %4385 = vmatpush1.bf16.msra.mxu0 0
        %4386 = vmatprep.subr.bf16.mxu0 0
        %4387 = vmatpush1.bf16.msra.mxu0 0
        %4388 = vmatprep.mubr.bf16.mxu0 0
        %4389 = vmatmul.mubr.bf16.gmra.mrb[0].mxu0 %v4286
        %v4390 = vpop.f32.mrb[0].mxu0
        %v4391 = vadd.f32 %v4307, %v4390
        %v4392 = vpop.f32.mrb[0].mxu0
        %v4393 = vpop.f32.mrb[0].mxu0
        %v4394 = vadd.f32 %v4307, %v4393
        %v4395 = vpop.f32.mrb[0].mxu0
        %4396 = vdwg.mxu0
        %4397 = vst [vmem:[%s457] sm:$0xff] %v4391
        %4398 = vst [vmem:[%s457 + $0x8] sm:$0xff] %v4394
        %s4399 = sand.u32 %s256, 1
        %s4400 = scalar_lea.sflag [#allocation4], %s4399
        %s4401 = sand.u32 %s256, 1
        %s4402 = smul.addr %s4401, 16
        %s4403 = scalar_lea.vmem [#allocation13], %s4402
        // Predicated region
        $region85: #{tpu_custom_call.1} parent=59 // pred_check
          %p4404 = pneg %p266
        $region86: #{tpu_custom_call.1} parent=59 // pred_check_branch
          %4406 = sbr.rel (%p4404) target = $region88
        $region87: #{tpu_custom_call.1} parent=59 // pred_region
          %s4407 = smul.u32 2, %s28
          %s4409 = ssub.s32 256, 256
          %4410 = vsyncadd %s4400, %s4409
          %s4411 = smul.addr %s4407, 128
          %s4412 = scalar_lea.hbm %s10, %s4411
          %s4413 = sshll.u32 %s4403, 4
          %s4414 = int_to_ptr.vmem [resolvable:$true] %s4413
          %4419 = dma.vmem_to_hbm [thread:$0]  %s4414, 256, %s4412, %s4400, 128, 128, 8
        $region88: #{tpu_custom_call.1} parent=59 // pred_fallthru
          _
      $region60: #{tpu_custom_call.1} parent=5 // pred_fallthru
        _
      %p4420 = scmp.le.s32.totalorder 2, %s23
      // Predicated region
      $region89: #{tpu_custom_call.1} parent=5 // pred_check
        %p4421 = pneg %p4420
      $region90: #{tpu_custom_call.1} parent=5 // pred_check_branch
        %4423 = sbr.rel (%p4421) target = $region92
      $region91: #{tpu_custom_call.1} parent=5 // pred_region
        %s4424 = ssub.s32 %s23, 2
        // Predicated region
        $region93: #{tpu_custom_call.1} parent=91 // pred_check
          %p4425 = pneg %p272
        $region94: #{tpu_custom_call.1} parent=91 // pred_check_branch
          %4427 = sbr.rel (%p4425) target = $region96
        $region95: #{tpu_custom_call.1} parent=91 // pred_region
          %s4428 = sand.u32 %s257, 1
          %s4429 = scalar_lea.sflag [#allocation4], %s4428
          %s4430 = sand.u32 %s257, 1
          %s4431 = smul.addr %s4430, 16
          %s4432 = scalar_lea.vmem [#allocation13], %s4431
          %4433 = dma.done %s4429, 256
        $region96: #{tpu_custom_call.1} parent=91 // pred_fallthru
          _
      $region92: #{tpu_custom_call.1} parent=5 // pred_fallthru
        _
    $region6: #{tpu_custom_call.1} parent=1 // loop_footer
      %s27 = sadd.s32 1, %s23
    $region7: #{tpu_custom_call.1} parent=1 // loop_footer_branch
      %22 = sbr.rel target = $region3
    $region8: #{tpu_custom_call.1} parent=1 // loop_exit
      _
    %4434 = vsyncpa [#allocation3], 1
    %s4435 = scalar_lea.sflag [#allocation3], 1
    %4436 = vsyncpa %s4435, 1
    %4437 = vsyncpa [#allocation6], 1
    %4438 = vsyncpa [#allocation9], 1
    %4439 = vsyncpa [#allocation12], 1
    %4440 = vsyncpa [#allocation4], 1
    %s4441 = scalar_lea.sflag [#allocation4], 1
    %4442 = vsyncpa %s4441, 1

</llo_original>
